<compile_context>
chip_gen: v6e
topology: v6e:2x2x1
jax: 0.10.0
libtpu: 0.0.40
codegen_flags: <defaults>
</compile_context>

<pallas_src>
import functools

import jax
import jax.numpy as jnp
from jax.experimental import pallas as pl
from jax.experimental.pallas import tpu as pltpu

TILE_T = 2048  # max time steps per grid step (multiple of 128)


# ------------------------------ Pallas kernel ------------------------------ #

def _vq_kernel(x_ref, cb16_ref, cbt_ref, half_cbsq_ref,
               xd_ref, counts_ref, err_ref, *, t_total, tile_t, nb_code):
    """One (batch, time-tile) step: quantize `tile_t` feature vectors.

    x_ref:         (1, C, tile_t)  input slab, channels x time (f32)
    cb16_ref:      (K, C)          codebook in bf16 (VMEM-resident)
    cbt_ref:       (C, K)          transposed codebook in f32 (VMEM-resident)
    half_cbsq_ref: (K, 1)          0.5 * per-code squared norms (resident)
    xd_ref:        (1, C, tile_t)  dequantized output, same layout as input
    counts_ref:    (1, K, 1)       per-tile code-usage counts
    err_ref:       (1, 1, 1)       per-tile sum of squared quantization error
    """
    t_idx = pl.program_id(1)

    xb = x_ref[0]                                   # (C, tile_t) f32, channel-major
    x16 = xb.astype(jnp.bfloat16)

    # cross[k, t] = c_k . x_t  on the MXU (bf16 inputs, f32 accumulate).
    cross = jnp.dot(cb16_ref[...], x16,
                    preferred_element_type=jnp.float32)                 # (K, tile_t)

    # argmin_k |x_t - c_k|^2 == argmin_k (0.5|c_k|^2 - c_k . x_t); the |x_t|^2
    # term is constant across codes and dropped.
    scores = half_cbsq_ref[...] - cross                                 # (K, tile_t)

    # First-occurrence argmin over the code (sublane) axis, matching torch.min
    # tie-breaking, built from min / where / iota (robust Mosaic lowering).
    # NOTE: if a column is all-NaN (bad input), idx silently becomes nb_code
    # and the one-hot is all-zero for that column.
    row = jax.lax.broadcasted_iota(jnp.int32, (nb_code, tile_t), 0)
    min_val = jnp.min(scores, axis=0, keepdims=True)                    # (1, tile_t)
    idx = jnp.min(jnp.where(scores == min_val, row, nb_code),
                  axis=0, keepdims=True)                                # (1, tile_t)
    onehot = (row == idx).astype(jnp.float32)                           # (K, tile_t)

    # Dequantize directly in channel-major layout: (C, K) @ (K, tile_t).
    # f32 matmul with an exact {0,1} one-hot -> exact codebook rows.
    xq = jnp.dot(cbt_ref[...], onehot,
                 preferred_element_type=jnp.float32)                    # (C, tile_t)

    # Validity mask for the ragged last time tile: padded columns are excluded
    # from every reduction; their output columns are dropped by the partial
    # block store automatically.
    col_t = t_idx * tile_t + jax.lax.broadcasted_iota(jnp.int32, (1, tile_t), 1)
    valid = col_t < t_total                                             # (1, tile_t)

    counts = jnp.sum(jnp.where(valid, onehot, 0.0),
                     axis=1, keepdims=True)                             # (K, 1)
    counts_ref[...] = counts.reshape(1, nb_code, 1)

    diff = xb - xq
    sq = jnp.where(valid, diff * diff, 0.0)                             # (C, tile_t)
    tile_err = jnp.sum(jnp.sum(sq, axis=1, keepdims=True),
                       axis=0, keepdims=True)                           # (1, 1)
    err_ref[...] = tile_err.reshape(1, 1, 1)

    # Forward value of the straight-through estimator x + (x_d - x) == x_d.
    # TODO(synk): the straight-through *gradient* (stop_gradient trick) is a
    # backward-pass concern and is not represented in this forward kernel.
    xd_ref[0] = xq                                                      # (C, tile_t)


# --------------------------------- wrapper --------------------------------- #

def _round_up(x, m):
    return ((x + m - 1) // m) * m


def _choose_tile_t(t_total, n_batch, tile_t_max):
    """Largest multiple-of-128 time tile <= tile_t_max that covers T, shrunk
    only as needed to keep >= 4 grid steps (v7x megacore load balance)."""
    tile_t = min(_round_up(t_total, 128), _round_up(tile_t_max, 128))
    while tile_t > 256 and n_batch * (-(-t_total // tile_t)) < 4:
        tile_t = _round_up(tile_t // 2, 128)
    return tile_t


def quantize_ema_reset_forward(x, codebook, *, tile_t_max=TILE_T):
    """Eval-mode forward of QuantizeEMAReset.

    x:        (N, code_dim, T) float32
    codebook: (nb_code, code_dim) float32
    returns (x_d (N, code_dim, T), commit_loss scalar, perplexity scalar)
    """
    N, C, T = x.shape
    K, D = codebook.shape
    assert C == D, (C, D)
    x = x.astype(jnp.float32)
    codebook = codebook.astype(jnp.float32)

    tile_t = _choose_tile_t(T, N, tile_t_max)
    num_tt = pl.cdiv(T, tile_t)
    num_tiles = N * num_tt

    # Tiny one-off codebook-side precomputes (stay VMEM-resident in-kernel).
    codebook_bf16 = codebook.astype(jnp.bfloat16)                       # (K, C)
    codebook_t = codebook.T                                             # (C, K) f32
    half_cb_sq = (0.5 * jnp.sum(codebook * codebook, axis=1))[:, None]  # (K, 1)

    kernel = functools.partial(_vq_kernel, t_total=T, tile_t=tile_t, nb_code=K)

    x_d, counts_p, err_p = pl.pallas_call(
        kernel,
        out_shape=(
            jax.ShapeDtypeStruct((N, C, T), jnp.float32),
            jax.ShapeDtypeStruct((num_tiles, K, 1), jnp.float32),
            jax.ShapeDtypeStruct((num_tiles, 1, 1), jnp.float32),
        ),
        grid_spec=pltpu.PrefetchScalarGridSpec(
            num_scalar_prefetch=0,
            grid=(N, num_tt),
            in_specs=[
                # NOTE: add pipeline_mode=pl.Buffered(3) here if a profile ever
                # shows exposed input DMA (most likely on v7x).
                pl.BlockSpec((1, C, tile_t), lambda n, t: (n, 0, t)),
                pl.BlockSpec((K, D), lambda n, t: (0, 0)),
                pl.BlockSpec((D, K), lambda n, t: (0, 0)),
                pl.BlockSpec((K, 1), lambda n, t: (0, 0)),
            ],
            out_specs=[
                pl.BlockSpec((1, C, tile_t), lambda n, t: (n, 0, t)),
                pl.BlockSpec((1, K, 1), lambda n, t: (n * num_tt + t, 0, 0)),
                pl.BlockSpec((1, 1, 1), lambda n, t: (n * num_tt + t, 0, 0)),
            ],
        ),
        compiler_params=pltpu.CompilerParams(
            dimension_semantics=("parallel", "parallel"),
            # Big time tiles need > v5e's 16 MiB default scoped VMEM; this is
            # a limit (not a reservation) and is safe on v6e/v7x as well.
            vmem_limit_bytes=40 * 1024 * 1024),
    )(x, codebook_bf16, codebook_t, half_cb_sq)

    # Tiny finalization (K values / scalars) in plain JAX.
    counts = jnp.sum(counts_p, axis=(0, 2))                             # (K,)
    prob = counts / jnp.sum(counts)
    perplexity = jnp.exp(-jnp.sum(prob * jnp.log(prob + 1e-7)))
    commit_loss = jnp.sum(err_p) / (N * T * C)                          # mse_loss(x, x_d)

    # TODO(synk): training-mode codebook init / EMA update / reset
    # (init_codebook, update_codebook, _tile randomness) are stateful buffer
    # mutations and are not part of this eval-mode forward kernel.
    return x_d, commit_loss, perplexity


# ---------------------------- pure-JAX reference ---------------------------- #

def _reference_forward(x, codebook, *, match_kernel_quantizer=False):
    N, C, T = x.shape
    K = codebook.shape[0]
    xf = jnp.transpose(x, (0, 2, 1)).reshape(-1, C)
    if match_kernel_quantizer:
        # Mirror the kernel's bf16 distance matmul / dropped |x|^2 term so the
        # nearest-code selection matches the kernel up to fp ties.
        cross = jnp.matmul(xf.astype(jnp.bfloat16),
                           codebook.astype(jnp.bfloat16).T,
                           preferred_element_type=jnp.float32)
        dist = 0.5 * jnp.sum(codebook * codebook, axis=1)[None, :] - cross
    else:
        k_w = codebook.T
        dist = (jnp.sum(xf * xf, axis=-1, keepdims=True)
                - 2.0 * jnp.matmul(xf, k_w, precision=jax.lax.Precision.HIGHEST)
                + jnp.sum(k_w * k_w, axis=0, keepdims=True))
    idx = jnp.argmin(dist, axis=-1)
    xd = codebook[idx]
    counts = jnp.zeros((K,), jnp.float32).at[idx].add(1.0)
    prob = counts / jnp.sum(counts)
    perp = jnp.exp(-jnp.sum(prob * jnp.log(prob + 1e-7)))
    loss = jnp.mean((xf - xd) ** 2)
    xd_out = jnp.transpose(xd.reshape(N, T, C), (0, 2, 1))
    return xd_out, loss, perp


if __name__ == "__main__":
    key = jax.random.PRNGKey(0)
    kx, kc = jax.random.split(key)

    # Small shapes consistent with the module: x (N, code_dim, T), codebook
    # (nb_code, code_dim).  T=640 with the chosen tile exercises multi-tile
    # time tiling plus the ragged (masked) last tile; code_dim=128 keeps
    # output stores lane-dense.
    N, code_dim, T, nb_code = 2, 128, 640, 256
    x = jax.random.normal(kx, (N, code_dim, T), jnp.float32)
    codebook = jax.random.normal(kc, (nb_code, code_dim), jnp.float32)

    fwd = jax.jit(quantize_ema_reset_forward)
    x_d, commit_loss, perplexity = fwd(x, codebook)
    jax.block_until_ready((x_d, commit_loss, perplexity))

    assert x_d.shape == (N, code_dim, T) and x_d.dtype == jnp.float32
    assert commit_loss.shape == () and perplexity.shape == ()

    # (a) Precision-matched reference: nearest-code selection should agree.
    xd_m, loss_m, perp_m = _reference_forward(x, codebook, match_kernel_quantizer=True)
    match_m = float(jnp.mean((jnp.abs(x_d - xd_m) < 1e-2).astype(jnp.float32)))
    assert match_m > 0.995, match_m
    assert jnp.allclose(commit_loss, loss_m, rtol=1e-2, atol=1e-4), (commit_loss, loss_m)
    assert jnp.allclose(perplexity, perp_m, rtol=1e-2, atol=1e-4), (perplexity, perp_m)

    # (b) Full-precision reference: a few fp near-ties may flip codes (bf16
    # distance matmul), so the elementwise threshold is looser; the scalar
    # statistics remain tight.
    xd_ref, loss_ref, perp_ref = _reference_forward(x, codebook)
    match = float(jnp.mean((jnp.abs(x_d - xd_ref) < 1e-2).astype(jnp.float32)))
    assert match > 0.97, match
    assert jnp.allclose(commit_loss, loss_ref, rtol=2e-2, atol=1e-3), (commit_loss, loss_ref)
    assert jnp.allclose(perplexity, perp_ref, rtol=2e-2, atol=1e-3), (perplexity, perp_ref)

    print("KERNEL_OK")
</pallas_src>

<mosaic_0001>
module attributes {stable_mosaic.version = 11 : i64} {
  func.func @_vq_kernel(%arg0: i32, %arg1: i32, %arg2: memref<1x128x384xf32, #tpu.memory_space<vmem>>, %arg3: memref<256x128xbf16, #tpu.memory_space<vmem>>, %arg4: memref<128x256xf32, #tpu.memory_space<vmem>>, %arg5: memref<256x1xf32, #tpu.memory_space<vmem>>, %arg6: memref<1x128x384xf32, #tpu.memory_space<vmem>>, %arg7: memref<1x256x1xf32, #tpu.memory_space<vmem>>, %arg8: memref<1x1x1xf32, #tpu.memory_space<vmem>>) attributes {dimension_semantics = [#tpu.dimension_semantics<parallel>, #tpu.dimension_semantics<parallel>], iteration_bounds = array<i64: 2, 2>, scalar_prefetch = 0 : i64, scratch_operands = 0 : i64, tpu.core_type = #tpu.core_type<tc>, window_params = [{transform_indices = @transform_0, window_bounds = array<i64: 1, 128, 384>}, {pipeline_mode = #tpu.pipeline_mode<synchronous>, transform_indices = @transform_1, window_bounds = array<i64: 256, 128>}, {pipeline_mode = #tpu.pipeline_mode<synchronous>, transform_indices = @transform_2, window_bounds = array<i64: 128, 256>}, {pipeline_mode = #tpu.pipeline_mode<synchronous>, transform_indices = @transform_3, window_bounds = array<i64: 256, 1>}, {transform_indices = @transform_4, window_bounds = array<i64: 1, 128, 384>}, {transform_indices = @transform_5, window_bounds = array<i64: 1, 256, 1>}, {transform_indices = @transform_6, window_bounds = array<i64: 1, 1, 1>}]} {
    %c0 = arith.constant 0 : index
    %c0_0 = arith.constant 0 : index
    %c0_1 = arith.constant 0 : index
    %0 = vector.load %arg2[%c0, %c0_0, %c0_1] : memref<1x128x384xf32, #tpu.memory_space<vmem>>, vector<1x128x384xf32>
    %1 = vector.shape_cast %0 : vector<1x128x384xf32> to vector<128x384xf32>
    %2 = arith.truncf %1 : vector<128x384xf32> to vector<128x384xbf16>
    %c0_2 = arith.constant 0 : index
    %c0_3 = arith.constant 0 : index
    %3 = vector.load %arg3[%c0_2, %c0_3] : memref<256x128xbf16, #tpu.memory_space<vmem>>, vector<256x128xbf16>
    %cst = arith.constant dense<0.000000e+00> : vector<256x384xf32>
    %4 = tpu.matmul %3, %2, %cst {dimension_numbers = #tpu.dot_dimension_numbers<[1], [0], [0], [1], [0, 0, 1, 1], [], []>} : vector<256x128xbf16>, vector<128x384xbf16>, vector<256x384xf32> -> vector<256x384xf32>
    %c0_4 = arith.constant 0 : index
    %c0_5 = arith.constant 0 : index
    %5 = vector.load %arg5[%c0_4, %c0_5] : memref<256x1xf32, #tpu.memory_space<vmem>>, vector<256x1xf32>
    %6 = vector.broadcast %5 : vector<256x1xf32> to vector<256x384xf32>
    %7 = arith.subf %6, %4 : vector<256x384xf32>
    %8 = tpu.iota {dimensions = array<i32: 0>} : vector<256x384xi32>
    %cst_6 = arith.constant dense<0x7F800000> : vector<384xf32>
    %9 = vector.multi_reduction <minimumf>, %7, %cst_6 [0] : vector<256x384xf32> to vector<384xf32>
    %10 = vector.shape_cast %9 : vector<384xf32> to vector<1x384xf32>
    %11 = vector.broadcast %10 : vector<1x384xf32> to vector<256x384xf32>
    %12 = arith.cmpf oeq, %7, %11 : vector<256x384xf32>
    %c256_i32 = arith.constant 256 : i32
    %13 = vector.broadcast %c256_i32 : i32 to vector<256x384xi32>
    %14 = arith.select %12, %8, %13 : vector<256x384xi1>, vector<256x384xi32>
    %cst_7 = arith.constant dense<2147483647> : vector<384xi32>
    %15 = vector.multi_reduction <minsi>, %14, %cst_7 [0] : vector<256x384xi32> to vector<384xi32>
    %16 = vector.shape_cast %15 : vector<384xi32> to vector<1x384xi32>
    %17 = vector.broadcast %16 : vector<1x384xi32> to vector<256x384xi32>
    %18 = arith.cmpi eq, %8, %17 : vector<256x384xi32>
    %19 = arith.extui %18 : vector<256x384xi1> to vector<256x384xi32>
    %20 = arith.sitofp %19 : vector<256x384xi32> to vector<256x384xf32>
    %c0_8 = arith.constant 0 : index
    %c0_9 = arith.constant 0 : index
    %21 = vector.load %arg4[%c0_8, %c0_9] : memref<128x256xf32, #tpu.memory_space<vmem>>, vector<128x256xf32>
    %cst_10 = arith.constant dense<0.000000e+00> : vector<128x384xf32>
    %22 = tpu.matmul %21, %20, %cst_10 {dimension_numbers = #tpu.dot_dimension_numbers<[1], [0], [0], [1], [0, 0, 1, 1], [], []>} : vector<128x256xf32>, vector<256x384xf32>, vector<128x384xf32> -> vector<128x384xf32>
    %c384_i32 = arith.constant 384 : i32
    %23 = arith.muli %arg1, %c384_i32 : i32
    %24 = tpu.iota {dimensions = array<i32: 1>} : vector<1x384xi32>
    %25 = vector.broadcast %23 : i32 to vector<1x384xi32>
    %26 = arith.addi %25, %24 : vector<1x384xi32>
    %c640_i32 = arith.constant 640 : i32
    %27 = vector.broadcast %c640_i32 : i32 to vector<1x384xi32>
    %28 = arith.cmpi slt, %26, %27 : vector<1x384xi32>
    %cst_11 = arith.constant 0.000000e+00 : f32
    %29 = vector.shape_cast %28 : vector<1x384xi1> to vector<1x384xi1>
    %30 = vector.broadcast %29 : vector<1x384xi1> to vector<256x384xi1>
    %31 = vector.broadcast %cst_11 : f32 to vector<256x384xf32>
    %32 = arith.select %30, %20, %31 : vector<256x384xi1>, vector<256x384xf32>
    %cst_12 = arith.constant dense<0.000000e+00> : vector<256xf32>
    %33 = vector.multi_reduction <add>, %32, %cst_12 [1] : vector<256x384xf32> to vector<256xf32>
    %34 = vector.shape_cast %33 : vector<256xf32> to vector<256x1xf32>
    %35 = vector.shape_cast %34 : vector<256x1xf32> to vector<1x256x1xf32>
    %c0_13 = arith.constant 0 : index
    %c0_14 = arith.constant 0 : index
    %c0_15 = arith.constant 0 : index
    %36 = vector.load %arg7[%c0_13, %c0_14, %c0_15] : memref<1x256x1xf32, #tpu.memory_space<vmem>>, vector<1x256x1xf32>
    tpu.vector_store %arg7[%c0_13, %c0_14, %c0_15], %35 {strides = array<i32>} : memref<1x256x1xf32, #tpu.memory_space<vmem>>, vector<1x256x1xf32>,
    %37 = arith.subf %1, %22 : vector<128x384xf32>
    %38 = arith.mulf %37, %37 : vector<128x384xf32>
    %cst_16 = arith.constant 0.000000e+00 : f32
    %39 = vector.shape_cast %28 : vector<1x384xi1> to vector<1x384xi1>
    %40 = vector.broadcast %39 : vector<1x384xi1> to vector<128x384xi1>
    %41 = vector.broadcast %cst_16 : f32 to vector<128x384xf32>
    %42 = arith.select %40, %38, %41 : vector<128x384xi1>, vector<128x384xf32>
    %cst_17 = arith.constant dense<0.000000e+00> : vector<128xf32>
    %43 = vector.multi_reduction <add>, %42, %cst_17 [1] : vector<128x384xf32> to vector<128xf32>
    %44 = vector.shape_cast %43 : vector<128xf32> to vector<128x1xf32>
    %cst_18 = arith.constant dense<0.000000e+00> : vector<1xf32>
    %45 = vector.multi_reduction <add>, %44, %cst_18 [0] : vector<128x1xf32> to vector<1xf32>
    %46 = vector.shape_cast %45 : vector<1xf32> to vector<1x1xf32>
    %47 = vector.shape_cast %46 : vector<1x1xf32> to vector<1x1x1xf32>
    %c0_19 = arith.constant 0 : index
    %c0_20 = arith.constant 0 : index
    %c0_21 = arith.constant 0 : index
    %48 = vector.load %arg8[%c0_19, %c0_20, %c0_21] : memref<1x1x1xf32, #tpu.memory_space<vmem>>, vector<1x1x1xf32>
    tpu.vector_store %arg8[%c0_19, %c0_20, %c0_21], %47 {strides = array<i32>} : memref<1x1x1xf32, #tpu.memory_space<vmem>>, vector<1x1x1xf32>,
    %c0_22 = arith.constant 0 : index
    %c0_23 = arith.constant 0 : index
    %c0_24 = arith.constant 0 : index
    %49 = vector.load %arg6[%c0_22, %c0_23, %c0_24] : memref<1x128x384xf32, #tpu.memory_space<vmem>>, vector<1x128x384xf32>
    %50 = vector.shape_cast %49 : vector<1x128x384xf32> to vector<128x384xf32>
    %51 = vector.shape_cast %22 : vector<128x384xf32> to vector<1x128x384xf32>
    tpu.vector_store %arg6[%c0_22, %c0_23, %c0_24], %51 {strides = array<i32>} : memref<1x128x384xf32, #tpu.memory_space<vmem>>, vector<1x128x384xf32>,
    return
  }
  func.func @transform_0(%arg0: i32, %arg1: i32) -> (i32, i32, i32) {
    %c0_i32 = arith.constant 0 : i32
    %c0_i32_0 = arith.constant 0 : i32
    return %arg0, %c0_i32, %arg1 : i32, i32, i32
  }
  func.func @transform_1(%arg0: i32, %arg1: i32) -> (i32, i32) {
    %c0_i32 = arith.constant 0 : i32
    %c0_i32_0 = arith.constant 0 : i32
    %c0_i32_1 = arith.constant 0 : i32
    return %c0_i32, %c0_i32_0 : i32, i32
  }
  func.func @transform_2(%arg0: i32, %arg1: i32) -> (i32, i32) {
    %c0_i32 = arith.constant 0 : i32
    %c0_i32_0 = arith.constant 0 : i32
    %c0_i32_1 = arith.constant 0 : i32
    return %c0_i32, %c0_i32_0 : i32, i32
  }
  func.func @transform_3(%arg0: i32, %arg1: i32) -> (i32, i32) {
    %c0_i32 = arith.constant 0 : i32
    %c0_i32_0 = arith.constant 0 : i32
    %c0_i32_1 = arith.constant 0 : i32
    return %c0_i32, %c0_i32_0 : i32, i32
  }
  func.func @transform_4(%arg0: i32, %arg1: i32) -> (i32, i32, i32) {
    %c0_i32 = arith.constant 0 : i32
    %c0_i32_0 = arith.constant 0 : i32
    return %arg0, %c0_i32, %arg1 : i32, i32, i32
  }
  func.func @transform_5(%arg0: i32, %arg1: i32) -> (i32, i32, i32) {
    %c2_i32 = arith.constant 2 : i32
    %0 = arith.muli %arg0, %c2_i32 : i32
    %1 = arith.addi %0, %arg1 : i32
    %c0_i32 = arith.constant 0 : i32
    %c0_i32_0 = arith.constant 0 : i32
    %c0_i32_1 = arith.constant 0 : i32
    return %1, %c0_i32, %c0_i32_0 : i32, i32, i32
  }
  func.func @transform_6(%arg0: i32, %arg1: i32) -> (i32, i32, i32) {
    %c2_i32 = arith.constant 2 : i32
    %0 = arith.muli %arg0, %c2_i32 : i32
    %1 = arith.addi %0, %arg1 : i32
    %c0_i32 = arith.constant 0 : i32
    %c0_i32_0 = arith.constant 0 : i32
    %c0_i32_1 = arith.constant 0 : i32
    return %1, %c0_i32, %c0_i32_0 : i32, i32, i32
  }
}

</mosaic_0001>

<llo_original>
// kernel: quantize_ema_reset_forward.1
$region0: #{quantize_ema_reset_forward.1}
  #allocation0 [shape = 'u32[]', space=smem, size = 0x4, offset = 0x4, fixed_abs, tag = 'smem constant byte address 0x4 - core index']
  #allocation1 [shape = 'u32[144,128]{1,0:T(1,128)}', space=vmem, size = 0x12000, scoped, tag = 'internal scratch']
  %s0 = inlined_call_operand.hbm [shape: f32[2,128,640], index: 0, kind: input, shape index: {}]
  %s1 = inlined_call_operand.vmem [shape: bf16[256,128], index: 1, kind: input, shape index: {}]
  %s2 = inlined_call_operand.vmem [shape: f32[128,256], index: 2, kind: input, shape index: {}]
  %s3 = inlined_call_operand.vmem [shape: f32[256,1], index: 3, kind: input, shape index: {}]
  %s4 = inlined_call_operand.hbm [shape: f32[2,128,640], index: 4, kind: output, shape index: {0}]
  %s5 = inlined_call_operand.vmem [shape: f32[4,256,1], index: 5, kind: output, shape index: {1}]
  %s6 = inlined_call_operand.vmem [shape: f32[4,1,1], index: 6, kind: output, shape index: {2}]
  %7 = xla_tuple %s4, %s5, %s6
  %s8 = sld [smem:[#allocation0]]
  $region69: #{quantize_ema_reset_forward.1} parent=0
    _
  %s10 = ssub.s32 1, %s8
  %s11 = scalar_select 0, %s10, %s8
  $region1: #{quantize_ema_reset_forward.1} parent=0
    #allocation2 [shape = 'u8[393216]{0}', space=vmem, size = 0x60000, scoped, tag = 'input window, operand 0']
    #allocation3 [shape = 's32[2]{0}', space=sflag, size = 0x8, scoped, tag = 'scoped memory for quantize_ema_reset_forward.1']
    #allocation4 [shape = 's32[2]{0}', space=sflag, size = 0x8, scoped, tag = 'scoped memory for quantize_ema_reset_forward.1']
    #allocation5 [shape = 'u8[393216]{0}', space=vmem, size = 0x60000, scoped, tag = 'output window, operand 0']
    %12 = vsyncpa [#allocation3], 0
    %s13 = scalar_lea.sflag [#allocation3], 1
    %14 = vsyncpa %s13, 0
    %15 = vsyncpa [#allocation4], 0
    %s16 = scalar_lea.sflag [#allocation4], 1
    %17 = vsyncpa %s16, 0
    loop: start=0, step=1, limit=6
    $region2: #{quantize_ema_reset_forward.1} parent=1 // loop_pre_header
      _
    $region3: #{quantize_ema_reset_forward.1} parent=1 // loop_header
      %s19 = sphi 0, %s23
      %p20 = scmp.ge.s32.totalorder %s19, 6
      %s26 = sphi 0, %s38
      %s27 = sphi 0, %s34
      %s28 = sphi 0, %s26
      %s29 = sphi 0, %s27
      %s30 = sphi 0, %s28
      %s31 = sphi 0, %s29
      %s43 = sphi 0, %s45
      %s46 = sphi 0, %s43
      %s47 = sphi 0, %s46
      %s63 = sphi 0, %s47
      %s67 = sphi 0, %s67
      %s69 = sphi 0, %s67
      %s70 = sphi 0, %s69
      %s84 = sphi 0, %s70
      %s88 = sphi 0, %s88
      %s90 = sphi 0, %s88
      %s91 = sphi 0, %s90
      %s105 = sphi 0, %s91
      %s109 = sphi 0, %s109
      %s111 = sphi 0, %s109
      %s112 = sphi 0, %s111
      %s126 = sphi 0, %s112
      %s134 = sphi 0, %s136
      %s137 = sphi 0, %s134
      %s138 = sphi 0, %s137
      %s154 = sphi 0, %s138
      %s164 = sphi 0, %s166
      %s167 = sphi 0, %s164
      %s168 = sphi 0, %s167
      %s184 = sphi 0, %s168
      %s194 = sphi 0, %s196
      %s197 = sphi 0, %s194
      %s198 = sphi 0, %s197
      %s214 = sphi 0, %s198
    $region4: #{quantize_ema_reset_forward.1} parent=1 // loop_header_branch
      %22 = sbr.rel (%p20) target = $region8
    $region5: #{quantize_ema_reset_forward.1} parent=1 // loop_body
      %s24 = ssub.s32 %s19, 1
      %s25 = ssub.s32 %s19, 2
      %s32 = sadd.s32 1, %s27
      %p33 = scmp.ge.s32.totalorder %s32, 2
      %s34 = scalar_select %p33, 0, %s32
      %s35 = sadd.s32 1, %s26
      %s36 = scalar_select %p33, %s35, %s26
      %p37 = scmp.ge.s32.totalorder %s36, 2
      %s38 = scalar_select %p37, 0, %s36
      %s39 = ssub.s32 %s26, %s38
      %s40 = ssub.s32 %s27, %s34
      %s41 = sor.u32 %s39, %s40
      %p42 = scmp.eq.s32.totalorder %s41, 0
      %s44 = sadd.s32 %s43, 1
      %s45 = scalar_select %p42, %s43, %s44
      %p48 = pneg %p42
      %p49 = scmp.eq.s32.totalorder %s19, 3
      %p50 = por %p48, %p49
      %p51 = scmp.ne.s32.totalorder %s43, %s46
      %p52 = scmp.eq.s32.totalorder %s19, 0
      %p53 = por %p51, %p52
      %p54 = scmp.ne.s32.totalorder %s43, %s46
      %p55 = scmp.eq.s32.totalorder %s24, 3
      %p56 = por %p54, %p55
      %p57 = scmp.ne.s32.totalorder %s46, %s47
      %p58 = scmp.eq.s32.totalorder %s24, 0
      %p59 = por %p57, %p58
      %p60 = scmp.ne.s32.totalorder %s46, %s47
      %p61 = scmp.eq.s32.totalorder %s25, 3
      %p62 = por %p60, %p61
      %p64 = scmp.ne.s32.totalorder %s47, %s63
      %p65 = scmp.eq.s32.totalorder %s25, 0
      %p66 = por %p64, %p65
      %s68 = sadd.s32 %s67, 1
      %p71 = scmp.eq.s32.totalorder %s19, 3
      %p72 = scmp.ne.s32.totalorder %s67, %s69
      %p73 = scmp.eq.s32.totalorder %s19, 0
      %p74 = por %p72, %p73
      %p75 = scmp.ne.s32.totalorder %s67, %s69
      %p76 = scmp.eq.s32.totalorder %s24, 3
      %p77 = por %p75, %p76
      %p78 = scmp.ne.s32.totalorder %s69, %s70
      %p79 = scmp.eq.s32.totalorder %s24, 0
      %p80 = por %p78, %p79
      %p81 = scmp.ne.s32.totalorder %s69, %s70
      %p82 = scmp.eq.s32.totalorder %s25, 3
      %p83 = por %p81, %p82
      %p85 = scmp.ne.s32.totalorder %s70, %s84
      %p86 = scmp.eq.s32.totalorder %s25, 0
      %p87 = por %p85, %p86
      %s89 = sadd.s32 %s88, 1
      %p92 = scmp.eq.s32.totalorder %s19, 3
      %p93 = scmp.ne.s32.totalorder %s88, %s90
      %p94 = scmp.eq.s32.totalorder %s19, 0
      %p95 = por %p93, %p94
      %p96 = scmp.ne.s32.totalorder %s88, %s90
      %p97 = scmp.eq.s32.totalorder %s24, 3
      %p98 = por %p96, %p97
      %p99 = scmp.ne.s32.totalorder %s90, %s91
      %p100 = scmp.eq.s32.totalorder %s24, 0
      %p101 = por %p99, %p100
      %p102 = scmp.ne.s32.totalorder %s90, %s91
      %p103 = scmp.eq.s32.totalorder %s25, 3
      %p104 = por %p102, %p103
      %p106 = scmp.ne.s32.totalorder %s91, %s105
      %p107 = scmp.eq.s32.totalorder %s25, 0
      %p108 = por %p106, %p107
      %s110 = sadd.s32 %s109, 1
      %p113 = scmp.eq.s32.totalorder %s19, 3
      %p114 = scmp.ne.s32.totalorder %s109, %s111
      %p115 = scmp.eq.s32.totalorder %s19, 0
      %p116 = por %p114, %p115
      %p117 = scmp.ne.s32.totalorder %s109, %s111
      %p118 = scmp.eq.s32.totalorder %s24, 3
      %p119 = por %p117, %p118
      %p120 = scmp.ne.s32.totalorder %s111, %s112
      %p121 = scmp.eq.s32.totalorder %s24, 0
      %p122 = por %p120, %p121
      %p123 = scmp.ne.s32.totalorder %s111, %s112
      %p124 = scmp.eq.s32.totalorder %s25, 3
      %p125 = por %p123, %p124
      %p127 = scmp.ne.s32.totalorder %s112, %s126
      %p128 = scmp.eq.s32.totalorder %s25, 0
      %p129 = por %p127, %p128
      %s130 = ssub.s32 %s26, %s38
      %s131 = ssub.s32 %s27, %s34
      %s132 = sor.u32 %s130, %s131
      %p133 = scmp.eq.s32.totalorder %s132, 0
      %s135 = sadd.s32 %s134, 1
      %s136 = scalar_select %p133, %s134, %s135
      %p139 = pneg %p133
      %p140 = scmp.eq.s32.totalorder %s19, 3
      %p141 = por %p139, %p140
      %p142 = scmp.ne.s32.totalorder %s134, %s137
      %p143 = scmp.eq.s32.totalorder %s19, 0
      %p144 = por %p142, %p143
      %p145 = scmp.ne.s32.totalorder %s134, %s137
      %p146 = scmp.eq.s32.totalorder %s24, 3
      %p147 = por %p145, %p146
      %p148 = scmp.ne.s32.totalorder %s137, %s138
      %p149 = scmp.eq.s32.totalorder %s24, 0
      %p150 = por %p148, %p149
      %p151 = scmp.ne.s32.totalorder %s137, %s138
      %p152 = scmp.eq.s32.totalorder %s25, 3
      %p153 = por %p151, %p152
      %p155 = scmp.ne.s32.totalorder %s138, %s154
      %p156 = scmp.eq.s32.totalorder %s25, 0
      %p157 = por %p155, %p156
      %s158 = smul.u32 %s26, 2
      %s159 = sadd.s32 %s158, %s27
      %s160 = smul.u32 %s38, 2
      %s161 = sadd.s32 %s160, %s34
      %s162 = ssub.s32 %s159, %s161
      %p163 = scmp.eq.s32.totalorder %s162, 0
      %s165 = sadd.s32 %s164, 1
      %s166 = scalar_select %p163, %s164, %s165
      %p169 = pneg %p163
      %p170 = scmp.eq.s32.totalorder %s19, 3
      %p171 = por %p169, %p170
      %p172 = scmp.ne.s32.totalorder %s164, %s167
      %p173 = scmp.eq.s32.totalorder %s19, 0
      %p174 = por %p172, %p173
      %p175 = scmp.ne.s32.totalorder %s164, %s167
      %p176 = scmp.eq.s32.totalorder %s24, 3
      %p177 = por %p175, %p176
      %p178 = scmp.ne.s32.totalorder %s167, %s168
      %p179 = scmp.eq.s32.totalorder %s24, 0
      %p180 = por %p178, %p179
      %p181 = scmp.ne.s32.totalorder %s167, %s168
      %p182 = scmp.eq.s32.totalorder %s25, 3
      %p183 = por %p181, %p182
      %p185 = scmp.ne.s32.totalorder %s168, %s184
      %p186 = scmp.eq.s32.totalorder %s25, 0
      %p187 = por %p185, %p186
      %s188 = smul.u32 %s26, 2
      %s189 = sadd.s32 %s188, %s27
      %s190 = smul.u32 %s38, 2
      %s191 = sadd.s32 %s190, %s34
      %s192 = ssub.s32 %s189, %s191
      %p193 = scmp.eq.s32.totalorder %s192, 0
      %s195 = sadd.s32 %s194, 1
      %s196 = scalar_select %p193, %s194, %s195
      %p199 = pneg %p193
      %p200 = scmp.eq.s32.totalorder %s19, 3
      %p201 = por %p199, %p200
      %p202 = scmp.ne.s32.totalorder %s194, %s197
      %p203 = scmp.eq.s32.totalorder %s19, 0
      %p204 = por %p202, %p203
      %p205 = scmp.ne.s32.totalorder %s194, %s197
      %p206 = scmp.eq.s32.totalorder %s24, 3
      %p207 = por %p205, %p206
      %p208 = scmp.ne.s32.totalorder %s197, %s198
      %p209 = scmp.eq.s32.totalorder %s24, 0
      %p210 = por %p208, %p209
      %p211 = scmp.ne.s32.totalorder %s197, %s198
      %p212 = scmp.eq.s32.totalorder %s25, 3
      %p213 = por %p211, %p212
      %p215 = scmp.ne.s32.totalorder %s198, %s214
      %p216 = scmp.eq.s32.totalorder %s25, 0
      %p217 = por %p215, %p216
      %p218 = scmp.le.s32.totalorder 1, %s19
      %p219 = scmp.lt.s32.totalorder %s19, 5
      %p220 = pnand %p218, %p219
      %p221 = pneg %p220
      // Predicated region
      $region9: #{quantize_ema_reset_forward.1} parent=5 // pred_check
        _
      $region10: #{quantize_ema_reset_forward.1} parent=5 // pred_check_branch
        %223 = sbr.rel (%p220) target = $region12
      $region11: #{quantize_ema_reset_forward.1} parent=5 // pred_region
        %s224 = ssub.s32 %s19, 1
        // Predicated region
        $region13: #{quantize_ema_reset_forward.1} parent=11 // pred_check
          %p225 = pneg %p80
        $region14: #{quantize_ema_reset_forward.1} parent=11 // pred_check_branch
          %227 = sbr.rel (%p225) target = $region16
        $region15: #{quantize_ema_reset_forward.1} parent=11 // pred_region
          _
        $region16: #{quantize_ema_reset_forward.1} parent=11 // pred_fallthru
          _
        // Predicated region
        $region17: #{quantize_ema_reset_forward.1} parent=11 // pred_check
          %p228 = pneg %p101
        $region18: #{quantize_ema_reset_forward.1} parent=11 // pred_check_branch
          %230 = sbr.rel (%p228) target = $region20
        $region19: #{quantize_ema_reset_forward.1} parent=11 // pred_region
          _
        $region20: #{quantize_ema_reset_forward.1} parent=11 // pred_fallthru
          _
        // Predicated region
        $region21: #{quantize_ema_reset_forward.1} parent=11 // pred_check
          %p231 = pneg %p122
        $region22: #{quantize_ema_reset_forward.1} parent=11 // pred_check_branch
          %233 = sbr.rel (%p231) target = $region24
        $region23: #{quantize_ema_reset_forward.1} parent=11 // pred_region
          _
        $region24: #{quantize_ema_reset_forward.1} parent=11 // pred_fallthru
          _
      $region12: #{quantize_ema_reset_forward.1} parent=5 // pred_fallthru
        _
      %p234 = scmp.lt.s32.totalorder %s19, 4
      // Predicated region
      $region25: #{quantize_ema_reset_forward.1} parent=5 // pred_check
        %p235 = pneg %p234
      $region26: #{quantize_ema_reset_forward.1} parent=5 // pred_check_branch
        %237 = sbr.rel (%p235) target = $region28
      $region27: #{quantize_ema_reset_forward.1} parent=5 // pred_region
        // Predicated region
        $region29: #{quantize_ema_reset_forward.1} parent=27 // pred_check
          %p238 = pneg %p53
        $region30: #{quantize_ema_reset_forward.1} parent=27 // pred_check_branch
          %240 = sbr.rel (%p238) target = $region32
        $region31: #{quantize_ema_reset_forward.1} parent=27 // pred_region
          %s241 = sand.u32 %s43, 1
          %s242 = scalar_lea.sflag [#allocation3], %s241
          %s243 = sand.u32 %s43, 1
          %s244 = smul.addr %s243, 384
          %s245 = scalar_lea.vmem [#allocation2], %s244
          %s246 = smul.u32 3, %s27
          %s247 = ssub.s32 5, %s246
          %p248 = scmp.lt.s32.totalorder %s247, 3
          %s249 = scalar_select %p248, %s247, 3
          %s250 = smul.u32 2048, %s249
          %s252 = ssub.s32 6144, %s250
          %253 = vsyncadd %s242, %s252
          %p254 = scmp.ne.s32.totalorder 0, %s250
          %s255 = smul.addr %s26, 80
          %s256 = sadd.s32 %s246, %s255
          %s257 = smul.addr %s256, 128
          %s258 = scalar_lea.hbm %s0, %s257
          %s259 = smul.u32 %s249, 8
          %s260 = smul.u32 %s259, 16
          %s261 = sshll.u32 %s245, 4
          %s262 = int_to_ptr.vmem [resolvable:$true] %s261
          %s263 = sshll.u32 %s260, 4
          %267 = dma.hbm_to_vmem [thread:$0]  (%p254), %s258, %s263, %s262, %s242, 640, 384, %s259
        $region32: #{quantize_ema_reset_forward.1} parent=27 // pred_fallthru
          _
      $region28: #{quantize_ema_reset_forward.1} parent=5 // pred_fallthru
        _
      %p268 = scmp.le.s32.totalorder 1, %s19
      %p269 = scmp.lt.s32.totalorder %s19, 5
      %p270 = pnand %p268, %p269
      %p271 = pneg %p270
      // Predicated region
      $region33: #{quantize_ema_reset_forward.1} parent=5 // pred_check
        _
      $region34: #{quantize_ema_reset_forward.1} parent=5 // pred_check_branch
        %273 = sbr.rel (%p270) target = $region36
      $region35: #{quantize_ema_reset_forward.1} parent=5 // pred_region
        %s274 = ssub.s32 %s19, 1
        %s275 = sand.u32 %s46, 1
        %s276 = scalar_lea.sflag [#allocation3], %s275
        %s277 = sand.u32 %s46, 1
        %s278 = smul.addr %s277, 384
        %s279 = scalar_lea.vmem [#allocation2], %s278
        // Predicated region
        $region37: #{quantize_ema_reset_forward.1} parent=35 // pred_check
          %p280 = pneg %p59
        $region38: #{quantize_ema_reset_forward.1} parent=35 // pred_check_branch
          %282 = sbr.rel (%p280) target = $region40
        $region39: #{quantize_ema_reset_forward.1} parent=35 // pred_region
          %283 = dma.done %s276, 6144
        $region40: #{quantize_ema_reset_forward.1} parent=35 // pred_fallthru
          _
        %s284 = sand.u32 %s46, 1
        %s285 = scalar_lea.sflag [#allocation3], %s284
        %s286 = sand.u32 %s46, 1
        %s287 = smul.addr %s286, 384
        %s288 = scalar_lea.vmem [#allocation2], %s287
        %p289 = pneg %p59
        %p290 = pneg %p56
        %p291 = pneg %p80
        %p292 = pneg %p77
        %p293 = pneg %p101
        %p294 = pneg %p98
        %p295 = pneg %p122
        %p296 = pneg %p119
        %p297 = pneg %p150
        %p298 = pneg %p147
        %s299 = sand.u32 %s137, 1
        %s300 = scalar_lea.sflag [#allocation4], %s299
        %s301 = sand.u32 %s137, 1
        %s302 = smul.addr %s301, 384
        %s303 = scalar_lea.vmem [#allocation5], %s302
        %p304 = pneg %p180
        %p305 = pneg %p177
        %s306 = smul.u32 %s28, 2
        %s307 = sadd.s32 %s306, %s29
        %p308 = scmp.lt.s32.totalorder %s307, 3
        %s309 = scalar_select %p308, %s307, 3
        %s310 = smul.addr %s309, 32
        %s311 = smul.addr %s310, 8
        %s312 = scalar_lea.vmem %s5, %s311
        %p313 = pneg %p210
        %p314 = pneg %p207
        %s315 = smul.u32 %s28, 2
        %s316 = sadd.s32 %s315, %s29
        %p317 = scmp.lt.s32.totalorder %s316, 3
        %s318 = scalar_select %p317, %s316, 3
        %s319 = scalar_lea.vmem %s6, %s318
        %s320 = smul.u32 3, %s29
        %s321 = ssub.s32 5, %s320
        %p322 = scmp.lt.s32.totalorder %s321, 3
        %s323 = scalar_select %p322, %s321, 3
        %s324 = smul.u32 2048, %s323
        %s325 = smul.u32 3, %s29
        %s326 = ssub.s32 5, %s325
        %p327 = scmp.lt.s32.totalorder %s326, 3
        %s328 = scalar_select %p327, %s326, 3
        %s329 = smul.u32 2048, %s328
        %s330 = smul.u32 %s28, 2
        %s331 = sadd.s32 %s330, %s29
        %p332 = scmp.lt.s32.totalorder %s331, 3
        %s333 = scalar_select %p332, %s331, 3
        %s334 = smul.addr %s333, 32
        %s335 = smul.addr %s334, 8
        %s336 = scalar_lea.vmem %s5, %s335
        %s337 = smul.u32 %s28, 2
        %s338 = sadd.s32 %s337, %s29
        %s339 = smul.u32 %s28, 2
        %s340 = sadd.s32 %s339, %s29
        %p341 = scmp.lt.s32.totalorder %s340, 3
        %s342 = scalar_select %p341, %s340, 3
        %s343 = scalar_lea.vmem %s6, %s342
        %s344 = smul.u32 %s28, 2
        %s345 = sadd.s32 %s344, %s29
        %v347 = vld [vmem:[%s279] sm:$0xff]
        %v348 = vld [vmem:[%s279 + $0x8] sm:$0xff]
        %v349 = vld [vmem:[%s279 + $0x10] sm:$0xff]
        %v350 = vld [vmem:[%s279 + $0x18] sm:$0xff]
        %v351 = vld [vmem:[%s279 + $0x20] sm:$0xff]
        %v352 = vld [vmem:[%s279 + $0x28] sm:$0xff]
        %v353 = vld [vmem:[%s279 + $0x30] sm:$0xff]
        %v354 = vld [vmem:[%s279 + $0x38] sm:$0xff]
        %v355 = vld [vmem:[%s279 + $0x40] sm:$0xff]
        %v356 = vld [vmem:[%s279 + $0x48] sm:$0xff]
        %v357 = vld [vmem:[%s279 + $0x50] sm:$0xff]
        %v358 = vld [vmem:[%s279 + $0x58] sm:$0xff]
        %v359 = vld [vmem:[%s279 + $0x60] sm:$0xff]
        %v360 = vld [vmem:[%s279 + $0x68] sm:$0xff]
        %v361 = vld [vmem:[%s279 + $0x70] sm:$0xff]
        %v362 = vld [vmem:[%s279 + $0x78] sm:$0xff]
        %v363 = vld [vmem:[%s279 + $0x80] sm:$0xff]
        %v364 = vld [vmem:[%s279 + $0x88] sm:$0xff]
        %v365 = vld [vmem:[%s279 + $0x90] sm:$0xff]
        %v366 = vld [vmem:[%s279 + $0x98] sm:$0xff]
        %v367 = vld [vmem:[%s279 + $0xa0] sm:$0xff]
        %v368 = vld [vmem:[%s279 + $0xa8] sm:$0xff]
        %v369 = vld [vmem:[%s279 + $0xb0] sm:$0xff]
        %v370 = vld [vmem:[%s279 + $0xb8] sm:$0xff]
        %v371 = vld [vmem:[%s279 + $0xc0] sm:$0xff]
        %v372 = vld [vmem:[%s279 + $0xc8] sm:$0xff]
        %v373 = vld [vmem:[%s279 + $0xd0] sm:$0xff]
        %v374 = vld [vmem:[%s279 + $0xd8] sm:$0xff]
        %v375 = vld [vmem:[%s279 + $0xe0] sm:$0xff]
        %v376 = vld [vmem:[%s279 + $0xe8] sm:$0xff]
        %v377 = vld [vmem:[%s279 + $0xf0] sm:$0xff]
        %v378 = vld [vmem:[%s279 + $0xf8] sm:$0xff]
        %v379 = vld [vmem:[%s279 + $0x100] sm:$0xff]
        %v380 = vld [vmem:[%s279 + $0x108] sm:$0xff]
        %v381 = vld [vmem:[%s279 + $0x110] sm:$0xff]
        %v382 = vld [vmem:[%s279 + $0x118] sm:$0xff]
        %v383 = vld [vmem:[%s279 + $0x120] sm:$0xff]
        %v384 = vld [vmem:[%s279 + $0x128] sm:$0xff]
        %v385 = vld [vmem:[%s279 + $0x130] sm:$0xff]
        %v386 = vld [vmem:[%s279 + $0x138] sm:$0xff]
        %v387 = vld [vmem:[%s279 + $0x140] sm:$0xff]
        %v388 = vld [vmem:[%s279 + $0x148] sm:$0xff]
        %v389 = vld [vmem:[%s279 + $0x150] sm:$0xff]
        %v390 = vld [vmem:[%s279 + $0x158] sm:$0xff]
        %v391 = vld [vmem:[%s279 + $0x160] sm:$0xff]
        %v392 = vld [vmem:[%s279 + $0x168] sm:$0xff]
        %v393 = vld [vmem:[%s279 + $0x170] sm:$0xff]
        %v394 = vld [vmem:[%s279 + $0x178] sm:$0xff]
        %v395 = vpack.c.bf16 %v350, %v347
        %v396 = vpack.c.bf16 %v351, %v348
        %v397 = vpack.c.bf16 %v352, %v349
        %v398 = vpack.c.bf16 %v356, %v353
        %v399 = vpack.c.bf16 %v357, %v354
        %v400 = vpack.c.bf16 %v358, %v355
        %v401 = vpack.c.bf16 %v362, %v359
        %v402 = vpack.c.bf16 %v363, %v360
        %v403 = vpack.c.bf16 %v364, %v361
        %v404 = vpack.c.bf16 %v368, %v365
        %v405 = vpack.c.bf16 %v369, %v366
        %v406 = vpack.c.bf16 %v370, %v367
        %v407 = vpack.c.bf16 %v374, %v371
        %v408 = vpack.c.bf16 %v375, %v372
        %v409 = vpack.c.bf16 %v376, %v373
        %v410 = vpack.c.bf16 %v380, %v377
        %v411 = vpack.c.bf16 %v381, %v378
        %v412 = vpack.c.bf16 %v382, %v379
        %v413 = vpack.c.bf16 %v386, %v383
        %v414 = vpack.c.bf16 %v387, %v384
        %v415 = vpack.c.bf16 %v388, %v385
        %v416 = vpack.c.bf16 %v392, %v389
        %v417 = vpack.c.bf16 %v393, %v390
        %v418 = vpack.c.bf16 %v394, %v391
        %v419 = vld [vmem:[%s1] sm:$0xf]
        %v420 = vld [vmem:[%s1 + $0x4] sm:$0xf]
        %v421 = vld [vmem:[%s1 + $0x8] sm:$0xf]
        %v422 = vld [vmem:[%s1 + $0xc] sm:$0xf]
        %v423 = vld [vmem:[%s1 + $0x10] sm:$0xf]
        %v424 = vld [vmem:[%s1 + $0x14] sm:$0xf]
        %v425 = vld [vmem:[%s1 + $0x18] sm:$0xf]
        %v426 = vld [vmem:[%s1 + $0x1c] sm:$0xf]
        %v427 = vld [vmem:[%s1 + $0x20] sm:$0xf]
        %v428 = vld [vmem:[%s1 + $0x24] sm:$0xf]
        %v429 = vld [vmem:[%s1 + $0x28] sm:$0xf]
        %v430 = vld [vmem:[%s1 + $0x2c] sm:$0xf]
        %v431 = vld [vmem:[%s1 + $0x30] sm:$0xf]
        %v432 = vld [vmem:[%s1 + $0x34] sm:$0xf]
        %v433 = vld [vmem:[%s1 + $0x38] sm:$0xf]
        %v434 = vld [vmem:[%s1 + $0x3c] sm:$0xf]
        %v435 = vld [vmem:[%s1 + $0x40] sm:$0xf]
        %v436 = vld [vmem:[%s1 + $0x44] sm:$0xf]
        %v437 = vld [vmem:[%s1 + $0x48] sm:$0xf]
        %v438 = vld [vmem:[%s1 + $0x4c] sm:$0xf]
        %v439 = vld [vmem:[%s1 + $0x50] sm:$0xf]
        %v440 = vld [vmem:[%s1 + $0x54] sm:$0xf]
        %v441 = vld [vmem:[%s1 + $0x58] sm:$0xf]
        %v442 = vld [vmem:[%s1 + $0x5c] sm:$0xf]
        %v443 = vld [vmem:[%s1 + $0x60] sm:$0xf]
        %v444 = vld [vmem:[%s1 + $0x64] sm:$0xf]
        %v445 = vld [vmem:[%s1 + $0x68] sm:$0xf]
        %v446 = vld [vmem:[%s1 + $0x6c] sm:$0xf]
        %v447 = vld [vmem:[%s1 + $0x70] sm:$0xf]
        %v448 = vld [vmem:[%s1 + $0x74] sm:$0xf]
        %v449 = vld [vmem:[%s1 + $0x78] sm:$0xf]
        %v450 = vld [vmem:[%s1 + $0x7c] sm:$0xf]
        %v483 = vunpack.c.l.b16 %v419
        %v484 = vunpack.c.l.b16 %v420
        %v485 = vunpack.c.l.b16 %v421
        %v486 = vunpack.c.l.b16 %v422
        %v487 = vunpack.c.l.b16 %v423
        %v488 = vunpack.c.l.b16 %v424
        %v489 = vunpack.c.l.b16 %v425
        %v490 = vunpack.c.l.b16 %v426
        %v491 = vunpack.c.l.b16 %v427
        %v492 = vunpack.c.l.b16 %v428
        %v493 = vunpack.c.l.b16 %v429
        %v494 = vunpack.c.l.b16 %v430
        %v495 = vunpack.c.l.b16 %v431
        %v496 = vunpack.c.l.b16 %v432
        %v497 = vunpack.c.l.b16 %v433
        %v498 = vunpack.c.l.b16 %v434
        %v499 = vunpack.c.l.b16 %v435
        %v500 = vunpack.c.l.b16 %v436
        %v501 = vunpack.c.l.b16 %v437
        %v502 = vunpack.c.l.b16 %v438
        %v503 = vunpack.c.l.b16 %v439
        %v504 = vunpack.c.l.b16 %v440
        %v505 = vunpack.c.l.b16 %v441
        %v506 = vunpack.c.l.b16 %v442
        %v507 = vunpack.c.l.b16 %v443
        %v508 = vunpack.c.l.b16 %v444
        %v509 = vunpack.c.l.b16 %v445
        %v510 = vunpack.c.l.b16 %v446
        %v511 = vunpack.c.l.b16 %v447
        %v512 = vunpack.c.l.b16 %v448
        %v513 = vunpack.c.l.b16 %v449
        %v514 = vunpack.c.l.b16 %v450
        %v515 = vpack.c.b16 %v484, %v483
        %v516 = vpack.c.b16 %v486, %v485
        %v517 = vpack.c.b16 %v488, %v487
        %v518 = vpack.c.b16 %v490, %v489
        %v519 = vpack.c.b16 %v492, %v491
        %v520 = vpack.c.b16 %v494, %v493
        %v521 = vpack.c.b16 %v496, %v495
        %v522 = vpack.c.b16 %v498, %v497
        %v523 = vpack.c.b16 %v500, %v499
        %v524 = vpack.c.b16 %v502, %v501
        %v525 = vpack.c.b16 %v504, %v503
        %v526 = vpack.c.b16 %v506, %v505
        %v527 = vpack.c.b16 %v508, %v507
        %v528 = vpack.c.b16 %v510, %v509
        %v529 = vpack.c.b16 %v512, %v511
        %v530 = vpack.c.b16 %v514, %v513
        %547 = vmatprep.subr.bf16.mxu0 %v417
        %548 = vmatpush1.bf16.msra.mxu0 %v416
        %549 = vmatprep.subr.bf16.mxu0 %v414
        %550 = vmatpush1.bf16.msra.mxu0 %v413
        %551 = vmatprep.subr.bf16.mxu0 %v411
        %552 = vmatpush1.bf16.msra.mxu0 %v410
        %553 = vmatprep.subr.bf16.mxu0 %v408
        %554 = vmatpush1.bf16.msra.mxu0 %v407
        %555 = vmatprep.subr.bf16.mxu0 %v405
        %556 = vmatpush1.bf16.msra.mxu0 %v404
        %557 = vmatprep.subr.bf16.mxu0 %v402
        %558 = vmatpush1.bf16.msra.mxu0 %v401
        %559 = vmatprep.subr.bf16.mxu0 %v399
        %560 = vmatpush1.bf16.msra.mxu0 %v398
        %561 = vmatprep.subr.bf16.mxu0 %v396
        %562 = vmatpush1.bf16.msra.mxu0 %v395
        %563 = vmatprep.subr.bf16.mxu0 0
        %564 = vmatpush2.bf16.msra.mxu0 0
        %565 = vmatprep.subr.bf16.mxu0 0
        %566 = vmatpush2.bf16.msra.mxu0 0
        %567 = vmatprep.subr.bf16.mxu0 0
        %568 = vmatpush2.bf16.msra.mxu0 0
        %569 = vmatprep.subr.bf16.mxu0 0
        %570 = vmatpush2.bf16.msra.mxu0 0
        %571 = vmatprep.subr.bf16.mxu0 0
        %572 = vmatpush2.bf16.msra.mxu0 0
        %573 = vmatprep.subr.bf16.mxu0 0
        %574 = vmatpush2.bf16.msra.mxu0 0
        %575 = vmatprep.subr.bf16.mxu0 0
        %576 = vmatpush2.bf16.msra.mxu0 0
        %577 = vmatprep.subr.bf16.mxu0 0
        %578 = vmatpush2.bf16.msra.mxu0 0
        %579 = vmatprep.mubr.bf16.mxu0 0
        %580 = vmatmul.mubr.bf16.gmra.mxu0 %v515
        %v581 = vpop.f32.mrf.mxu0
        %v582 = vadd.f32 0.0, %v581
        %v583 = vpop.f32.mrf.mxu0
        %v584 = vadd.f32 0.0, %v583
        %v585 = vpop.f32.mrf.mxu0
        %v586 = vadd.f32 0.0, %v585
        %v587 = vpop.f32.mrf.mxu0
        %v588 = vadd.f32 0.0, %v587
        %589 = vmatprep.mubr.bf16.mxu0 0
        %590 = vmatmul.mubr.bf16.gmra.mxu0 %v516
        %v591 = vpop.f32.mrf.mxu0
        %v592 = vadd.f32 0.0, %v591
        %v593 = vpop.f32.mrf.mxu0
        %v594 = vadd.f32 0.0, %v593
        %v595 = vpop.f32.mrf.mxu0
        %v596 = vadd.f32 0.0, %v595
        %v597 = vpop.f32.mrf.mxu0
        %v598 = vadd.f32 0.0, %v597
        %599 = vmatprep.mubr.bf16.mxu0 0
        %600 = vmatmul.mubr.bf16.gmra.mxu0 %v517
        %v601 = vpop.f32.mrf.mxu0
        %v602 = vadd.f32 0.0, %v601
        %v603 = vpop.f32.mrf.mxu0
        %v604 = vadd.f32 0.0, %v603
        %v605 = vpop.f32.mrf.mxu0
        %v606 = vadd.f32 0.0, %v605
        %v607 = vpop.f32.mrf.mxu0
        %v608 = vadd.f32 0.0, %v607
        %609 = vmatprep.mubr.bf16.mxu0 0
        %610 = vmatmul.mubr.bf16.gmra.mxu0 %v518
        %v611 = vpop.f32.mrf.mxu0
        %v612 = vadd.f32 0.0, %v611
        %v613 = vpop.f32.mrf.mxu0
        %v614 = vadd.f32 0.0, %v613
        %v615 = vpop.f32.mrf.mxu0
        %v616 = vadd.f32 0.0, %v615
        %v617 = vpop.f32.mrf.mxu0
        %v618 = vadd.f32 0.0, %v617
        %619 = vmatprep.mubr.bf16.mxu0 0
        %620 = vmatmul.mubr.bf16.gmra.mxu0 %v519
        %v621 = vpop.f32.mrf.mxu0
        %v622 = vadd.f32 0.0, %v621
        %v623 = vpop.f32.mrf.mxu0
        %v624 = vadd.f32 0.0, %v623
        %v625 = vpop.f32.mrf.mxu0
        %v626 = vadd.f32 0.0, %v625
        %v627 = vpop.f32.mrf.mxu0
        %v628 = vadd.f32 0.0, %v627
        %629 = vmatprep.mubr.bf16.mxu0 0
        %630 = vmatmul.mubr.bf16.gmra.mxu0 %v520
        %v631 = vpop.f32.mrf.mxu0
        %v632 = vadd.f32 0.0, %v631
        %v633 = vpop.f32.mrf.mxu0
        %v634 = vadd.f32 0.0, %v633
        %v635 = vpop.f32.mrf.mxu0
        %v636 = vadd.f32 0.0, %v635
        %v637 = vpop.f32.mrf.mxu0
        %v638 = vadd.f32 0.0, %v637
        %639 = vmatprep.mubr.bf16.mxu0 0
        %640 = vmatmul.mubr.bf16.gmra.mxu0 %v521
        %v641 = vpop.f32.mrf.mxu0
        %v642 = vadd.f32 0.0, %v641
        %v643 = vpop.f32.mrf.mxu0
        %v644 = vadd.f32 0.0, %v643
        %v645 = vpop.f32.mrf.mxu0
        %v646 = vadd.f32 0.0, %v645
        %v647 = vpop.f32.mrf.mxu0
        %v648 = vadd.f32 0.0, %v647
        %649 = vmatprep.mubr.bf16.mxu0 0
        %650 = vmatmul.mubr.bf16.gmra.mxu0 %v522
        %v651 = vpop.f32.mrf.mxu0
        %v652 = vadd.f32 0.0, %v651
        %v653 = vpop.f32.mrf.mxu0
        %v654 = vadd.f32 0.0, %v653
        %v655 = vpop.f32.mrf.mxu0
        %v656 = vadd.f32 0.0, %v655
        %v657 = vpop.f32.mrf.mxu0
        %v658 = vadd.f32 0.0, %v657
        %659 = vmatprep.mubr.bf16.mxu0 0
        %660 = vmatmul.mubr.bf16.gmra.mxu0 %v523
        %v661 = vpop.f32.mrf.mxu0
        %v662 = vadd.f32 0.0, %v661
        %v663 = vpop.f32.mrf.mxu0
        %v664 = vadd.f32 0.0, %v663
        %v665 = vpop.f32.mrf.mxu0
        %v666 = vadd.f32 0.0, %v665
        %v667 = vpop.f32.mrf.mxu0
        %v668 = vadd.f32 0.0, %v667
        %669 = vmatprep.mubr.bf16.mxu0 0
        %670 = vmatmul.mubr.bf16.gmra.mxu0 %v524
        %v671 = vpop.f32.mrf.mxu0
        %v672 = vadd.f32 0.0, %v671
        %v673 = vpop.f32.mrf.mxu0
        %v674 = vadd.f32 0.0, %v673
        %v675 = vpop.f32.mrf.mxu0
        %v676 = vadd.f32 0.0, %v675
        %v677 = vpop.f32.mrf.mxu0
        %v678 = vadd.f32 0.0, %v677
        %679 = vmatprep.mubr.bf16.mxu0 0
        %680 = vmatmul.mubr.bf16.gmra.mxu0 %v525
        %v681 = vpop.f32.mrf.mxu0
        %v682 = vadd.f32 0.0, %v681
        %v683 = vpop.f32.mrf.mxu0
        %v684 = vadd.f32 0.0, %v683
        %v685 = vpop.f32.mrf.mxu0
        %v686 = vadd.f32 0.0, %v685
        %v687 = vpop.f32.mrf.mxu0
        %v688 = vadd.f32 0.0, %v687
        %689 = vmatprep.mubr.bf16.mxu0 0
        %690 = vmatmul.mubr.bf16.gmra.mxu0 %v526
        %v691 = vpop.f32.mrf.mxu0
        %v692 = vadd.f32 0.0, %v691
        %v693 = vpop.f32.mrf.mxu0
        %v694 = vadd.f32 0.0, %v693
        %v695 = vpop.f32.mrf.mxu0
        %v696 = vadd.f32 0.0, %v695
        %v697 = vpop.f32.mrf.mxu0
        %v698 = vadd.f32 0.0, %v697
        %699 = vmatprep.mubr.bf16.mxu0 0
        %700 = vmatmul.mubr.bf16.gmra.mxu0 %v527
        %v701 = vpop.f32.mrf.mxu0
        %v702 = vadd.f32 0.0, %v701
        %v703 = vpop.f32.mrf.mxu0
        %v704 = vadd.f32 0.0, %v703
        %v705 = vpop.f32.mrf.mxu0
        %v706 = vadd.f32 0.0, %v705
        %v707 = vpop.f32.mrf.mxu0
        %v708 = vadd.f32 0.0, %v707
        %709 = vmatprep.mubr.bf16.mxu0 0
        %710 = vmatmul.mubr.bf16.gmra.mxu0 %v528
        %v711 = vpop.f32.mrf.mxu0
        %v712 = vadd.f32 0.0, %v711
        %v713 = vpop.f32.mrf.mxu0
        %v714 = vadd.f32 0.0, %v713
        %v715 = vpop.f32.mrf.mxu0
        %v716 = vadd.f32 0.0, %v715
        %v717 = vpop.f32.mrf.mxu0
        %v718 = vadd.f32 0.0, %v717
        %719 = vmatprep.mubr.bf16.mxu0 0
        %720 = vmatmul.mubr.bf16.gmra.mxu0 %v529
        %v721 = vpop.f32.mrf.mxu0
        %v722 = vadd.f32 0.0, %v721
        %v723 = vpop.f32.mrf.mxu0
        %v724 = vadd.f32 0.0, %v723
        %v725 = vpop.f32.mrf.mxu0
        %v726 = vadd.f32 0.0, %v725
        %v727 = vpop.f32.mrf.mxu0
        %v728 = vadd.f32 0.0, %v727
        %729 = vmatprep.mubr.bf16.mxu0 0
        %730 = vmatmul.mubr.bf16.gmra.mxu0 %v530
        %v731 = vpop.f32.mrf.mxu0
        %v732 = vadd.f32 0.0, %v731
        %v733 = vpop.f32.mrf.mxu0
        %v734 = vadd.f32 0.0, %v733
        %v735 = vpop.f32.mrf.mxu0
        %v736 = vadd.f32 0.0, %v735
        %v737 = vpop.f32.mrf.mxu0
        %v738 = vadd.f32 0.0, %v737
        %739 = vdwg.mxu0
        %740 = vmatprep.subr.bf16.mxu0 0
        %741 = vmatpush1.bf16.msra.mxu0 %v418
        %742 = vmatprep.subr.bf16.mxu0 0
        %743 = vmatpush1.bf16.msra.mxu0 %v415
        %744 = vmatprep.subr.bf16.mxu0 0
        %745 = vmatpush1.bf16.msra.mxu0 %v412
        %746 = vmatprep.subr.bf16.mxu0 0
        %747 = vmatpush1.bf16.msra.mxu0 %v409
        %748 = vmatprep.subr.bf16.mxu0 0
        %749 = vmatpush1.bf16.msra.mxu0 %v406
        %750 = vmatprep.subr.bf16.mxu0 0
        %751 = vmatpush1.bf16.msra.mxu0 %v403
        %752 = vmatprep.subr.bf16.mxu0 0
        %753 = vmatpush1.bf16.msra.mxu0 %v400
        %754 = vmatprep.subr.bf16.mxu0 0
        %755 = vmatpush1.bf16.msra.mxu0 %v397
        %756 = vmatprep.subr.bf16.mxu0 0
        %757 = vmatpush2.bf16.msra.mxu0 0
        %758 = vmatprep.subr.bf16.mxu0 0
        %759 = vmatpush2.bf16.msra.mxu0 0
        %760 = vmatprep.subr.bf16.mxu0 0
        %761 = vmatpush2.bf16.msra.mxu0 0
        %762 = vmatprep.subr.bf16.mxu0 0
        %763 = vmatpush2.bf16.msra.mxu0 0
        %764 = vmatprep.subr.bf16.mxu0 0
        %765 = vmatpush2.bf16.msra.mxu0 0
        %766 = vmatprep.subr.bf16.mxu0 0
        %767 = vmatpush2.bf16.msra.mxu0 0
        %768 = vmatprep.subr.bf16.mxu0 0
        %769 = vmatpush2.bf16.msra.mxu0 0
        %770 = vmatprep.subr.bf16.mxu0 0
        %771 = vmatpush2.bf16.msra.mxu0 0
        %772 = vmatprep.mubr.bf16.mxu0 0
        %773 = vmatmul.mubr.bf16.gmra.mxu0 %v515
        %v774 = vpop.f32.mrf.mxu0
        %v775 = vadd.f32 0.0, %v774
        %v776 = vpop.f32.mrf.mxu0
        %v777 = vpop.f32.mrf.mxu0
        %v778 = vadd.f32 0.0, %v777
        %v779 = vpop.f32.mrf.mxu0
        %780 = vmatprep.mubr.bf16.mxu0 0
        %781 = vmatmul.mubr.bf16.gmra.mxu0 %v516
        %v782 = vpop.f32.mrf.mxu0
        %v783 = vadd.f32 0.0, %v782
        %v784 = vpop.f32.mrf.mxu0
        %v785 = vpop.f32.mrf.mxu0
        %v786 = vadd.f32 0.0, %v785
        %v787 = vpop.f32.mrf.mxu0
        %788 = vmatprep.mubr.bf16.mxu0 0
        %789 = vmatmul.mubr.bf16.gmra.mxu0 %v517
        %v790 = vpop.f32.mrf.mxu0
        %v791 = vadd.f32 0.0, %v790
        %v792 = vpop.f32.mrf.mxu0
        %v793 = vpop.f32.mrf.mxu0
        %v794 = vadd.f32 0.0, %v793
        %v795 = vpop.f32.mrf.mxu0
        %796 = vmatprep.mubr.bf16.mxu0 0
        %797 = vmatmul.mubr.bf16.gmra.mxu0 %v518
        %v798 = vpop.f32.mrf.mxu0
        %v799 = vadd.f32 0.0, %v798
        %v800 = vpop.f32.mrf.mxu0
        %v801 = vpop.f32.mrf.mxu0
        %v802 = vadd.f32 0.0, %v801
        %v803 = vpop.f32.mrf.mxu0
        %804 = vmatprep.mubr.bf16.mxu0 0
        %805 = vmatmul.mubr.bf16.gmra.mxu0 %v519
        %v806 = vpop.f32.mrf.mxu0
        %v807 = vadd.f32 0.0, %v806
        %v808 = vpop.f32.mrf.mxu0
        %v809 = vpop.f32.mrf.mxu0
        %v810 = vadd.f32 0.0, %v809
        %v811 = vpop.f32.mrf.mxu0
        %812 = vmatprep.mubr.bf16.mxu0 0
        %813 = vmatmul.mubr.bf16.gmra.mxu0 %v520
        %v814 = vpop.f32.mrf.mxu0
        %v815 = vadd.f32 0.0, %v814
        %v816 = vpop.f32.mrf.mxu0
        %v817 = vpop.f32.mrf.mxu0
        %v818 = vadd.f32 0.0, %v817
        %v819 = vpop.f32.mrf.mxu0
        %820 = vmatprep.mubr.bf16.mxu0 0
        %821 = vmatmul.mubr.bf16.gmra.mxu0 %v521
        %v822 = vpop.f32.mrf.mxu0
        %v823 = vadd.f32 0.0, %v822
        %v824 = vpop.f32.mrf.mxu0
        %v825 = vpop.f32.mrf.mxu0
        %v826 = vadd.f32 0.0, %v825
        %v827 = vpop.f32.mrf.mxu0
        %828 = vmatprep.mubr.bf16.mxu0 0
        %829 = vmatmul.mubr.bf16.gmra.mxu0 %v522
        %v830 = vpop.f32.mrf.mxu0
        %v831 = vadd.f32 0.0, %v830
        %v832 = vpop.f32.mrf.mxu0
        %v833 = vpop.f32.mrf.mxu0
        %v834 = vadd.f32 0.0, %v833
        %v835 = vpop.f32.mrf.mxu0
        %836 = vmatprep.mubr.bf16.mxu0 0
        %837 = vmatmul.mubr.bf16.gmra.mxu0 %v523
        %v838 = vpop.f32.mrf.mxu0
        %v839 = vadd.f32 0.0, %v838
        %v840 = vpop.f32.mrf.mxu0
        %v841 = vpop.f32.mrf.mxu0
        %v842 = vadd.f32 0.0, %v841
        %v843 = vpop.f32.mrf.mxu0
        %844 = vmatprep.mubr.bf16.mxu0 0
        %845 = vmatmul.mubr.bf16.gmra.mxu0 %v524
        %v846 = vpop.f32.mrf.mxu0
        %v847 = vadd.f32 0.0, %v846
        %v848 = vpop.f32.mrf.mxu0
        %v849 = vpop.f32.mrf.mxu0
        %v850 = vadd.f32 0.0, %v849
        %v851 = vpop.f32.mrf.mxu0
        %852 = vmatprep.mubr.bf16.mxu0 0
        %853 = vmatmul.mubr.bf16.gmra.mxu0 %v525
        %v854 = vpop.f32.mrf.mxu0
        %v855 = vadd.f32 0.0, %v854
        %v856 = vpop.f32.mrf.mxu0
        %v857 = vpop.f32.mrf.mxu0
        %v858 = vadd.f32 0.0, %v857
        %v859 = vpop.f32.mrf.mxu0
        %860 = vmatprep.mubr.bf16.mxu0 0
        %861 = vmatmul.mubr.bf16.gmra.mxu0 %v526
        %v862 = vpop.f32.mrf.mxu0
        %v863 = vadd.f32 0.0, %v862
        %v864 = vpop.f32.mrf.mxu0
        %v865 = vpop.f32.mrf.mxu0
        %v866 = vadd.f32 0.0, %v865
        %v867 = vpop.f32.mrf.mxu0
        %868 = vmatprep.mubr.bf16.mxu0 0
        %869 = vmatmul.mubr.bf16.gmra.mxu0 %v527
        %v870 = vpop.f32.mrf.mxu0
        %v871 = vadd.f32 0.0, %v870
        %v872 = vpop.f32.mrf.mxu0
        %v873 = vpop.f32.mrf.mxu0
        %v874 = vadd.f32 0.0, %v873
        %v875 = vpop.f32.mrf.mxu0
        %876 = vmatprep.mubr.bf16.mxu0 0
        %877 = vmatmul.mubr.bf16.gmra.mxu0 %v528
        %v878 = vpop.f32.mrf.mxu0
        %v879 = vadd.f32 0.0, %v878
        %v880 = vpop.f32.mrf.mxu0
        %v881 = vpop.f32.mrf.mxu0
        %v882 = vadd.f32 0.0, %v881
        %v883 = vpop.f32.mrf.mxu0
        %884 = vmatprep.mubr.bf16.mxu0 0
        %885 = vmatmul.mubr.bf16.gmra.mxu0 %v529
        %v886 = vpop.f32.mrf.mxu0
        %v887 = vadd.f32 0.0, %v886
        %v888 = vpop.f32.mrf.mxu0
        %v889 = vpop.f32.mrf.mxu0
        %v890 = vadd.f32 0.0, %v889
        %v891 = vpop.f32.mrf.mxu0
        %892 = vmatprep.mubr.bf16.mxu0 0
        %893 = vmatmul.mubr.bf16.gmra.mxu0 %v530
        %v894 = vpop.f32.mrf.mxu0
        %v895 = vadd.f32 0.0, %v894
        %v896 = vpop.f32.mrf.mxu0
        %v897 = vpop.f32.mrf.mxu0
        %v898 = vadd.f32 0.0, %v897
        %v899 = vpop.f32.mrf.mxu0
        %900 = vdwg.mxu0
        %v901 = vld [vmem:[%s3] sm:$0xff]
        %v902 = vld [vmem:[%s3 + $0x8] sm:$0xff]
        %v903 = vld [vmem:[%s3 + $0x10] sm:$0xff]
        %v904 = vld [vmem:[%s3 + $0x18] sm:$0xff]
        %v905 = vld [vmem:[%s3 + $0x20] sm:$0xff]
        %v906 = vld [vmem:[%s3 + $0x28] sm:$0xff]
        %v907 = vld [vmem:[%s3 + $0x30] sm:$0xff]
        %v908 = vld [vmem:[%s3 + $0x38] sm:$0xff]
        %v909 = vld [vmem:[%s3 + $0x40] sm:$0xff]
        %v910 = vld [vmem:[%s3 + $0x48] sm:$0xff]
        %v911 = vld [vmem:[%s3 + $0x50] sm:$0xff]
        %v912 = vld [vmem:[%s3 + $0x58] sm:$0xff]
        %v913 = vld [vmem:[%s3 + $0x60] sm:$0xff]
        %v914 = vld [vmem:[%s3 + $0x68] sm:$0xff]
        %v915 = vld [vmem:[%s3 + $0x70] sm:$0xff]
        %v916 = vld [vmem:[%s3 + $0x78] sm:$0xff]
        %v917 = vld [vmem:[%s3 + $0x80] sm:$0xff]
        %v918 = vld [vmem:[%s3 + $0x88] sm:$0xff]
        %v919 = vld [vmem:[%s3 + $0x90] sm:$0xff]
        %v920 = vld [vmem:[%s3 + $0x98] sm:$0xff]
        %v921 = vld [vmem:[%s3 + $0xa0] sm:$0xff]
        %v922 = vld [vmem:[%s3 + $0xa8] sm:$0xff]
        %v923 = vld [vmem:[%s3 + $0xb0] sm:$0xff]
        %v924 = vld [vmem:[%s3 + $0xb8] sm:$0xff]
        %v925 = vld [vmem:[%s3 + $0xc0] sm:$0xff]
        %v926 = vld [vmem:[%s3 + $0xc8] sm:$0xff]
        %v927 = vld [vmem:[%s3 + $0xd0] sm:$0xff]
        %v928 = vld [vmem:[%s3 + $0xd8] sm:$0xff]
        %v929 = vld [vmem:[%s3 + $0xe0] sm:$0xff]
        %v930 = vld [vmem:[%s3 + $0xe8] sm:$0xff]
        %v931 = vld [vmem:[%s3 + $0xf0] sm:$0xff]
        %v932 = vld [vmem:[%s3 + $0xf8] sm:$0xff]
        %934 = vset.pattern.permute.xlu0 0
        %935 = vperm.xlu0 %934, %v901
        %v936 = vpop.permute.xlu0 %935
        %939 = vset.pattern.permute.xlu0 0
        %940 = vperm.xlu0 %939, %v902
        %v941 = vpop.permute.xlu0 %940
        %944 = vset.pattern.permute.xlu0 0
        %945 = vperm.xlu0 %944, %v903
        %v946 = vpop.permute.xlu0 %945
        %949 = vset.pattern.permute.xlu0 0
        %950 = vperm.xlu0 %949, %v904
        %v951 = vpop.permute.xlu0 %950
        %954 = vset.pattern.permute.xlu0 0
        %955 = vperm.xlu0 %954, %v905
        %v956 = vpop.permute.xlu0 %955
        %959 = vset.pattern.permute.xlu0 0
        %960 = vperm.xlu0 %959, %v906
        %v961 = vpop.permute.xlu0 %960
        %964 = vset.pattern.permute.xlu0 0
        %965 = vperm.xlu0 %964, %v907
        %v966 = vpop.permute.xlu0 %965
        %969 = vset.pattern.permute.xlu0 0
        %970 = vperm.xlu0 %969, %v908
        %v971 = vpop.permute.xlu0 %970
        %974 = vset.pattern.permute.xlu0 0
        %975 = vperm.xlu0 %974, %v909
        %v976 = vpop.permute.xlu0 %975
        %979 = vset.pattern.permute.xlu0 0
        %980 = vperm.xlu0 %979, %v910
        %v981 = vpop.permute.xlu0 %980
        %984 = vset.pattern.permute.xlu0 0
        %985 = vperm.xlu0 %984, %v911
        %v986 = vpop.permute.xlu0 %985
        %989 = vset.pattern.permute.xlu0 0
        %990 = vperm.xlu0 %989, %v912
        %v991 = vpop.permute.xlu0 %990
        %994 = vset.pattern.permute.xlu0 0
        %995 = vperm.xlu0 %994, %v913
        %v996 = vpop.permute.xlu0 %995
        %999 = vset.pattern.permute.xlu0 0
        %1000 = vperm.xlu0 %999, %v914
        %v1001 = vpop.permute.xlu0 %1000
        %1004 = vset.pattern.permute.xlu0 0
        %1005 = vperm.xlu0 %1004, %v915
        %v1006 = vpop.permute.xlu0 %1005
        %1009 = vset.pattern.permute.xlu0 0
        %1010 = vperm.xlu0 %1009, %v916
        %v1011 = vpop.permute.xlu0 %1010
        %1014 = vset.pattern.permute.xlu0 0
        %1015 = vperm.xlu0 %1014, %v917
        %v1016 = vpop.permute.xlu0 %1015
        %1019 = vset.pattern.permute.xlu0 0
        %1020 = vperm.xlu0 %1019, %v918
        %v1021 = vpop.permute.xlu0 %1020
        %1024 = vset.pattern.permute.xlu0 0
        %1025 = vperm.xlu0 %1024, %v919
        %v1026 = vpop.permute.xlu0 %1025
        %1029 = vset.pattern.permute.xlu0 0
        %1030 = vperm.xlu0 %1029, %v920
        %v1031 = vpop.permute.xlu0 %1030
        %1034 = vset.pattern.permute.xlu0 0
        %1035 = vperm.xlu0 %1034, %v921
        %v1036 = vpop.permute.xlu0 %1035
        %1039 = vset.pattern.permute.xlu0 0
        %1040 = vperm.xlu0 %1039, %v922
        %v1041 = vpop.permute.xlu0 %1040
        %1044 = vset.pattern.permute.xlu0 0
        %1045 = vperm.xlu0 %1044, %v923
        %v1046 = vpop.permute.xlu0 %1045
        %1049 = vset.pattern.permute.xlu0 0
        %1050 = vperm.xlu0 %1049, %v924
        %v1051 = vpop.permute.xlu0 %1050
        %1054 = vset.pattern.permute.xlu0 0
        %1055 = vperm.xlu0 %1054, %v925
        %v1056 = vpop.permute.xlu0 %1055
        %1059 = vset.pattern.permute.xlu0 0
        %1060 = vperm.xlu0 %1059, %v926
        %v1061 = vpop.permute.xlu0 %1060
        %1064 = vset.pattern.permute.xlu0 0
        %1065 = vperm.xlu0 %1064, %v927
        %v1066 = vpop.permute.xlu0 %1065
        %1069 = vset.pattern.permute.xlu0 0
        %1070 = vperm.xlu0 %1069, %v928
        %v1071 = vpop.permute.xlu0 %1070
        %1074 = vset.pattern.permute.xlu0 0
        %1075 = vperm.xlu0 %1074, %v929
        %v1076 = vpop.permute.xlu0 %1075
        %1079 = vset.pattern.permute.xlu0 0
        %1080 = vperm.xlu0 %1079, %v930
        %v1081 = vpop.permute.xlu0 %1080
        %1084 = vset.pattern.permute.xlu0 0
        %1085 = vperm.xlu0 %1084, %v931
        %v1086 = vpop.permute.xlu0 %1085
        %1089 = vset.pattern.permute.xlu0 0
        %1090 = vperm.xlu0 %1089, %v932
        %v1091 = vpop.permute.xlu0 %1090
        %v1093 = vsub.f32 %v936, %v582
        %v1094 = vsub.f32 %v936, %v584
        %v1095 = vsub.f32 %v936, %v775
        %v1096 = vsub.f32 %v941, %v586
        %v1097 = vsub.f32 %v941, %v588
        %v1098 = vsub.f32 %v941, %v778
        %v1099 = vsub.f32 %v946, %v592
        %v1100 = vsub.f32 %v946, %v594
        %v1101 = vsub.f32 %v946, %v783
        %v1102 = vsub.f32 %v951, %v596
        %v1103 = vsub.f32 %v951, %v598
        %v1104 = vsub.f32 %v951, %v786
        %v1105 = vsub.f32 %v956, %v602
        %v1106 = vsub.f32 %v956, %v604
        %v1107 = vsub.f32 %v956, %v791
        %v1108 = vsub.f32 %v961, %v606
        %v1109 = vsub.f32 %v961, %v608
        %v1110 = vsub.f32 %v961, %v794
        %v1111 = vsub.f32 %v966, %v612
        %v1112 = vsub.f32 %v966, %v614
        %v1113 = vsub.f32 %v966, %v799
        %v1114 = vsub.f32 %v971, %v616
        %v1115 = vsub.f32 %v971, %v618
        %v1116 = vsub.f32 %v971, %v802
        %v1117 = vsub.f32 %v976, %v622
        %v1118 = vsub.f32 %v976, %v624
        %v1119 = vsub.f32 %v976, %v807
        %v1120 = vsub.f32 %v981, %v626
        %v1121 = vsub.f32 %v981, %v628
        %v1122 = vsub.f32 %v981, %v810
        %v1123 = vsub.f32 %v986, %v632
        %v1124 = vsub.f32 %v986, %v634
        %v1125 = vsub.f32 %v986, %v815
        %v1126 = vsub.f32 %v991, %v636
        %v1127 = vsub.f32 %v991, %v638
        %v1128 = vsub.f32 %v991, %v818
        %v1129 = vsub.f32 %v996, %v642
        %v1130 = vsub.f32 %v996, %v644
        %v1131 = vsub.f32 %v996, %v823
        %v1132 = vsub.f32 %v1001, %v646
        %v1133 = vsub.f32 %v1001, %v648
        %v1134 = vsub.f32 %v1001, %v826
        %v1135 = vsub.f32 %v1006, %v652
        %v1136 = vsub.f32 %v1006, %v654
        %v1137 = vsub.f32 %v1006, %v831
        %v1138 = vsub.f32 %v1011, %v656
        %v1139 = vsub.f32 %v1011, %v658
        %v1140 = vsub.f32 %v1011, %v834
        %v1141 = vsub.f32 %v1016, %v662
        %v1142 = vsub.f32 %v1016, %v664
        %v1143 = vsub.f32 %v1016, %v839
        %v1144 = vsub.f32 %v1021, %v666
        %v1145 = vsub.f32 %v1021, %v668
        %v1146 = vsub.f32 %v1021, %v842
        %v1147 = vsub.f32 %v1026, %v672
        %v1148 = vsub.f32 %v1026, %v674
        %v1149 = vsub.f32 %v1026, %v847
        %v1150 = vsub.f32 %v1031, %v676
        %v1151 = vsub.f32 %v1031, %v678
        %v1152 = vsub.f32 %v1031, %v850
        %v1153 = vsub.f32 %v1036, %v682
        %v1154 = vsub.f32 %v1036, %v684
        %v1155 = vsub.f32 %v1036, %v855
        %v1156 = vsub.f32 %v1041, %v686
        %v1157 = vsub.f32 %v1041, %v688
        %v1158 = vsub.f32 %v1041, %v858
        %v1159 = vsub.f32 %v1046, %v692
        %v1160 = vsub.f32 %v1046, %v694
        %v1161 = vsub.f32 %v1046, %v863
        %v1162 = vsub.f32 %v1051, %v696
        %v1163 = vsub.f32 %v1051, %v698
        %v1164 = vsub.f32 %v1051, %v866
        %v1165 = vsub.f32 %v1056, %v702
        %v1166 = vsub.f32 %v1056, %v704
        %v1167 = vsub.f32 %v1056, %v871
        %v1168 = vsub.f32 %v1061, %v706
        %v1169 = vsub.f32 %v1061, %v708
        %v1170 = vsub.f32 %v1061, %v874
        %v1171 = vsub.f32 %v1066, %v712
        %v1172 = vsub.f32 %v1066, %v714
        %v1173 = vsub.f32 %v1066, %v879
        %v1174 = vsub.f32 %v1071, %v716
        %v1175 = vsub.f32 %v1071, %v718
        %v1176 = vsub.f32 %v1071, %v882
        %v1177 = vsub.f32 %v1076, %v722
        %v1178 = vsub.f32 %v1076, %v724
        %v1179 = vsub.f32 %v1076, %v887
        %v1180 = vsub.f32 %v1081, %v726
        %v1181 = vsub.f32 %v1081, %v728
        %v1182 = vsub.f32 %v1081, %v890
        %v1183 = vsub.f32 %v1086, %v732
        %v1184 = vsub.f32 %v1086, %v734
        %v1185 = vsub.f32 %v1086, %v895
        %v1186 = vsub.f32 %v1091, %v736
        %v1187 = vsub.f32 %v1091, %v738
        %v1188 = vsub.f32 %v1091, %v898
        %v1189 = vlaneseq
        %v1190 = vshrl.u32 %v1189, 7
        %v1191 = vadd.s32 %v1190, 8
        %v1192 = vadd.s32 %v1190, 16
        %v1193 = vadd.s32 %v1190, 24
        %v1194 = vadd.s32 %v1190, 32
        %v1195 = vadd.s32 %v1190, 40
        %v1196 = vadd.s32 %v1190, 48
        %v1197 = vadd.s32 %v1190, 56
        %v1198 = vadd.s32 %v1190, 64
        %v1199 = vadd.s32 %v1190, 72
        %v1200 = vadd.s32 %v1190, 80
        %v1201 = vadd.s32 %v1190, 88
        %v1202 = vadd.s32 %v1190, 96
        %v1203 = vadd.s32 %v1190, 104
        %v1204 = vadd.s32 %v1190, 112
        %v1205 = vadd.s32 %v1190, 120
        %v1206 = vadd.s32 %v1190, 128
        %v1207 = vadd.s32 %v1190, 136
        %v1208 = vadd.s32 %v1190, 144
        %v1209 = vadd.s32 %v1190, 152
        %v1210 = vadd.s32 %v1190, 160
        %v1211 = vadd.s32 %v1190, 168
        %v1212 = vadd.s32 %v1190, 176
        %v1213 = vadd.s32 %v1190, 184
        %v1214 = vadd.s32 %v1190, 192
        %v1215 = vadd.s32 %v1190, 200
        %v1216 = vadd.s32 %v1190, 208
        %v1217 = vadd.s32 %v1190, 216
        %v1218 = vadd.s32 %v1190, 224
        %v1219 = vadd.s32 %v1190, 232
        %v1220 = vadd.s32 %v1190, 240
        %v1221 = vadd.s32 %v1190, 248
        %v1222 = vmin.f32 %v1093, %v1099
        %v1223 = vmin.f32 %v1096, %v1102
        %v1224 = vmin.f32 %v1222, %v1105
        %v1225 = vmin.f32 %v1223, %v1108
        %v1226 = vmin.f32 %v1224, %v1111
        %v1227 = vmin.f32 %v1225, %v1114
        %v1228 = vmin.f32 %v1226, %v1117
        %v1229 = vmin.f32 %v1227, %v1120
        %v1230 = vmin.f32 %v1228, %v1123
        %v1231 = vmin.f32 %v1229, %v1126
        %v1232 = vmin.f32 %v1230, %v1129
        %v1233 = vmin.f32 %v1231, %v1132
        %v1234 = vmin.f32 %v1232, %v1135
        %v1235 = vmin.f32 %v1233, %v1138
        %v1236 = vmin.f32 %v1234, %v1141
        %v1237 = vmin.f32 %v1235, %v1144
        %v1238 = vmin.f32 %v1236, %v1147
        %v1239 = vmin.f32 %v1237, %v1150
        %v1240 = vmin.f32 %v1238, %v1153
        %v1241 = vmin.f32 %v1239, %v1156
        %v1242 = vmin.f32 %v1240, %v1159
        %v1243 = vmin.f32 %v1241, %v1162
        %v1244 = vmin.f32 %v1242, %v1165
        %v1245 = vmin.f32 %v1243, %v1168
        %v1246 = vmin.f32 %v1244, %v1171
        %v1247 = vmin.f32 %v1245, %v1174
        %v1248 = vmin.f32 %v1246, %v1177
        %v1249 = vmin.f32 %v1247, %v1180
        %v1250 = vmin.f32 %v1248, %v1183
        %v1251 = vmin.f32 %v1249, %v1186
        %v1252 = vmin.f32 %v1250, %v1251
        %v1253 = vrot.slane %v1252, 4
        %v1254 = vmin.f32 %v1252, %v1253
        %v1255 = vrot.slane %v1254, 2
        %v1256 = vmin.f32 %v1254, %v1255
        %v1257 = vrot.slane %v1256, 1
        %v1258 = vmin.f32 %v1256, %v1257
        %v1259 = vmin.f32 %v1094, %v1100
        %v1260 = vmin.f32 %v1097, %v1103
        %v1261 = vmin.f32 %v1259, %v1106
        %v1262 = vmin.f32 %v1260, %v1109
        %v1263 = vmin.f32 %v1261, %v1112
        %v1264 = vmin.f32 %v1262, %v1115
        %v1265 = vmin.f32 %v1263, %v1118
        %v1266 = vmin.f32 %v1264, %v1121
        %v1267 = vmin.f32 %v1265, %v1124
        %v1268 = vmin.f32 %v1266, %v1127
        %v1269 = vmin.f32 %v1267, %v1130
        %v1270 = vmin.f32 %v1268, %v1133
        %v1271 = vmin.f32 %v1269, %v1136
        %v1272 = vmin.f32 %v1270, %v1139
        %v1273 = vmin.f32 %v1271, %v1142
        %v1274 = vmin.f32 %v1272, %v1145
        %v1275 = vmin.f32 %v1273, %v1148
        %v1276 = vmin.f32 %v1274, %v1151
        %v1277 = vmin.f32 %v1275, %v1154
        %v1278 = vmin.f32 %v1276, %v1157
        %v1279 = vmin.f32 %v1277, %v1160
        %v1280 = vmin.f32 %v1278, %v1163
        %v1281 = vmin.f32 %v1279, %v1166
        %v1282 = vmin.f32 %v1280, %v1169
        %v1283 = vmin.f32 %v1281, %v1172
        %v1284 = vmin.f32 %v1282, %v1175
        %v1285 = vmin.f32 %v1283, %v1178
        %v1286 = vmin.f32 %v1284, %v1181
        %v1287 = vmin.f32 %v1285, %v1184
        %v1288 = vmin.f32 %v1286, %v1187
        %v1289 = vmin.f32 %v1287, %v1288
        %v1290 = vrot.slane %v1289, 4
        %v1291 = vmin.f32 %v1289, %v1290
        %v1292 = vrot.slane %v1291, 2
        %v1293 = vmin.f32 %v1291, %v1292
        %v1294 = vrot.slane %v1293, 1
        %v1295 = vmin.f32 %v1293, %v1294
        %v1296 = vmin.f32 %v1095, %v1101
        %v1297 = vmin.f32 %v1098, %v1104
        %v1298 = vmin.f32 %v1296, %v1107
        %v1299 = vmin.f32 %v1297, %v1110
        %v1300 = vmin.f32 %v1298, %v1113
        %v1301 = vmin.f32 %v1299, %v1116
        %v1302 = vmin.f32 %v1300, %v1119
        %v1303 = vmin.f32 %v1301, %v1122
        %v1304 = vmin.f32 %v1302, %v1125
        %v1305 = vmin.f32 %v1303, %v1128
        %v1306 = vmin.f32 %v1304, %v1131
        %v1307 = vmin.f32 %v1305, %v1134
        %v1308 = vmin.f32 %v1306, %v1137
        %v1309 = vmin.f32 %v1307, %v1140
        %v1310 = vmin.f32 %v1308, %v1143
        %v1311 = vmin.f32 %v1309, %v1146
        %v1312 = vmin.f32 %v1310, %v1149
        %v1313 = vmin.f32 %v1311, %v1152
        %v1314 = vmin.f32 %v1312, %v1155
        %v1315 = vmin.f32 %v1313, %v1158
        %v1316 = vmin.f32 %v1314, %v1161
        %v1317 = vmin.f32 %v1315, %v1164
        %v1318 = vmin.f32 %v1316, %v1167
        %v1319 = vmin.f32 %v1317, %v1170
        %v1320 = vmin.f32 %v1318, %v1173
        %v1321 = vmin.f32 %v1319, %v1176
        %v1322 = vmin.f32 %v1320, %v1179
        %v1323 = vmin.f32 %v1321, %v1182
        %v1324 = vmin.f32 %v1322, %v1185
        %v1325 = vmin.f32 %v1323, %v1188
        %v1326 = vmin.f32 %v1324, %v1325
        %v1327 = vrot.slane %v1326, 4
        %v1328 = vmin.f32 %v1326, %v1327
        %v1329 = vrot.slane %v1328, 2
        %v1330 = vmin.f32 %v1328, %v1329
        %v1331 = vrot.slane %v1330, 1
        %v1332 = vmin.f32 %v1330, %v1331
        %vm1333 = vcmp.eq.f32.partialorder %v1093, %v1258
        %vm1334 = vcmp.eq.f32.partialorder %v1094, %v1295
        %vm1335 = vcmp.eq.f32.partialorder %v1095, %v1332
        %vm1336 = vcmp.eq.f32.partialorder %v1096, %v1258
        %vm1337 = vcmp.eq.f32.partialorder %v1097, %v1295
        %vm1338 = vcmp.eq.f32.partialorder %v1098, %v1332
        %vm1339 = vcmp.eq.f32.partialorder %v1099, %v1258
        %vm1340 = vcmp.eq.f32.partialorder %v1100, %v1295
        %vm1341 = vcmp.eq.f32.partialorder %v1101, %v1332
        %vm1342 = vcmp.eq.f32.partialorder %v1102, %v1258
        %vm1343 = vcmp.eq.f32.partialorder %v1103, %v1295
        %vm1344 = vcmp.eq.f32.partialorder %v1104, %v1332
        %vm1345 = vcmp.eq.f32.partialorder %v1105, %v1258
        %vm1346 = vcmp.eq.f32.partialorder %v1106, %v1295
        %vm1347 = vcmp.eq.f32.partialorder %v1107, %v1332
        %vm1348 = vcmp.eq.f32.partialorder %v1108, %v1258
        %vm1349 = vcmp.eq.f32.partialorder %v1109, %v1295
        %vm1350 = vcmp.eq.f32.partialorder %v1110, %v1332
        %vm1351 = vcmp.eq.f32.partialorder %v1111, %v1258
        %vm1352 = vcmp.eq.f32.partialorder %v1112, %v1295
        %vm1353 = vcmp.eq.f32.partialorder %v1113, %v1332
        %vm1354 = vcmp.eq.f32.partialorder %v1114, %v1258
        %vm1355 = vcmp.eq.f32.partialorder %v1115, %v1295
        %vm1356 = vcmp.eq.f32.partialorder %v1116, %v1332
        %vm1357 = vcmp.eq.f32.partialorder %v1117, %v1258
        %vm1358 = vcmp.eq.f32.partialorder %v1118, %v1295
        %vm1359 = vcmp.eq.f32.partialorder %v1119, %v1332
        %vm1360 = vcmp.eq.f32.partialorder %v1120, %v1258
        %vm1361 = vcmp.eq.f32.partialorder %v1121, %v1295
        %vm1362 = vcmp.eq.f32.partialorder %v1122, %v1332
        %vm1363 = vcmp.eq.f32.partialorder %v1123, %v1258
        %vm1364 = vcmp.eq.f32.partialorder %v1124, %v1295
        %vm1365 = vcmp.eq.f32.partialorder %v1125, %v1332
        %vm1366 = vcmp.eq.f32.partialorder %v1126, %v1258
        %vm1367 = vcmp.eq.f32.partialorder %v1127, %v1295
        %vm1368 = vcmp.eq.f32.partialorder %v1128, %v1332
        %vm1369 = vcmp.eq.f32.partialorder %v1129, %v1258
        %vm1370 = vcmp.eq.f32.partialorder %v1130, %v1295
        %vm1371 = vcmp.eq.f32.partialorder %v1131, %v1332
        %vm1372 = vcmp.eq.f32.partialorder %v1132, %v1258
        %vm1373 = vcmp.eq.f32.partialorder %v1133, %v1295
        %vm1374 = vcmp.eq.f32.partialorder %v1134, %v1332
        %vm1375 = vcmp.eq.f32.partialorder %v1135, %v1258
        %vm1376 = vcmp.eq.f32.partialorder %v1136, %v1295
        %vm1377 = vcmp.eq.f32.partialorder %v1137, %v1332
        %vm1378 = vcmp.eq.f32.partialorder %v1138, %v1258
        %vm1379 = vcmp.eq.f32.partialorder %v1139, %v1295
        %vm1380 = vcmp.eq.f32.partialorder %v1140, %v1332
        %vm1381 = vcmp.eq.f32.partialorder %v1141, %v1258
        %vm1382 = vcmp.eq.f32.partialorder %v1142, %v1295
        %vm1383 = vcmp.eq.f32.partialorder %v1143, %v1332
        %vm1384 = vcmp.eq.f32.partialorder %v1144, %v1258
        %vm1385 = vcmp.eq.f32.partialorder %v1145, %v1295
        %vm1386 = vcmp.eq.f32.partialorder %v1146, %v1332
        %vm1387 = vcmp.eq.f32.partialorder %v1147, %v1258
        %vm1388 = vcmp.eq.f32.partialorder %v1148, %v1295
        %vm1389 = vcmp.eq.f32.partialorder %v1149, %v1332
        %vm1390 = vcmp.eq.f32.partialorder %v1150, %v1258
        %vm1391 = vcmp.eq.f32.partialorder %v1151, %v1295
        %vm1392 = vcmp.eq.f32.partialorder %v1152, %v1332
        %vm1393 = vcmp.eq.f32.partialorder %v1153, %v1258
        %vm1394 = vcmp.eq.f32.partialorder %v1154, %v1295
        %vm1395 = vcmp.eq.f32.partialorder %v1155, %v1332
        %vm1396 = vcmp.eq.f32.partialorder %v1156, %v1258
        %vm1397 = vcmp.eq.f32.partialorder %v1157, %v1295
        %vm1398 = vcmp.eq.f32.partialorder %v1158, %v1332
        %vm1399 = vcmp.eq.f32.partialorder %v1159, %v1258
        %vm1400 = vcmp.eq.f32.partialorder %v1160, %v1295
        %vm1401 = vcmp.eq.f32.partialorder %v1161, %v1332
        %vm1402 = vcmp.eq.f32.partialorder %v1162, %v1258
        %vm1403 = vcmp.eq.f32.partialorder %v1163, %v1295
        %vm1404 = vcmp.eq.f32.partialorder %v1164, %v1332
        %vm1405 = vcmp.eq.f32.partialorder %v1165, %v1258
        %vm1406 = vcmp.eq.f32.partialorder %v1166, %v1295
        %vm1407 = vcmp.eq.f32.partialorder %v1167, %v1332
        %vm1408 = vcmp.eq.f32.partialorder %v1168, %v1258
        %vm1409 = vcmp.eq.f32.partialorder %v1169, %v1295
        %vm1410 = vcmp.eq.f32.partialorder %v1170, %v1332
        %vm1411 = vcmp.eq.f32.partialorder %v1171, %v1258
        %vm1412 = vcmp.eq.f32.partialorder %v1172, %v1295
        %vm1413 = vcmp.eq.f32.partialorder %v1173, %v1332
        %vm1414 = vcmp.eq.f32.partialorder %v1174, %v1258
        %vm1415 = vcmp.eq.f32.partialorder %v1175, %v1295
        %vm1416 = vcmp.eq.f32.partialorder %v1176, %v1332
        %vm1417 = vcmp.eq.f32.partialorder %v1177, %v1258
        %vm1418 = vcmp.eq.f32.partialorder %v1178, %v1295
        %vm1419 = vcmp.eq.f32.partialorder %v1179, %v1332
        %vm1420 = vcmp.eq.f32.partialorder %v1180, %v1258
        %vm1421 = vcmp.eq.f32.partialorder %v1181, %v1295
        %vm1422 = vcmp.eq.f32.partialorder %v1182, %v1332
        %vm1423 = vcmp.eq.f32.partialorder %v1183, %v1258
        %vm1424 = vcmp.eq.f32.partialorder %v1184, %v1295
        %vm1425 = vcmp.eq.f32.partialorder %v1185, %v1332
        %vm1426 = vcmp.eq.f32.partialorder %v1186, %v1258
        %vm1427 = vcmp.eq.f32.partialorder %v1187, %v1295
        %vm1428 = vcmp.eq.f32.partialorder %v1188, %v1332
        %v1429 = vsel %vm1333, %v1190, 256
        %v1430 = vsel %vm1334, %v1190, 256
        %v1431 = vsel %vm1335, %v1190, 256
        %v1432 = vsel %vm1336, %v1191, 256
        %v1433 = vsel %vm1337, %v1191, 256
        %v1434 = vsel %vm1338, %v1191, 256
        %v1435 = vsel %vm1339, %v1192, 256
        %v1436 = vsel %vm1340, %v1192, 256
        %v1437 = vsel %vm1341, %v1192, 256
        %v1438 = vsel %vm1342, %v1193, 256
        %v1439 = vsel %vm1343, %v1193, 256
        %v1440 = vsel %vm1344, %v1193, 256
        %v1441 = vsel %vm1345, %v1194, 256
        %v1442 = vsel %vm1346, %v1194, 256
        %v1443 = vsel %vm1347, %v1194, 256
        %v1444 = vsel %vm1348, %v1195, 256
        %v1445 = vsel %vm1349, %v1195, 256
        %v1446 = vsel %vm1350, %v1195, 256
        %v1447 = vsel %vm1351, %v1196, 256
        %v1448 = vsel %vm1352, %v1196, 256
        %v1449 = vsel %vm1353, %v1196, 256
        %v1450 = vsel %vm1354, %v1197, 256
        %v1451 = vsel %vm1355, %v1197, 256
        %v1452 = vsel %vm1356, %v1197, 256
        %v1453 = vsel %vm1357, %v1198, 256
        %v1454 = vsel %vm1358, %v1198, 256
        %v1455 = vsel %vm1359, %v1198, 256
        %v1456 = vsel %vm1360, %v1199, 256
        %v1457 = vsel %vm1361, %v1199, 256
        %v1458 = vsel %vm1362, %v1199, 256
        %v1459 = vsel %vm1363, %v1200, 256
        %v1460 = vsel %vm1364, %v1200, 256
        %v1461 = vsel %vm1365, %v1200, 256
        %v1462 = vsel %vm1366, %v1201, 256
        %v1463 = vsel %vm1367, %v1201, 256
        %v1464 = vsel %vm1368, %v1201, 256
        %v1465 = vsel %vm1369, %v1202, 256
        %v1466 = vsel %vm1370, %v1202, 256
        %v1467 = vsel %vm1371, %v1202, 256
        %v1468 = vsel %vm1372, %v1203, 256
        %v1469 = vsel %vm1373, %v1203, 256
        %v1470 = vsel %vm1374, %v1203, 256
        %v1471 = vsel %vm1375, %v1204, 256
        %v1472 = vsel %vm1376, %v1204, 256
        %v1473 = vsel %vm1377, %v1204, 256
        %v1474 = vsel %vm1378, %v1205, 256
        %v1475 = vsel %vm1379, %v1205, 256
        %v1476 = vsel %vm1380, %v1205, 256
        %v1477 = vsel %vm1381, %v1206, 256
        %v1478 = vsel %vm1382, %v1206, 256
        %v1479 = vsel %vm1383, %v1206, 256
        %v1480 = vsel %vm1384, %v1207, 256
        %v1481 = vsel %vm1385, %v1207, 256
        %v1482 = vsel %vm1386, %v1207, 256
        %v1483 = vsel %vm1387, %v1208, 256
        %v1484 = vsel %vm1388, %v1208, 256
        %v1485 = vsel %vm1389, %v1208, 256
        %v1486 = vsel %vm1390, %v1209, 256
        %v1487 = vsel %vm1391, %v1209, 256
        %v1488 = vsel %vm1392, %v1209, 256
        %v1489 = vsel %vm1393, %v1210, 256
        %v1490 = vsel %vm1394, %v1210, 256
        %v1491 = vsel %vm1395, %v1210, 256
        %v1492 = vsel %vm1396, %v1211, 256
        %v1493 = vsel %vm1397, %v1211, 256
        %v1494 = vsel %vm1398, %v1211, 256
        %v1495 = vsel %vm1399, %v1212, 256
        %v1496 = vsel %vm1400, %v1212, 256
        %v1497 = vsel %vm1401, %v1212, 256
        %v1498 = vsel %vm1402, %v1213, 256
        %v1499 = vsel %vm1403, %v1213, 256
        %v1500 = vsel %vm1404, %v1213, 256
        %v1501 = vsel %vm1405, %v1214, 256
        %v1502 = vsel %vm1406, %v1214, 256
        %v1503 = vsel %vm1407, %v1214, 256
        %v1504 = vsel %vm1408, %v1215, 256
        %v1505 = vsel %vm1409, %v1215, 256
        %v1506 = vsel %vm1410, %v1215, 256
        %v1507 = vsel %vm1411, %v1216, 256
        %v1508 = vsel %vm1412, %v1216, 256
        %v1509 = vsel %vm1413, %v1216, 256
        %v1510 = vsel %vm1414, %v1217, 256
        %v1511 = vsel %vm1415, %v1217, 256
        %v1512 = vsel %vm1416, %v1217, 256
        %v1513 = vsel %vm1417, %v1218, 256
        %v1514 = vsel %vm1418, %v1218, 256
        %v1515 = vsel %vm1419, %v1218, 256
        %v1516 = vsel %vm1420, %v1219, 256
        %v1517 = vsel %vm1421, %v1219, 256
        %v1518 = vsel %vm1422, %v1219, 256
        %v1519 = vsel %vm1423, %v1220, 256
        %v1520 = vsel %vm1424, %v1220, 256
        %v1521 = vsel %vm1425, %v1220, 256
        %v1522 = vsel %vm1426, %v1221, 256
        %v1523 = vsel %vm1427, %v1221, 256
        %v1524 = vsel %vm1428, %v1221, 256
        %vm1525 = vcmp.lt.s32.totalorder %v1429, %v1435
        %v1526 = vsel %vm1525, %v1429, %v1435
        %vm1527 = vcmp.lt.s32.totalorder %v1432, %v1438
        %v1528 = vsel %vm1527, %v1432, %v1438
        %vm1529 = vcmp.lt.s32.totalorder %v1526, %v1441
        %v1530 = vsel %vm1529, %v1526, %v1441
        %vm1531 = vcmp.lt.s32.totalorder %v1528, %v1444
        %v1532 = vsel %vm1531, %v1528, %v1444
        %vm1533 = vcmp.lt.s32.totalorder %v1530, %v1447
        %v1534 = vsel %vm1533, %v1530, %v1447
        %vm1535 = vcmp.lt.s32.totalorder %v1532, %v1450
        %v1536 = vsel %vm1535, %v1532, %v1450
        %vm1537 = vcmp.lt.s32.totalorder %v1534, %v1453
        %v1538 = vsel %vm1537, %v1534, %v1453
        %vm1539 = vcmp.lt.s32.totalorder %v1536, %v1456
        %v1540 = vsel %vm1539, %v1536, %v1456
        %vm1541 = vcmp.lt.s32.totalorder %v1538, %v1459
        %v1542 = vsel %vm1541, %v1538, %v1459
        %vm1543 = vcmp.lt.s32.totalorder %v1540, %v1462
        %v1544 = vsel %vm1543, %v1540, %v1462
        %vm1545 = vcmp.lt.s32.totalorder %v1542, %v1465
        %v1546 = vsel %vm1545, %v1542, %v1465
        %vm1547 = vcmp.lt.s32.totalorder %v1544, %v1468
        %v1548 = vsel %vm1547, %v1544, %v1468
        %vm1549 = vcmp.lt.s32.totalorder %v1546, %v1471
        %v1550 = vsel %vm1549, %v1546, %v1471
        %vm1551 = vcmp.lt.s32.totalorder %v1548, %v1474
        %v1552 = vsel %vm1551, %v1548, %v1474
        %vm1553 = vcmp.lt.s32.totalorder %v1550, %v1477
        %v1554 = vsel %vm1553, %v1550, %v1477
        %vm1555 = vcmp.lt.s32.totalorder %v1552, %v1480
        %v1556 = vsel %vm1555, %v1552, %v1480
        %vm1557 = vcmp.lt.s32.totalorder %v1554, %v1483
        %v1558 = vsel %vm1557, %v1554, %v1483
        %vm1559 = vcmp.lt.s32.totalorder %v1556, %v1486
        %v1560 = vsel %vm1559, %v1556, %v1486
        %vm1561 = vcmp.lt.s32.totalorder %v1558, %v1489
        %v1562 = vsel %vm1561, %v1558, %v1489
        %vm1563 = vcmp.lt.s32.totalorder %v1560, %v1492
        %v1564 = vsel %vm1563, %v1560, %v1492
        %vm1565 = vcmp.lt.s32.totalorder %v1562, %v1495
        %v1566 = vsel %vm1565, %v1562, %v1495
        %vm1567 = vcmp.lt.s32.totalorder %v1564, %v1498
        %v1568 = vsel %vm1567, %v1564, %v1498
        %vm1569 = vcmp.lt.s32.totalorder %v1566, %v1501
        %v1570 = vsel %vm1569, %v1566, %v1501
        %vm1571 = vcmp.lt.s32.totalorder %v1568, %v1504
        %v1572 = vsel %vm1571, %v1568, %v1504
        %vm1573 = vcmp.lt.s32.totalorder %v1570, %v1507
        %v1574 = vsel %vm1573, %v1570, %v1507
        %vm1575 = vcmp.lt.s32.totalorder %v1572, %v1510
        %v1576 = vsel %vm1575, %v1572, %v1510
        %vm1577 = vcmp.lt.s32.totalorder %v1574, %v1513
        %v1578 = vsel %vm1577, %v1574, %v1513
        %vm1579 = vcmp.lt.s32.totalorder %v1576, %v1516
        %v1580 = vsel %vm1579, %v1576, %v1516
        %vm1581 = vcmp.lt.s32.totalorder %v1578, %v1519
        %v1582 = vsel %vm1581, %v1578, %v1519
        %vm1583 = vcmp.lt.s32.totalorder %v1580, %v1522
        %v1584 = vsel %vm1583, %v1580, %v1522
        %vm1585 = vcmp.lt.s32.totalorder %v1582, %v1584
        %v1586 = vsel %vm1585, %v1582, %v1584
        %v1587 = vrot.slane %v1586, 4
        %vm1588 = vcmp.lt.s32.totalorder %v1586, %v1587
        %v1589 = vsel %vm1588, %v1586, %v1587
        %v1590 = vrot.slane %v1589, 2
        %vm1591 = vcmp.lt.s32.totalorder %v1589, %v1590
        %v1592 = vsel %vm1591, %v1589, %v1590
        %v1593 = vrot.slane %v1592, 1
        %vm1594 = vcmp.lt.s32.totalorder %v1592, %v1593
        %v1595 = vsel %vm1594, %v1592, %v1593
        %vm1596 = vcmp.lt.s32.totalorder %v1430, %v1436
        %v1597 = vsel %vm1596, %v1430, %v1436
        %vm1598 = vcmp.lt.s32.totalorder %v1433, %v1439
        %v1599 = vsel %vm1598, %v1433, %v1439
        %vm1600 = vcmp.lt.s32.totalorder %v1597, %v1442
        %v1601 = vsel %vm1600, %v1597, %v1442
        %vm1602 = vcmp.lt.s32.totalorder %v1599, %v1445
        %v1603 = vsel %vm1602, %v1599, %v1445
        %vm1604 = vcmp.lt.s32.totalorder %v1601, %v1448
        %v1605 = vsel %vm1604, %v1601, %v1448
        %vm1606 = vcmp.lt.s32.totalorder %v1603, %v1451
        %v1607 = vsel %vm1606, %v1603, %v1451
        %vm1608 = vcmp.lt.s32.totalorder %v1605, %v1454
        %v1609 = vsel %vm1608, %v1605, %v1454
        %vm1610 = vcmp.lt.s32.totalorder %v1607, %v1457
        %v1611 = vsel %vm1610, %v1607, %v1457
        %vm1612 = vcmp.lt.s32.totalorder %v1609, %v1460
        %v1613 = vsel %vm1612, %v1609, %v1460
        %vm1614 = vcmp.lt.s32.totalorder %v1611, %v1463
        %v1615 = vsel %vm1614, %v1611, %v1463
        %vm1616 = vcmp.lt.s32.totalorder %v1613, %v1466
        %v1617 = vsel %vm1616, %v1613, %v1466
        %vm1618 = vcmp.lt.s32.totalorder %v1615, %v1469
        %v1619 = vsel %vm1618, %v1615, %v1469
        %vm1620 = vcmp.lt.s32.totalorder %v1617, %v1472
        %v1621 = vsel %vm1620, %v1617, %v1472
        %vm1622 = vcmp.lt.s32.totalorder %v1619, %v1475
        %v1623 = vsel %vm1622, %v1619, %v1475
        %vm1624 = vcmp.lt.s32.totalorder %v1621, %v1478
        %v1625 = vsel %vm1624, %v1621, %v1478
        %vm1626 = vcmp.lt.s32.totalorder %v1623, %v1481
        %v1627 = vsel %vm1626, %v1623, %v1481
        %vm1628 = vcmp.lt.s32.totalorder %v1625, %v1484
        %v1629 = vsel %vm1628, %v1625, %v1484
        %vm1630 = vcmp.lt.s32.totalorder %v1627, %v1487
        %v1631 = vsel %vm1630, %v1627, %v1487
        %vm1632 = vcmp.lt.s32.totalorder %v1629, %v1490
        %v1633 = vsel %vm1632, %v1629, %v1490
        %vm1634 = vcmp.lt.s32.totalorder %v1631, %v1493
        %v1635 = vsel %vm1634, %v1631, %v1493
        %vm1636 = vcmp.lt.s32.totalorder %v1633, %v1496
        %v1637 = vsel %vm1636, %v1633, %v1496
        %vm1638 = vcmp.lt.s32.totalorder %v1635, %v1499
        %v1639 = vsel %vm1638, %v1635, %v1499
        %vm1640 = vcmp.lt.s32.totalorder %v1637, %v1502
        %v1641 = vsel %vm1640, %v1637, %v1502
        %vm1642 = vcmp.lt.s32.totalorder %v1639, %v1505
        %v1643 = vsel %vm1642, %v1639, %v1505
        %vm1644 = vcmp.lt.s32.totalorder %v1641, %v1508
        %v1645 = vsel %vm1644, %v1641, %v1508
        %vm1646 = vcmp.lt.s32.totalorder %v1643, %v1511
        %v1647 = vsel %vm1646, %v1643, %v1511
        %vm1648 = vcmp.lt.s32.totalorder %v1645, %v1514
        %v1649 = vsel %vm1648, %v1645, %v1514
        %vm1650 = vcmp.lt.s32.totalorder %v1647, %v1517
        %v1651 = vsel %vm1650, %v1647, %v1517
        %vm1652 = vcmp.lt.s32.totalorder %v1649, %v1520
        %v1653 = vsel %vm1652, %v1649, %v1520
        %vm1654 = vcmp.lt.s32.totalorder %v1651, %v1523
        %v1655 = vsel %vm1654, %v1651, %v1523
        %vm1656 = vcmp.lt.s32.totalorder %v1653, %v1655
        %v1657 = vsel %vm1656, %v1653, %v1655
        %v1658 = vrot.slane %v1657, 4
        %vm1659 = vcmp.lt.s32.totalorder %v1657, %v1658
        %v1660 = vsel %vm1659, %v1657, %v1658
        %v1661 = vrot.slane %v1660, 2
        %vm1662 = vcmp.lt.s32.totalorder %v1660, %v1661
        %v1663 = vsel %vm1662, %v1660, %v1661
        %v1664 = vrot.slane %v1663, 1
        %vm1665 = vcmp.lt.s32.totalorder %v1663, %v1664
        %v1666 = vsel %vm1665, %v1663, %v1664
        %vm1667 = vcmp.lt.s32.totalorder %v1431, %v1437
        %v1668 = vsel %vm1667, %v1431, %v1437
        %vm1669 = vcmp.lt.s32.totalorder %v1434, %v1440
        %v1670 = vsel %vm1669, %v1434, %v1440
        %vm1671 = vcmp.lt.s32.totalorder %v1668, %v1443
        %v1672 = vsel %vm1671, %v1668, %v1443
        %vm1673 = vcmp.lt.s32.totalorder %v1670, %v1446
        %v1674 = vsel %vm1673, %v1670, %v1446
        %vm1675 = vcmp.lt.s32.totalorder %v1672, %v1449
        %v1676 = vsel %vm1675, %v1672, %v1449
        %vm1677 = vcmp.lt.s32.totalorder %v1674, %v1452
        %v1678 = vsel %vm1677, %v1674, %v1452
        %vm1679 = vcmp.lt.s32.totalorder %v1676, %v1455
        %v1680 = vsel %vm1679, %v1676, %v1455
        %vm1681 = vcmp.lt.s32.totalorder %v1678, %v1458
        %v1682 = vsel %vm1681, %v1678, %v1458
        %vm1683 = vcmp.lt.s32.totalorder %v1680, %v1461
        %v1684 = vsel %vm1683, %v1680, %v1461
        %vm1685 = vcmp.lt.s32.totalorder %v1682, %v1464
        %v1686 = vsel %vm1685, %v1682, %v1464
        %vm1687 = vcmp.lt.s32.totalorder %v1684, %v1467
        %v1688 = vsel %vm1687, %v1684, %v1467
        %vm1689 = vcmp.lt.s32.totalorder %v1686, %v1470
        %v1690 = vsel %vm1689, %v1686, %v1470
        %vm1691 = vcmp.lt.s32.totalorder %v1688, %v1473
        %v1692 = vsel %vm1691, %v1688, %v1473
        %vm1693 = vcmp.lt.s32.totalorder %v1690, %v1476
        %v1694 = vsel %vm1693, %v1690, %v1476
        %vm1695 = vcmp.lt.s32.totalorder %v1692, %v1479
        %v1696 = vsel %vm1695, %v1692, %v1479
        %vm1697 = vcmp.lt.s32.totalorder %v1694, %v1482
        %v1698 = vsel %vm1697, %v1694, %v1482
        %vm1699 = vcmp.lt.s32.totalorder %v1696, %v1485
        %v1700 = vsel %vm1699, %v1696, %v1485
        %vm1701 = vcmp.lt.s32.totalorder %v1698, %v1488
        %v1702 = vsel %vm1701, %v1698, %v1488
        %vm1703 = vcmp.lt.s32.totalorder %v1700, %v1491
        %v1704 = vsel %vm1703, %v1700, %v1491
        %vm1705 = vcmp.lt.s32.totalorder %v1702, %v1494
        %v1706 = vsel %vm1705, %v1702, %v1494
        %vm1707 = vcmp.lt.s32.totalorder %v1704, %v1497
        %v1708 = vsel %vm1707, %v1704, %v1497
        %vm1709 = vcmp.lt.s32.totalorder %v1706, %v1500
        %v1710 = vsel %vm1709, %v1706, %v1500
        %vm1711 = vcmp.lt.s32.totalorder %v1708, %v1503
        %v1712 = vsel %vm1711, %v1708, %v1503
        %vm1713 = vcmp.lt.s32.totalorder %v1710, %v1506
        %v1714 = vsel %vm1713, %v1710, %v1506
        %vm1715 = vcmp.lt.s32.totalorder %v1712, %v1509
        %v1716 = vsel %vm1715, %v1712, %v1509
        %vm1717 = vcmp.lt.s32.totalorder %v1714, %v1512
        %v1718 = vsel %vm1717, %v1714, %v1512
        %vm1719 = vcmp.lt.s32.totalorder %v1716, %v1515
        %v1720 = vsel %vm1719, %v1716, %v1515
        %vm1721 = vcmp.lt.s32.totalorder %v1718, %v1518
        %v1722 = vsel %vm1721, %v1718, %v1518
        %vm1723 = vcmp.lt.s32.totalorder %v1720, %v1521
        %v1724 = vsel %vm1723, %v1720, %v1521
        %vm1725 = vcmp.lt.s32.totalorder %v1722, %v1524
        %v1726 = vsel %vm1725, %v1722, %v1524
        %vm1727 = vcmp.lt.s32.totalorder %v1724, %v1726
        %v1728 = vsel %vm1727, %v1724, %v1726
        %v1729 = vrot.slane %v1728, 4
        %vm1730 = vcmp.lt.s32.totalorder %v1728, %v1729
        %v1731 = vsel %vm1730, %v1728, %v1729
        %v1732 = vrot.slane %v1731, 2
        %vm1733 = vcmp.lt.s32.totalorder %v1731, %v1732
        %v1734 = vsel %vm1733, %v1731, %v1732
        %v1735 = vrot.slane %v1734, 1
        %vm1736 = vcmp.lt.s32.totalorder %v1734, %v1735
        %v1737 = vsel %vm1736, %v1734, %v1735
        %vm1738 = vcmp.eq.s32.totalorder %v1190, %v1595
        %vm1739 = vcmp.eq.s32.totalorder %v1190, %v1666
        %vm1740 = vcmp.eq.s32.totalorder %v1190, %v1737
        %vm1741 = vcmp.eq.s32.totalorder %v1191, %v1595
        %vm1742 = vcmp.eq.s32.totalorder %v1191, %v1666
        %vm1743 = vcmp.eq.s32.totalorder %v1191, %v1737
        %vm1744 = vcmp.eq.s32.totalorder %v1192, %v1595
        %vm1745 = vcmp.eq.s32.totalorder %v1192, %v1666
        %vm1746 = vcmp.eq.s32.totalorder %v1192, %v1737
        %vm1747 = vcmp.eq.s32.totalorder %v1193, %v1595
        %vm1748 = vcmp.eq.s32.totalorder %v1193, %v1666
        %vm1749 = vcmp.eq.s32.totalorder %v1193, %v1737
        %vm1750 = vcmp.eq.s32.totalorder %v1194, %v1595
        %vm1751 = vcmp.eq.s32.totalorder %v1194, %v1666
        %vm1752 = vcmp.eq.s32.totalorder %v1194, %v1737
        %vm1753 = vcmp.eq.s32.totalorder %v1195, %v1595
        %vm1754 = vcmp.eq.s32.totalorder %v1195, %v1666
        %vm1755 = vcmp.eq.s32.totalorder %v1195, %v1737
        %vm1756 = vcmp.eq.s32.totalorder %v1196, %v1595
        %vm1757 = vcmp.eq.s32.totalorder %v1196, %v1666
        %vm1758 = vcmp.eq.s32.totalorder %v1196, %v1737
        %vm1759 = vcmp.eq.s32.totalorder %v1197, %v1595
        %vm1760 = vcmp.eq.s32.totalorder %v1197, %v1666
        %vm1761 = vcmp.eq.s32.totalorder %v1197, %v1737
        %vm1762 = vcmp.eq.s32.totalorder %v1198, %v1595
        %vm1763 = vcmp.eq.s32.totalorder %v1198, %v1666
        %vm1764 = vcmp.eq.s32.totalorder %v1198, %v1737
        %vm1765 = vcmp.eq.s32.totalorder %v1199, %v1595
        %vm1766 = vcmp.eq.s32.totalorder %v1199, %v1666
        %vm1767 = vcmp.eq.s32.totalorder %v1199, %v1737
        %vm1768 = vcmp.eq.s32.totalorder %v1200, %v1595
        %vm1769 = vcmp.eq.s32.totalorder %v1200, %v1666
        %vm1770 = vcmp.eq.s32.totalorder %v1200, %v1737
        %vm1771 = vcmp.eq.s32.totalorder %v1201, %v1595
        %vm1772 = vcmp.eq.s32.totalorder %v1201, %v1666
        %vm1773 = vcmp.eq.s32.totalorder %v1201, %v1737
        %vm1774 = vcmp.eq.s32.totalorder %v1202, %v1595
        %vm1775 = vcmp.eq.s32.totalorder %v1202, %v1666
        %vm1776 = vcmp.eq.s32.totalorder %v1202, %v1737
        %vm1777 = vcmp.eq.s32.totalorder %v1203, %v1595
        %vm1778 = vcmp.eq.s32.totalorder %v1203, %v1666
        %vm1779 = vcmp.eq.s32.totalorder %v1203, %v1737
        %vm1780 = vcmp.eq.s32.totalorder %v1204, %v1595
        %vm1781 = vcmp.eq.s32.totalorder %v1204, %v1666
        %vm1782 = vcmp.eq.s32.totalorder %v1204, %v1737
        %vm1783 = vcmp.eq.s32.totalorder %v1205, %v1595
        %vm1784 = vcmp.eq.s32.totalorder %v1205, %v1666
        %vm1785 = vcmp.eq.s32.totalorder %v1205, %v1737
        %vm1786 = vcmp.eq.s32.totalorder %v1206, %v1595
        %vm1787 = vcmp.eq.s32.totalorder %v1206, %v1666
        %vm1788 = vcmp.eq.s32.totalorder %v1206, %v1737
        %vm1789 = vcmp.eq.s32.totalorder %v1207, %v1595
        %vm1790 = vcmp.eq.s32.totalorder %v1207, %v1666
        %vm1791 = vcmp.eq.s32.totalorder %v1207, %v1737
        %vm1792 = vcmp.eq.s32.totalorder %v1208, %v1595
        %vm1793 = vcmp.eq.s32.totalorder %v1208, %v1666
        %vm1794 = vcmp.eq.s32.totalorder %v1208, %v1737
        %vm1795 = vcmp.eq.s32.totalorder %v1209, %v1595
        %vm1796 = vcmp.eq.s32.totalorder %v1209, %v1666
        %vm1797 = vcmp.eq.s32.totalorder %v1209, %v1737
        %vm1798 = vcmp.eq.s32.totalorder %v1210, %v1595
        %vm1799 = vcmp.eq.s32.totalorder %v1210, %v1666
        %vm1800 = vcmp.eq.s32.totalorder %v1210, %v1737
        %vm1801 = vcmp.eq.s32.totalorder %v1211, %v1595
        %vm1802 = vcmp.eq.s32.totalorder %v1211, %v1666
        %vm1803 = vcmp.eq.s32.totalorder %v1211, %v1737
        %vm1804 = vcmp.eq.s32.totalorder %v1212, %v1595
        %vm1805 = vcmp.eq.s32.totalorder %v1212, %v1666
        %vm1806 = vcmp.eq.s32.totalorder %v1212, %v1737
        %vm1807 = vcmp.eq.s32.totalorder %v1213, %v1595
        %vm1808 = vcmp.eq.s32.totalorder %v1213, %v1666
        %vm1809 = vcmp.eq.s32.totalorder %v1213, %v1737
        %vm1810 = vcmp.eq.s32.totalorder %v1214, %v1595
        %vm1811 = vcmp.eq.s32.totalorder %v1214, %v1666
        %vm1812 = vcmp.eq.s32.totalorder %v1214, %v1737
        %vm1813 = vcmp.eq.s32.totalorder %v1215, %v1595
        %vm1814 = vcmp.eq.s32.totalorder %v1215, %v1666
        %vm1815 = vcmp.eq.s32.totalorder %v1215, %v1737
        %vm1816 = vcmp.eq.s32.totalorder %v1216, %v1595
        %vm1817 = vcmp.eq.s32.totalorder %v1216, %v1666
        %vm1818 = vcmp.eq.s32.totalorder %v1216, %v1737
        %vm1819 = vcmp.eq.s32.totalorder %v1217, %v1595
        %vm1820 = vcmp.eq.s32.totalorder %v1217, %v1666
        %vm1821 = vcmp.eq.s32.totalorder %v1217, %v1737
        %vm1822 = vcmp.eq.s32.totalorder %v1218, %v1595
        %vm1823 = vcmp.eq.s32.totalorder %v1218, %v1666
        %vm1824 = vcmp.eq.s32.totalorder %v1218, %v1737
        %vm1825 = vcmp.eq.s32.totalorder %v1219, %v1595
        %vm1826 = vcmp.eq.s32.totalorder %v1219, %v1666
        %vm1827 = vcmp.eq.s32.totalorder %v1219, %v1737
        %vm1828 = vcmp.eq.s32.totalorder %v1220, %v1595
        %vm1829 = vcmp.eq.s32.totalorder %v1220, %v1666
        %vm1830 = vcmp.eq.s32.totalorder %v1220, %v1737
        %vm1831 = vcmp.eq.s32.totalorder %v1221, %v1595
        %vm1832 = vcmp.eq.s32.totalorder %v1221, %v1666
        %vm1833 = vcmp.eq.s32.totalorder %v1221, %v1737
        %v1834 = vsel %vm1738, 1, 0
        %v1835 = vsel %vm1739, 1, 0
        %v1836 = vsel %vm1740, 1, 0
        %v1837 = vsel %vm1741, 1, 0
        %v1838 = vsel %vm1742, 1, 0
        %v1839 = vsel %vm1743, 1, 0
        %v1840 = vsel %vm1744, 1, 0
        %v1841 = vsel %vm1745, 1, 0
        %v1842 = vsel %vm1746, 1, 0
        %v1843 = vsel %vm1747, 1, 0
        %v1844 = vsel %vm1748, 1, 0
        %v1845 = vsel %vm1749, 1, 0
        %v1846 = vsel %vm1750, 1, 0
        %v1847 = vsel %vm1751, 1, 0
        %v1848 = vsel %vm1752, 1, 0
        %v1849 = vsel %vm1753, 1, 0
        %v1850 = vsel %vm1754, 1, 0
        %v1851 = vsel %vm1755, 1, 0
        %v1852 = vsel %vm1756, 1, 0
        %v1853 = vsel %vm1757, 1, 0
        %v1854 = vsel %vm1758, 1, 0
        %v1855 = vsel %vm1759, 1, 0
        %v1856 = vsel %vm1760, 1, 0
        %v1857 = vsel %vm1761, 1, 0
        %v1858 = vsel %vm1762, 1, 0
        %v1859 = vsel %vm1763, 1, 0
        %v1860 = vsel %vm1764, 1, 0
        %v1861 = vsel %vm1765, 1, 0
        %v1862 = vsel %vm1766, 1, 0
        %v1863 = vsel %vm1767, 1, 0
        %v1864 = vsel %vm1768, 1, 0
        %v1865 = vsel %vm1769, 1, 0
        %v1866 = vsel %vm1770, 1, 0
        %v1867 = vsel %vm1771, 1, 0
        %v1868 = vsel %vm1772, 1, 0
        %v1869 = vsel %vm1773, 1, 0
        %v1870 = vsel %vm1774, 1, 0
        %v1871 = vsel %vm1775, 1, 0
        %v1872 = vsel %vm1776, 1, 0
        %v1873 = vsel %vm1777, 1, 0
        %v1874 = vsel %vm1778, 1, 0
        %v1875 = vsel %vm1779, 1, 0
        %v1876 = vsel %vm1780, 1, 0
        %v1877 = vsel %vm1781, 1, 0
        %v1878 = vsel %vm1782, 1, 0
        %v1879 = vsel %vm1783, 1, 0
        %v1880 = vsel %vm1784, 1, 0
        %v1881 = vsel %vm1785, 1, 0
        %v1882 = vsel %vm1786, 1, 0
        %v1883 = vsel %vm1787, 1, 0
        %v1884 = vsel %vm1788, 1, 0
        %v1885 = vsel %vm1789, 1, 0
        %v1886 = vsel %vm1790, 1, 0
        %v1887 = vsel %vm1791, 1, 0
        %v1888 = vsel %vm1792, 1, 0
        %v1889 = vsel %vm1793, 1, 0
        %v1890 = vsel %vm1794, 1, 0
        %v1891 = vsel %vm1795, 1, 0
        %v1892 = vsel %vm1796, 1, 0
        %v1893 = vsel %vm1797, 1, 0
        %v1894 = vsel %vm1798, 1, 0
        %v1895 = vsel %vm1799, 1, 0
        %v1896 = vsel %vm1800, 1, 0
        %v1897 = vsel %vm1801, 1, 0
        %v1898 = vsel %vm1802, 1, 0
        %v1899 = vsel %vm1803, 1, 0
        %v1900 = vsel %vm1804, 1, 0
        %v1901 = vsel %vm1805, 1, 0
        %v1902 = vsel %vm1806, 1, 0
        %v1903 = vsel %vm1807, 1, 0
        %v1904 = vsel %vm1808, 1, 0
        %v1905 = vsel %vm1809, 1, 0
        %v1906 = vsel %vm1810, 1, 0
        %v1907 = vsel %vm1811, 1, 0
        %v1908 = vsel %vm1812, 1, 0
        %v1909 = vsel %vm1813, 1, 0
        %v1910 = vsel %vm1814, 1, 0
        %v1911 = vsel %vm1815, 1, 0
        %v1912 = vsel %vm1816, 1, 0
        %v1913 = vsel %vm1817, 1, 0
        %v1914 = vsel %vm1818, 1, 0
        %v1915 = vsel %vm1819, 1, 0
        %v1916 = vsel %vm1820, 1, 0
        %v1917 = vsel %vm1821, 1, 0
        %v1918 = vsel %vm1822, 1, 0
        %v1919 = vsel %vm1823, 1, 0
        %v1920 = vsel %vm1824, 1, 0
        %v1921 = vsel %vm1825, 1, 0
        %v1922 = vsel %vm1826, 1, 0
        %v1923 = vsel %vm1827, 1, 0
        %v1924 = vsel %vm1828, 1, 0
        %v1925 = vsel %vm1829, 1, 0
        %v1926 = vsel %vm1830, 1, 0
        %v1927 = vsel %vm1831, 1, 0
        %v1928 = vsel %vm1832, 1, 0
        %v1929 = vsel %vm1833, 1, 0
        %v1930 = vcvt.s32.f32 %v1834
        %v1931 = vcvt.s32.f32 %v1835
        %v1932 = vcvt.s32.f32 %v1836
        %v1933 = vcvt.s32.f32 %v1837
        %v1934 = vcvt.s32.f32 %v1838
        %v1935 = vcvt.s32.f32 %v1839
        %v1936 = vcvt.s32.f32 %v1840
        %v1937 = vcvt.s32.f32 %v1841
        %v1938 = vcvt.s32.f32 %v1842
        %v1939 = vcvt.s32.f32 %v1843
        %v1940 = vcvt.s32.f32 %v1844
        %v1941 = vcvt.s32.f32 %v1845
        %v1942 = vcvt.s32.f32 %v1846
        %v1943 = vcvt.s32.f32 %v1847
        %v1944 = vcvt.s32.f32 %v1848
        %v1945 = vcvt.s32.f32 %v1849
        %v1946 = vcvt.s32.f32 %v1850
        %v1947 = vcvt.s32.f32 %v1851
        %v1948 = vcvt.s32.f32 %v1852
        %v1949 = vcvt.s32.f32 %v1853
        %v1950 = vcvt.s32.f32 %v1854
        %v1951 = vcvt.s32.f32 %v1855
        %v1952 = vcvt.s32.f32 %v1856
        %v1953 = vcvt.s32.f32 %v1857
        %v1954 = vcvt.s32.f32 %v1858
        %v1955 = vcvt.s32.f32 %v1859
        %v1956 = vcvt.s32.f32 %v1860
        %v1957 = vcvt.s32.f32 %v1861
        %v1958 = vcvt.s32.f32 %v1862
        %v1959 = vcvt.s32.f32 %v1863
        %v1960 = vcvt.s32.f32 %v1864
        %v1961 = vcvt.s32.f32 %v1865
        %v1962 = vcvt.s32.f32 %v1866
        %v1963 = vcvt.s32.f32 %v1867
        %v1964 = vcvt.s32.f32 %v1868
        %v1965 = vcvt.s32.f32 %v1869
        %v1966 = vcvt.s32.f32 %v1870
        %v1967 = vcvt.s32.f32 %v1871
        %v1968 = vcvt.s32.f32 %v1872
        %v1969 = vcvt.s32.f32 %v1873
        %v1970 = vcvt.s32.f32 %v1874
        %v1971 = vcvt.s32.f32 %v1875
        %v1972 = vcvt.s32.f32 %v1876
        %v1973 = vcvt.s32.f32 %v1877
        %v1974 = vcvt.s32.f32 %v1878
        %v1975 = vcvt.s32.f32 %v1879
        %v1976 = vcvt.s32.f32 %v1880
        %v1977 = vcvt.s32.f32 %v1881
        %v1978 = vcvt.s32.f32 %v1882
        %v1979 = vcvt.s32.f32 %v1883
        %v1980 = vcvt.s32.f32 %v1884
        %v1981 = vcvt.s32.f32 %v1885
        %v1982 = vcvt.s32.f32 %v1886
        %v1983 = vcvt.s32.f32 %v1887
        %v1984 = vcvt.s32.f32 %v1888
        %v1985 = vcvt.s32.f32 %v1889
        %v1986 = vcvt.s32.f32 %v1890
        %v1987 = vcvt.s32.f32 %v1891
        %v1988 = vcvt.s32.f32 %v1892
        %v1989 = vcvt.s32.f32 %v1893
        %v1990 = vcvt.s32.f32 %v1894
        %v1991 = vcvt.s32.f32 %v1895
        %v1992 = vcvt.s32.f32 %v1896
        %v1993 = vcvt.s32.f32 %v1897
        %v1994 = vcvt.s32.f32 %v1898
        %v1995 = vcvt.s32.f32 %v1899
        %v1996 = vcvt.s32.f32 %v1900
        %v1997 = vcvt.s32.f32 %v1901
        %v1998 = vcvt.s32.f32 %v1902
        %v1999 = vcvt.s32.f32 %v1903
        %v2000 = vcvt.s32.f32 %v1904
        %v2001 = vcvt.s32.f32 %v1905
        %v2002 = vcvt.s32.f32 %v1906
        %v2003 = vcvt.s32.f32 %v1907
        %v2004 = vcvt.s32.f32 %v1908
        %v2005 = vcvt.s32.f32 %v1909
        %v2006 = vcvt.s32.f32 %v1910
        %v2007 = vcvt.s32.f32 %v1911
        %v2008 = vcvt.s32.f32 %v1912
        %v2009 = vcvt.s32.f32 %v1913
        %v2010 = vcvt.s32.f32 %v1914
        %v2011 = vcvt.s32.f32 %v1915
        %v2012 = vcvt.s32.f32 %v1916
        %v2013 = vcvt.s32.f32 %v1917
        %v2014 = vcvt.s32.f32 %v1918
        %v2015 = vcvt.s32.f32 %v1919
        %v2016 = vcvt.s32.f32 %v1920
        %v2017 = vcvt.s32.f32 %v1921
        %v2018 = vcvt.s32.f32 %v1922
        %v2019 = vcvt.s32.f32 %v1923
        %v2020 = vcvt.s32.f32 %v1924
        %v2021 = vcvt.s32.f32 %v1925
        %v2022 = vcvt.s32.f32 %v1926
        %v2023 = vcvt.s32.f32 %v1927
        %v2024 = vcvt.s32.f32 %v1928
        %v2025 = vcvt.s32.f32 %v1929
        %v2026 = vld [vmem:[%s2] sm:$0xff]
        %v2027 = vld [vmem:[%s2 + $0x8] sm:$0xff]
        %v2028 = vld [vmem:[%s2 + $0x10] sm:$0xff]
        %v2029 = vld [vmem:[%s2 + $0x18] sm:$0xff]
        %v2030 = vld [vmem:[%s2 + $0x20] sm:$0xff]
        %v2031 = vld [vmem:[%s2 + $0x28] sm:$0xff]
        %v2032 = vld [vmem:[%s2 + $0x30] sm:$0xff]
        %v2033 = vld [vmem:[%s2 + $0x38] sm:$0xff]
        %v2034 = vld [vmem:[%s2 + $0x40] sm:$0xff]
        %v2035 = vld [vmem:[%s2 + $0x48] sm:$0xff]
        %v2036 = vld [vmem:[%s2 + $0x50] sm:$0xff]
        %v2037 = vld [vmem:[%s2 + $0x58] sm:$0xff]
        %v2038 = vld [vmem:[%s2 + $0x60] sm:$0xff]
        %v2039 = vld [vmem:[%s2 + $0x68] sm:$0xff]
        %v2040 = vld [vmem:[%s2 + $0x70] sm:$0xff]
        %v2041 = vld [vmem:[%s2 + $0x78] sm:$0xff]
        %v2042 = vld [vmem:[%s2 + $0x80] sm:$0xff]
        %v2043 = vld [vmem:[%s2 + $0x88] sm:$0xff]
        %v2044 = vld [vmem:[%s2 + $0x90] sm:$0xff]
        %v2045 = vld [vmem:[%s2 + $0x98] sm:$0xff]
        %v2046 = vld [vmem:[%s2 + $0xa0] sm:$0xff]
        %v2047 = vld [vmem:[%s2 + $0xa8] sm:$0xff]
        %v2048 = vld [vmem:[%s2 + $0xb0] sm:$0xff]
        %v2049 = vld [vmem:[%s2 + $0xb8] sm:$0xff]
        %v2050 = vld [vmem:[%s2 + $0xc0] sm:$0xff]
        %v2051 = vld [vmem:[%s2 + $0xc8] sm:$0xff]
        %v2052 = vld [vmem:[%s2 + $0xd0] sm:$0xff]
        %v2053 = vld [vmem:[%s2 + $0xd8] sm:$0xff]
        %v2054 = vld [vmem:[%s2 + $0xe0] sm:$0xff]
        %v2055 = vld [vmem:[%s2 + $0xe8] sm:$0xff]
        %v2056 = vld [vmem:[%s2 + $0xf0] sm:$0xff]
        %v2057 = vld [vmem:[%s2 + $0xf8] sm:$0xff]
        %2058 = vmatprep.subr.mxu0 %v1976
        %2059 = vmatpush1.msra.mxu0 %v1975
        %2060 = vmatprep.subr.mxu0 %v1973
        %2061 = vmatpush1.msra.mxu0 %v1972
        %2062 = vmatprep.subr.mxu0 %v1970
        %2063 = vmatpush1.msra.mxu0 %v1969
        %2064 = vmatprep.subr.mxu0 %v1967
        %2065 = vmatpush1.msra.mxu0 %v1966
        %2066 = vmatprep.subr.mxu0 %v1964
        %2067 = vmatpush1.msra.mxu0 %v1963
        %2068 = vmatprep.subr.mxu0 %v1961
        %2069 = vmatpush1.msra.mxu0 %v1960
        %2070 = vmatprep.subr.mxu0 %v1958
        %2071 = vmatpush1.msra.mxu0 %v1957
        %2072 = vmatprep.subr.mxu0 %v1955
        %2073 = vmatpush1.msra.mxu0 %v1954
        %2074 = vmatprep.subr.mxu0 %v1952
        %2075 = vmatpush1.msra.mxu0 %v1951
        %2076 = vmatprep.subr.mxu0 %v1949
        %2077 = vmatpush1.msra.mxu0 %v1948
        %2078 = vmatprep.subr.mxu0 %v1946
        %2079 = vmatpush1.msra.mxu0 %v1945
        %2080 = vmatprep.subr.mxu0 %v1943
        %2081 = vmatpush1.msra.mxu0 %v1942
        %2082 = vmatprep.subr.mxu0 %v1940
        %2083 = vmatpush1.msra.mxu0 %v1939
        %2084 = vmatprep.subr.mxu0 %v1937
        %2085 = vmatpush1.msra.mxu0 %v1936
        %2086 = vmatprep.subr.mxu0 %v1934
        %2087 = vmatpush1.msra.mxu0 %v1933
        %2088 = vmatprep.subr.mxu0 %v1931
        %2089 = vmatpush1.msra.mxu0 %v1930
        %2090 = vmatprep.subr.mxu0 %v2024
        %2091 = vmatpush2.msra.mxu0 %v2023
        %2092 = vmatprep.subr.mxu0 %v2021
        %2093 = vmatpush2.msra.mxu0 %v2020
        %2094 = vmatprep.subr.mxu0 %v2018
        %2095 = vmatpush2.msra.mxu0 %v2017
        %2096 = vmatprep.subr.mxu0 %v2015
        %2097 = vmatpush2.msra.mxu0 %v2014
        %2098 = vmatprep.subr.mxu0 %v2012
        %2099 = vmatpush2.msra.mxu0 %v2011
        %2100 = vmatprep.subr.mxu0 %v2009
        %2101 = vmatpush2.msra.mxu0 %v2008
        %2102 = vmatprep.subr.mxu0 %v2006
        %2103 = vmatpush2.msra.mxu0 %v2005
        %2104 = vmatprep.subr.mxu0 %v2003
        %2105 = vmatpush2.msra.mxu0 %v2002
        %2106 = vmatprep.subr.mxu0 %v2000
        %2107 = vmatpush2.msra.mxu0 %v1999
        %2108 = vmatprep.subr.mxu0 %v1997
        %2109 = vmatpush2.msra.mxu0 %v1996
        %2110 = vmatprep.subr.mxu0 %v1994
        %2111 = vmatpush2.msra.mxu0 %v1993
        %2112 = vmatprep.subr.mxu0 %v1991
        %2113 = vmatpush2.msra.mxu0 %v1990
        %2114 = vmatprep.subr.mxu0 %v1988
        %2115 = vmatpush2.msra.mxu0 %v1987
        %2116 = vmatprep.subr.mxu0 %v1985
        %2117 = vmatpush2.msra.mxu0 %v1984
        %2118 = vmatprep.subr.mxu0 %v1982
        %2119 = vmatpush2.msra.mxu0 %v1981
        %2120 = vmatprep.subr.mxu0 %v1979
        %2121 = vmatpush2.msra.mxu0 %v1978
        %2122 = vmatprep.mubr.f32.mxu0 %v2027
        %2123 = vmatmul.mubr.f32.gmra.mxu0 %v2026
        %v2124 = vpop.f32.mrf.mxu0
        %v2125 = vadd.f32 0.0, %v2124
        %v2126 = vpop.f32.mrf.mxu0
        %v2127 = vadd.f32 0.0, %v2126
        %2128 = vmatprep.mubr.f32.mxu0 %v2029
        %2129 = vmatmul.mubr.f32.gmra.mxu0 %v2028
        %v2130 = vpop.f32.mrf.mxu0
        %v2131 = vadd.f32 0.0, %v2130
        %v2132 = vpop.f32.mrf.mxu0
        %v2133 = vadd.f32 0.0, %v2132
        %2134 = vmatprep.mubr.f32.mxu0 %v2031
        %2135 = vmatmul.mubr.f32.gmra.mxu0 %v2030
        %v2136 = vpop.f32.mrf.mxu0
        %v2137 = vadd.f32 0.0, %v2136
        %v2138 = vpop.f32.mrf.mxu0
        %v2139 = vadd.f32 0.0, %v2138
        %2140 = vmatprep.mubr.f32.mxu0 %v2033
        %2141 = vmatmul.mubr.f32.gmra.mxu0 %v2032
        %v2142 = vpop.f32.mrf.mxu0
        %v2143 = vadd.f32 0.0, %v2142
        %v2144 = vpop.f32.mrf.mxu0
        %v2145 = vadd.f32 0.0, %v2144
        %2146 = vmatprep.mubr.f32.mxu0 %v2035
        %2147 = vmatmul.mubr.f32.gmra.mxu0 %v2034
        %v2148 = vpop.f32.mrf.mxu0
        %v2149 = vadd.f32 0.0, %v2148
        %v2150 = vpop.f32.mrf.mxu0
        %v2151 = vadd.f32 0.0, %v2150
        %2152 = vmatprep.mubr.f32.mxu0 %v2037
        %2153 = vmatmul.mubr.f32.gmra.mxu0 %v2036
        %v2154 = vpop.f32.mrf.mxu0
        %v2155 = vadd.f32 0.0, %v2154
        %v2156 = vpop.f32.mrf.mxu0
        %v2157 = vadd.f32 0.0, %v2156
        %2158 = vmatprep.mubr.f32.mxu0 %v2039
        %2159 = vmatmul.mubr.f32.gmra.mxu0 %v2038
        %v2160 = vpop.f32.mrf.mxu0
        %v2161 = vadd.f32 0.0, %v2160
        %v2162 = vpop.f32.mrf.mxu0
        %v2163 = vadd.f32 0.0, %v2162
        %2164 = vmatprep.mubr.f32.mxu0 %v2041
        %2165 = vmatmul.mubr.f32.gmra.mxu0 %v2040
        %v2166 = vpop.f32.mrf.mxu0
        %v2167 = vadd.f32 0.0, %v2166
        %v2168 = vpop.f32.mrf.mxu0
        %v2169 = vadd.f32 0.0, %v2168
        %2170 = vmatprep.mubr.f32.mxu0 %v2043
        %2171 = vmatmul.mubr.f32.gmra.mxu0 %v2042
        %v2172 = vpop.f32.mrf.mxu0
        %v2173 = vadd.f32 0.0, %v2172
        %v2174 = vpop.f32.mrf.mxu0
        %v2175 = vadd.f32 0.0, %v2174
        %2176 = vmatprep.mubr.f32.mxu0 %v2045
        %2177 = vmatmul.mubr.f32.gmra.mxu0 %v2044
        %v2178 = vpop.f32.mrf.mxu0
        %v2179 = vadd.f32 0.0, %v2178
        %v2180 = vpop.f32.mrf.mxu0
        %v2181 = vadd.f32 0.0, %v2180
        %2182 = vmatprep.mubr.f32.mxu0 %v2047
        %2183 = vmatmul.mubr.f32.gmra.mxu0 %v2046
        %v2184 = vpop.f32.mrf.mxu0
        %v2185 = vadd.f32 0.0, %v2184
        %v2186 = vpop.f32.mrf.mxu0
        %v2187 = vadd.f32 0.0, %v2186
        %2188 = vmatprep.mubr.f32.mxu0 %v2049
        %2189 = vmatmul.mubr.f32.gmra.mxu0 %v2048
        %v2190 = vpop.f32.mrf.mxu0
        %v2191 = vadd.f32 0.0, %v2190
        %v2192 = vpop.f32.mrf.mxu0
        %v2193 = vadd.f32 0.0, %v2192
        %2194 = vmatprep.mubr.f32.mxu0 %v2051
        %2195 = vmatmul.mubr.f32.gmra.mxu0 %v2050
        %v2196 = vpop.f32.mrf.mxu0
        %v2197 = vadd.f32 0.0, %v2196
        %v2198 = vpop.f32.mrf.mxu0
        %v2199 = vadd.f32 0.0, %v2198
        %2200 = vmatprep.mubr.f32.mxu0 %v2053
        %2201 = vmatmul.mubr.f32.gmra.mxu0 %v2052
        %v2202 = vpop.f32.mrf.mxu0
        %v2203 = vadd.f32 0.0, %v2202
        %v2204 = vpop.f32.mrf.mxu0
        %v2205 = vadd.f32 0.0, %v2204
        %2206 = vmatprep.mubr.f32.mxu0 %v2055
        %2207 = vmatmul.mubr.f32.gmra.mxu0 %v2054
        %v2208 = vpop.f32.mrf.mxu0
        %v2209 = vadd.f32 0.0, %v2208
        %v2210 = vpop.f32.mrf.mxu0
        %v2211 = vadd.f32 0.0, %v2210
        %2212 = vmatprep.mubr.f32.mxu0 %v2057
        %2213 = vmatmul.mubr.f32.gmra.mxu0 %v2056
        %v2214 = vpop.f32.mrf.mxu0
        %v2215 = vadd.f32 0.0, %v2214
        %v2216 = vpop.f32.mrf.mxu0
        %v2217 = vadd.f32 0.0, %v2216
        %2218 = vdwg.mxu0
        %2219 = vmatprep.subr.mxu0 0.0
        %2220 = vmatpush1.msra.mxu0 %v1977
        %2221 = vmatprep.subr.mxu0 0.0
        %2222 = vmatpush1.msra.mxu0 %v1974
        %2223 = vmatprep.subr.mxu0 0.0
        %2224 = vmatpush1.msra.mxu0 %v1971
        %2225 = vmatprep.subr.mxu0 0.0
        %2226 = vmatpush1.msra.mxu0 %v1968
        %2227 = vmatprep.subr.mxu0 0.0
        %2228 = vmatpush1.msra.mxu0 %v1965
        %2229 = vmatprep.subr.mxu0 0.0
        %2230 = vmatpush1.msra.mxu0 %v1962
        %2231 = vmatprep.subr.mxu0 0.0
        %2232 = vmatpush1.msra.mxu0 %v1959
        %2233 = vmatprep.subr.mxu0 0.0
        %2234 = vmatpush1.msra.mxu0 %v1956
        %2235 = vmatprep.subr.mxu0 0.0
        %2236 = vmatpush1.msra.mxu0 %v1953
        %2237 = vmatprep.subr.mxu0 0.0
        %2238 = vmatpush1.msra.mxu0 %v1950
        %2239 = vmatprep.subr.mxu0 0.0
        %2240 = vmatpush1.msra.mxu0 %v1947
        %2241 = vmatprep.subr.mxu0 0.0
        %2242 = vmatpush1.msra.mxu0 %v1944
        %2243 = vmatprep.subr.mxu0 0.0
        %2244 = vmatpush1.msra.mxu0 %v1941
        %2245 = vmatprep.subr.mxu0 0.0
        %2246 = vmatpush1.msra.mxu0 %v1938
        %2247 = vmatprep.subr.mxu0 0.0
        %2248 = vmatpush1.msra.mxu0 %v1935
        %2249 = vmatprep.subr.mxu0 0.0
        %2250 = vmatpush1.msra.mxu0 %v1932
        %2251 = vmatprep.subr.mxu0 0.0
        %2252 = vmatpush2.msra.mxu0 %v2025
        %2253 = vmatprep.subr.mxu0 0.0
        %2254 = vmatpush2.msra.mxu0 %v2022
        %2255 = vmatprep.subr.mxu0 0.0
        %2256 = vmatpush2.msra.mxu0 %v2019
        %2257 = vmatprep.subr.mxu0 0.0
        %2258 = vmatpush2.msra.mxu0 %v2016
        %2259 = vmatprep.subr.mxu0 0.0
        %2260 = vmatpush2.msra.mxu0 %v2013
        %2261 = vmatprep.subr.mxu0 0.0
        %2262 = vmatpush2.msra.mxu0 %v2010
        %2263 = vmatprep.subr.mxu0 0.0
        %2264 = vmatpush2.msra.mxu0 %v2007
        %2265 = vmatprep.subr.mxu0 0.0
        %2266 = vmatpush2.msra.mxu0 %v2004
        %2267 = vmatprep.subr.mxu0 0.0
        %2268 = vmatpush2.msra.mxu0 %v2001
        %2269 = vmatprep.subr.mxu0 0.0
        %2270 = vmatpush2.msra.mxu0 %v1998
        %2271 = vmatprep.subr.mxu0 0.0
        %2272 = vmatpush2.msra.mxu0 %v1995
        %2273 = vmatprep.subr.mxu0 0.0
        %2274 = vmatpush2.msra.mxu0 %v1992
        %2275 = vmatprep.subr.mxu0 0.0
        %2276 = vmatpush2.msra.mxu0 %v1989
        %2277 = vmatprep.subr.mxu0 0.0
        %2278 = vmatpush2.msra.mxu0 %v1986
        %2279 = vmatprep.subr.mxu0 0.0
        %2280 = vmatpush2.msra.mxu0 %v1983
        %2281 = vmatprep.subr.mxu0 0.0
        %2282 = vmatpush2.msra.mxu0 %v1980
        %2283 = vmatprep.mubr.f32.mxu0 %v2027
        %2284 = vmatmul.mubr.f32.gmra.mxu0 %v2026
        %v2285 = vpop.f32.mrf.mxu0
        %v2286 = vadd.f32 0.0, %v2285
        %v2287 = vpop.f32.mrf.mxu0
        %2288 = vmatprep.mubr.f32.mxu0 %v2029
        %2289 = vmatmul.mubr.f32.gmra.mxu0 %v2028
        %v2290 = vpop.f32.mrf.mxu0
        %v2291 = vadd.f32 0.0, %v2290
        %v2292 = vpop.f32.mrf.mxu0
        %2293 = vmatprep.mubr.f32.mxu0 %v2031
        %2294 = vmatmul.mubr.f32.gmra.mxu0 %v2030
        %v2295 = vpop.f32.mrf.mxu0
        %v2296 = vadd.f32 0.0, %v2295
        %v2297 = vpop.f32.mrf.mxu0
        %2298 = vmatprep.mubr.f32.mxu0 %v2033
        %2299 = vmatmul.mubr.f32.gmra.mxu0 %v2032
        %v2300 = vpop.f32.mrf.mxu0
        %v2301 = vadd.f32 0.0, %v2300
        %v2302 = vpop.f32.mrf.mxu0
        %2303 = vmatprep.mubr.f32.mxu0 %v2035
        %2304 = vmatmul.mubr.f32.gmra.mxu0 %v2034
        %v2305 = vpop.f32.mrf.mxu0
        %v2306 = vadd.f32 0.0, %v2305
        %v2307 = vpop.f32.mrf.mxu0
        %2308 = vmatprep.mubr.f32.mxu0 %v2037
        %2309 = vmatmul.mubr.f32.gmra.mxu0 %v2036
        %v2310 = vpop.f32.mrf.mxu0
        %v2311 = vadd.f32 0.0, %v2310
        %v2312 = vpop.f32.mrf.mxu0
        %2313 = vmatprep.mubr.f32.mxu0 %v2039
        %2314 = vmatmul.mubr.f32.gmra.mxu0 %v2038
        %v2315 = vpop.f32.mrf.mxu0
        %v2316 = vadd.f32 0.0, %v2315
        %v2317 = vpop.f32.mrf.mxu0
        %2318 = vmatprep.mubr.f32.mxu0 %v2041
        %2319 = vmatmul.mubr.f32.gmra.mxu0 %v2040
        %v2320 = vpop.f32.mrf.mxu0
        %v2321 = vadd.f32 0.0, %v2320
        %v2322 = vpop.f32.mrf.mxu0
        %2323 = vmatprep.mubr.f32.mxu0 %v2043
        %2324 = vmatmul.mubr.f32.gmra.mxu0 %v2042
        %v2325 = vpop.f32.mrf.mxu0
        %v2326 = vadd.f32 0.0, %v2325
        %v2327 = vpop.f32.mrf.mxu0
        %2328 = vmatprep.mubr.f32.mxu0 %v2045
        %2329 = vmatmul.mubr.f32.gmra.mxu0 %v2044
        %v2330 = vpop.f32.mrf.mxu0
        %v2331 = vadd.f32 0.0, %v2330
        %v2332 = vpop.f32.mrf.mxu0
        %2333 = vmatprep.mubr.f32.mxu0 %v2047
        %2334 = vmatmul.mubr.f32.gmra.mxu0 %v2046
        %v2335 = vpop.f32.mrf.mxu0
        %v2336 = vadd.f32 0.0, %v2335
        %v2337 = vpop.f32.mrf.mxu0
        %2338 = vmatprep.mubr.f32.mxu0 %v2049
        %2339 = vmatmul.mubr.f32.gmra.mxu0 %v2048
        %v2340 = vpop.f32.mrf.mxu0
        %v2341 = vadd.f32 0.0, %v2340
        %v2342 = vpop.f32.mrf.mxu0
        %2343 = vmatprep.mubr.f32.mxu0 %v2051
        %2344 = vmatmul.mubr.f32.gmra.mxu0 %v2050
        %v2345 = vpop.f32.mrf.mxu0
        %v2346 = vadd.f32 0.0, %v2345
        %v2347 = vpop.f32.mrf.mxu0
        %2348 = vmatprep.mubr.f32.mxu0 %v2053
        %2349 = vmatmul.mubr.f32.gmra.mxu0 %v2052
        %v2350 = vpop.f32.mrf.mxu0
        %v2351 = vadd.f32 0.0, %v2350
        %v2352 = vpop.f32.mrf.mxu0
        %2353 = vmatprep.mubr.f32.mxu0 %v2055
        %2354 = vmatmul.mubr.f32.gmra.mxu0 %v2054
        %v2355 = vpop.f32.mrf.mxu0
        %v2356 = vadd.f32 0.0, %v2355
        %v2357 = vpop.f32.mrf.mxu0
        %2358 = vmatprep.mubr.f32.mxu0 %v2057
        %2359 = vmatmul.mubr.f32.gmra.mxu0 %v2056
        %v2360 = vpop.f32.mrf.mxu0
        %v2361 = vadd.f32 0.0, %v2360
        %v2362 = vpop.f32.mrf.mxu0
        %2363 = vdwg.mxu0
        %s2364 = smul.u32 %s29, 384
        %v2365 = vlaneseq
        %v2366 = vand.u32 %v2365, 127
        %v2367 = vadd.s32 %v2366, 128
        %v2368 = vadd.s32 %v2366, 256
        %v2369 = vstv %s2364
        %v2370 = vadd.s32 %v2369, %v2366
        %v2371 = vadd.s32 %v2369, %v2367
        %v2372 = vadd.s32 %v2369, %v2368
        %vm2373 = vcmp.lt.s32.totalorder %v2370, 640
        %vm2374 = vcmp.lt.s32.totalorder %v2371, 640
        %vm2375 = vcmp.lt.s32.totalorder %v2372, 640
        %v2376 = vsel %vm2373, 1, 0
        %v2377 = vsel %vm2374, 1, 0
        %v2378 = vsel %vm2375, 1, 0
        %vm2379 = vcmp.eq.s32.totalorder %v2376, 1
        %vm2380 = vcmp.eq.s32.totalorder %v2377, 1
        %vm2381 = vcmp.eq.s32.totalorder %v2378, 1
        %v2382 = vsel %vm2379, %v1930, 0.0
        %v2383 = vsel %vm2380, %v1931, 0.0
        %v2384 = vsel %vm2381, %v1932, 0.0
        %v2385 = vsel %vm2379, %v1933, 0.0
        %v2386 = vsel %vm2380, %v1934, 0.0
        %v2387 = vsel %vm2381, %v1935, 0.0
        %v2388 = vsel %vm2379, %v1936, 0.0
        %v2389 = vsel %vm2380, %v1937, 0.0
        %v2390 = vsel %vm2381, %v1938, 0.0
        %v2391 = vsel %vm2379, %v1939, 0.0
        %v2392 = vsel %vm2380, %v1940, 0.0
        %v2393 = vsel %vm2381, %v1941, 0.0
        %v2394 = vsel %vm2379, %v1942, 0.0
        %v2395 = vsel %vm2380, %v1943, 0.0
        %v2396 = vsel %vm2381, %v1944, 0.0
        %v2397 = vsel %vm2379, %v1945, 0.0
        %v2398 = vsel %vm2380, %v1946, 0.0
        %v2399 = vsel %vm2381, %v1947, 0.0
        %v2400 = vsel %vm2379, %v1948, 0.0
        %v2401 = vsel %vm2380, %v1949, 0.0
        %v2402 = vsel %vm2381, %v1950, 0.0
        %v2403 = vsel %vm2379, %v1951, 0.0
        %v2404 = vsel %vm2380, %v1952, 0.0
        %v2405 = vsel %vm2381, %v1953, 0.0
        %v2406 = vsel %vm2379, %v1954, 0.0
        %v2407 = vsel %vm2380, %v1955, 0.0
        %v2408 = vsel %vm2381, %v1956, 0.0
        %v2409 = vsel %vm2379, %v1957, 0.0
        %v2410 = vsel %vm2380, %v1958, 0.0
        %v2411 = vsel %vm2381, %v1959, 0.0
        %v2412 = vsel %vm2379, %v1960, 0.0
        %v2413 = vsel %vm2380, %v1961, 0.0
        %v2414 = vsel %vm2381, %v1962, 0.0
        %v2415 = vsel %vm2379, %v1963, 0.0
        %v2416 = vsel %vm2380, %v1964, 0.0
        %v2417 = vsel %vm2381, %v1965, 0.0
        %v2418 = vsel %vm2379, %v1966, 0.0
        %v2419 = vsel %vm2380, %v1967, 0.0
        %v2420 = vsel %vm2381, %v1968, 0.0
        %v2421 = vsel %vm2379, %v1969, 0.0
        %v2422 = vsel %vm2380, %v1970, 0.0
        %v2423 = vsel %vm2381, %v1971, 0.0
        %v2424 = vsel %vm2379, %v1972, 0.0
        %v2425 = vsel %vm2380, %v1973, 0.0
        %v2426 = vsel %vm2381, %v1974, 0.0
        %v2427 = vsel %vm2379, %v1975, 0.0
        %v2428 = vsel %vm2380, %v1976, 0.0
        %v2429 = vsel %vm2381, %v1977, 0.0
        %v2430 = vsel %vm2379, %v1978, 0.0
        %v2431 = vsel %vm2380, %v1979, 0.0
        %v2432 = vsel %vm2381, %v1980, 0.0
        %v2433 = vsel %vm2379, %v1981, 0.0
        %v2434 = vsel %vm2380, %v1982, 0.0
        %v2435 = vsel %vm2381, %v1983, 0.0
        %v2436 = vsel %vm2379, %v1984, 0.0
        %v2437 = vsel %vm2380, %v1985, 0.0
        %v2438 = vsel %vm2381, %v1986, 0.0
        %v2439 = vsel %vm2379, %v1987, 0.0
        %v2440 = vsel %vm2380, %v1988, 0.0
        %v2441 = vsel %vm2381, %v1989, 0.0
        %v2442 = vsel %vm2379, %v1990, 0.0
        %v2443 = vsel %vm2380, %v1991, 0.0
        %v2444 = vsel %vm2381, %v1992, 0.0
        %v2445 = vsel %vm2379, %v1993, 0.0
        %v2446 = vsel %vm2380, %v1994, 0.0
        %v2447 = vsel %vm2381, %v1995, 0.0
        %v2448 = vsel %vm2379, %v1996, 0.0
        %v2449 = vsel %vm2380, %v1997, 0.0
        %v2450 = vsel %vm2381, %v1998, 0.0
        %v2451 = vsel %vm2379, %v1999, 0.0
        %v2452 = vsel %vm2380, %v2000, 0.0
        %v2453 = vsel %vm2381, %v2001, 0.0
        %v2454 = vsel %vm2379, %v2002, 0.0
        %v2455 = vsel %vm2380, %v2003, 0.0
        %v2456 = vsel %vm2381, %v2004, 0.0
        %v2457 = vsel %vm2379, %v2005, 0.0
        %v2458 = vsel %vm2380, %v2006, 0.0
        %v2459 = vsel %vm2381, %v2007, 0.0
        %v2460 = vsel %vm2379, %v2008, 0.0
        %v2461 = vsel %vm2380, %v2009, 0.0
        %v2462 = vsel %vm2381, %v2010, 0.0
        %v2463 = vsel %vm2379, %v2011, 0.0
        %v2464 = vsel %vm2380, %v2012, 0.0
        %v2465 = vsel %vm2381, %v2013, 0.0
        %v2466 = vsel %vm2379, %v2014, 0.0
        %v2467 = vsel %vm2380, %v2015, 0.0
        %v2468 = vsel %vm2381, %v2016, 0.0
        %v2469 = vsel %vm2379, %v2017, 0.0
        %v2470 = vsel %vm2380, %v2018, 0.0
        %v2471 = vsel %vm2381, %v2019, 0.0
        %v2472 = vsel %vm2379, %v2020, 0.0
        %v2473 = vsel %vm2380, %v2021, 0.0
        %v2474 = vsel %vm2381, %v2022, 0.0
        %v2475 = vsel %vm2379, %v2023, 0.0
        %v2476 = vsel %vm2380, %v2024, 0.0
        %v2477 = vsel %vm2381, %v2025, 0.0
        %v2478 = vadd.f32 %v2382, %v2383
        %v2479 = vadd.f32 %v2478, %v2384
        %2480 = vadd.xlane.f32.xlu0 %v2479
        %v2481 = vpop.xlane.xlu0 %2480
        %v2482 = vadd.f32 %v2385, %v2386
        %v2483 = vadd.f32 %v2482, %v2387
        %2484 = vadd.xlane.f32.xlu0 %v2483
        %v2485 = vpop.xlane.xlu0 %2484
        %v2486 = vadd.f32 %v2388, %v2389
        %v2487 = vadd.f32 %v2486, %v2390
        %2488 = vadd.xlane.f32.xlu0 %v2487
        %v2489 = vpop.xlane.xlu0 %2488
        %v2490 = vadd.f32 %v2391, %v2392
        %v2491 = vadd.f32 %v2490, %v2393
        %2492 = vadd.xlane.f32.xlu0 %v2491
        %v2493 = vpop.xlane.xlu0 %2492
        %v2494 = vadd.f32 %v2394, %v2395
        %v2495 = vadd.f32 %v2494, %v2396
        %2496 = vadd.xlane.f32.xlu0 %v2495
        %v2497 = vpop.xlane.xlu0 %2496
        %v2498 = vadd.f32 %v2397, %v2398
        %v2499 = vadd.f32 %v2498, %v2399
        %2500 = vadd.xlane.f32.xlu0 %v2499
        %v2501 = vpop.xlane.xlu0 %2500
        %v2502 = vadd.f32 %v2400, %v2401
        %v2503 = vadd.f32 %v2502, %v2402
        %2504 = vadd.xlane.f32.xlu0 %v2503
        %v2505 = vpop.xlane.xlu0 %2504
        %v2506 = vadd.f32 %v2403, %v2404
        %v2507 = vadd.f32 %v2506, %v2405
        %2508 = vadd.xlane.f32.xlu0 %v2507
        %v2509 = vpop.xlane.xlu0 %2508
        %v2510 = vadd.f32 %v2406, %v2407
        %v2511 = vadd.f32 %v2510, %v2408
        %2512 = vadd.xlane.f32.xlu0 %v2511
        %v2513 = vpop.xlane.xlu0 %2512
        %v2514 = vadd.f32 %v2409, %v2410
        %v2515 = vadd.f32 %v2514, %v2411
        %2516 = vadd.xlane.f32.xlu0 %v2515
        %v2517 = vpop.xlane.xlu0 %2516
        %v2518 = vadd.f32 %v2412, %v2413
        %v2519 = vadd.f32 %v2518, %v2414
        %2520 = vadd.xlane.f32.xlu0 %v2519
        %v2521 = vpop.xlane.xlu0 %2520
        %v2522 = vadd.f32 %v2415, %v2416
        %v2523 = vadd.f32 %v2522, %v2417
        %2524 = vadd.xlane.f32.xlu0 %v2523
        %v2525 = vpop.xlane.xlu0 %2524
        %v2526 = vadd.f32 %v2418, %v2419
        %v2527 = vadd.f32 %v2526, %v2420
        %2528 = vadd.xlane.f32.xlu0 %v2527
        %v2529 = vpop.xlane.xlu0 %2528
        %v2530 = vadd.f32 %v2421, %v2422
        %v2531 = vadd.f32 %v2530, %v2423
        %2532 = vadd.xlane.f32.xlu0 %v2531
        %v2533 = vpop.xlane.xlu0 %2532
        %v2534 = vadd.f32 %v2424, %v2425
        %v2535 = vadd.f32 %v2534, %v2426
        %2536 = vadd.xlane.f32.xlu0 %v2535
        %v2537 = vpop.xlane.xlu0 %2536
        %v2538 = vadd.f32 %v2427, %v2428
        %v2539 = vadd.f32 %v2538, %v2429
        %2540 = vadd.xlane.f32.xlu0 %v2539
        %v2541 = vpop.xlane.xlu0 %2540
        %v2542 = vadd.f32 %v2430, %v2431
        %v2543 = vadd.f32 %v2542, %v2432
        %2544 = vadd.xlane.f32.xlu0 %v2543
        %v2545 = vpop.xlane.xlu0 %2544
        %v2546 = vadd.f32 %v2433, %v2434
        %v2547 = vadd.f32 %v2546, %v2435
        %2548 = vadd.xlane.f32.xlu0 %v2547
        %v2549 = vpop.xlane.xlu0 %2548
        %v2550 = vadd.f32 %v2436, %v2437
        %v2551 = vadd.f32 %v2550, %v2438
        %2552 = vadd.xlane.f32.xlu0 %v2551
        %v2553 = vpop.xlane.xlu0 %2552
        %v2554 = vadd.f32 %v2439, %v2440
        %v2555 = vadd.f32 %v2554, %v2441
        %2556 = vadd.xlane.f32.xlu0 %v2555
        %v2557 = vpop.xlane.xlu0 %2556
        %v2558 = vadd.f32 %v2442, %v2443
        %v2559 = vadd.f32 %v2558, %v2444
        %2560 = vadd.xlane.f32.xlu0 %v2559
        %v2561 = vpop.xlane.xlu0 %2560
        %v2562 = vadd.f32 %v2445, %v2446
        %v2563 = vadd.f32 %v2562, %v2447
        %2564 = vadd.xlane.f32.xlu0 %v2563
        %v2565 = vpop.xlane.xlu0 %2564
        %v2566 = vadd.f32 %v2448, %v2449
        %v2567 = vadd.f32 %v2566, %v2450
        %2568 = vadd.xlane.f32.xlu0 %v2567
        %v2569 = vpop.xlane.xlu0 %2568
        %v2570 = vadd.f32 %v2451, %v2452
        %v2571 = vadd.f32 %v2570, %v2453
        %2572 = vadd.xlane.f32.xlu0 %v2571
        %v2573 = vpop.xlane.xlu0 %2572
        %v2574 = vadd.f32 %v2454, %v2455
        %v2575 = vadd.f32 %v2574, %v2456
        %2576 = vadd.xlane.f32.xlu0 %v2575
        %v2577 = vpop.xlane.xlu0 %2576
        %v2578 = vadd.f32 %v2457, %v2458
        %v2579 = vadd.f32 %v2578, %v2459
        %2580 = vadd.xlane.f32.xlu0 %v2579
        %v2581 = vpop.xlane.xlu0 %2580
        %v2582 = vadd.f32 %v2460, %v2461
        %v2583 = vadd.f32 %v2582, %v2462
        %2584 = vadd.xlane.f32.xlu0 %v2583
        %v2585 = vpop.xlane.xlu0 %2584
        %v2586 = vadd.f32 %v2463, %v2464
        %v2587 = vadd.f32 %v2586, %v2465
        %2588 = vadd.xlane.f32.xlu0 %v2587
        %v2589 = vpop.xlane.xlu0 %2588
        %v2590 = vadd.f32 %v2466, %v2467
        %v2591 = vadd.f32 %v2590, %v2468
        %2592 = vadd.xlane.f32.xlu0 %v2591
        %v2593 = vpop.xlane.xlu0 %2592
        %v2594 = vadd.f32 %v2469, %v2470
        %v2595 = vadd.f32 %v2594, %v2471
        %2596 = vadd.xlane.f32.xlu0 %v2595
        %v2597 = vpop.xlane.xlu0 %2596
        %v2598 = vadd.f32 %v2472, %v2473
        %v2599 = vadd.f32 %v2598, %v2474
        %2600 = vadd.xlane.f32.xlu0 %v2599
        %v2601 = vpop.xlane.xlu0 %2600
        %v2602 = vadd.f32 %v2475, %v2476
        %v2603 = vadd.f32 %v2602, %v2477
        %2604 = vadd.xlane.f32.xlu0 %v2603
        %v2605 = vpop.xlane.xlu0 %2604
        %vm2606 = vcmask 7168
        %2607 = vst.msk [vmem:[%s336] sm:$0xff] %vm2606, %v2481
        %2608 = vst.msk [vmem:[%s336 + $0x8] sm:$0xff] %vm2606, %v2485
        %2609 = vst.msk [vmem:[%s336 + $0x10] sm:$0xff] %vm2606, %v2489
        %2610 = vst.msk [vmem:[%s336 + $0x18] sm:$0xff] %vm2606, %v2493
        %2611 = vst.msk [vmem:[%s336 + $0x20] sm:$0xff] %vm2606, %v2497
        %2612 = vst.msk [vmem:[%s336 + $0x28] sm:$0xff] %vm2606, %v2501
        %2613 = vst.msk [vmem:[%s336 + $0x30] sm:$0xff] %vm2606, %v2505
        %2614 = vst.msk [vmem:[%s336 + $0x38] sm:$0xff] %vm2606, %v2509
        %2615 = vst.msk [vmem:[%s336 + $0x40] sm:$0xff] %vm2606, %v2513
        %2616 = vst.msk [vmem:[%s336 + $0x48] sm:$0xff] %vm2606, %v2517
        %2617 = vst.msk [vmem:[%s336 + $0x50] sm:$0xff] %vm2606, %v2521
        %2618 = vst.msk [vmem:[%s336 + $0x58] sm:$0xff] %vm2606, %v2525
        %2619 = vst.msk [vmem:[%s336 + $0x60] sm:$0xff] %vm2606, %v2529
        %2620 = vst.msk [vmem:[%s336 + $0x68] sm:$0xff] %vm2606, %v2533
        %2621 = vst.msk [vmem:[%s336 + $0x70] sm:$0xff] %vm2606, %v2537
        %2622 = vst.msk [vmem:[%s336 + $0x78] sm:$0xff] %vm2606, %v2541
        %2623 = vst.msk [vmem:[%s336 + $0x80] sm:$0xff] %vm2606, %v2545
        %2624 = vst.msk [vmem:[%s336 + $0x88] sm:$0xff] %vm2606, %v2549
        %2625 = vst.msk [vmem:[%s336 + $0x90] sm:$0xff] %vm2606, %v2553
        %2626 = vst.msk [vmem:[%s336 + $0x98] sm:$0xff] %vm2606, %v2557
        %2627 = vst.msk [vmem:[%s336 + $0xa0] sm:$0xff] %vm2606, %v2561
        %2628 = vst.msk [vmem:[%s336 + $0xa8] sm:$0xff] %vm2606, %v2565
        %2629 = vst.msk [vmem:[%s336 + $0xb0] sm:$0xff] %vm2606, %v2569
        %2630 = vst.msk [vmem:[%s336 + $0xb8] sm:$0xff] %vm2606, %v2573
        %2631 = vst.msk [vmem:[%s336 + $0xc0] sm:$0xff] %vm2606, %v2577
        %2632 = vst.msk [vmem:[%s336 + $0xc8] sm:$0xff] %vm2606, %v2581
        %2633 = vst.msk [vmem:[%s336 + $0xd0] sm:$0xff] %vm2606, %v2585
        %2634 = vst.msk [vmem:[%s336 + $0xd8] sm:$0xff] %vm2606, %v2589
        %2635 = vst.msk [vmem:[%s336 + $0xe0] sm:$0xff] %vm2606, %v2593
        %2636 = vst.msk [vmem:[%s336 + $0xe8] sm:$0xff] %vm2606, %v2597
        %2637 = vst.msk [vmem:[%s336 + $0xf0] sm:$0xff] %vm2606, %v2601
        %2638 = vst.msk [vmem:[%s336 + $0xf8] sm:$0xff] %vm2606, %v2605
        %v2639 = vsub.f32 %v347, %v2125
        %v2640 = vsub.f32 %v348, %v2127
        %v2641 = vsub.f32 %v349, %v2286
        %v2642 = vsub.f32 %v350, %v2131
        %v2643 = vsub.f32 %v351, %v2133
        %v2644 = vsub.f32 %v352, %v2291
        %v2645 = vsub.f32 %v353, %v2137
        %v2646 = vsub.f32 %v354, %v2139
        %v2647 = vsub.f32 %v355, %v2296
        %v2648 = vsub.f32 %v356, %v2143
        %v2649 = vsub.f32 %v357, %v2145
        %v2650 = vsub.f32 %v358, %v2301
        %v2651 = vsub.f32 %v359, %v2149
        %v2652 = vsub.f32 %v360, %v2151
        %v2653 = vsub.f32 %v361, %v2306
        %v2654 = vsub.f32 %v362, %v2155
        %v2655 = vsub.f32 %v363, %v2157
        %v2656 = vsub.f32 %v364, %v2311
        %v2657 = vsub.f32 %v365, %v2161
        %v2658 = vsub.f32 %v366, %v2163
        %v2659 = vsub.f32 %v367, %v2316
        %v2660 = vsub.f32 %v368, %v2167
        %v2661 = vsub.f32 %v369, %v2169
        %v2662 = vsub.f32 %v370, %v2321
        %v2663 = vsub.f32 %v371, %v2173
        %v2664 = vsub.f32 %v372, %v2175
        %v2665 = vsub.f32 %v373, %v2326
        %v2666 = vsub.f32 %v374, %v2179
        %v2667 = vsub.f32 %v375, %v2181
        %v2668 = vsub.f32 %v376, %v2331
        %v2669 = vsub.f32 %v377, %v2185
        %v2670 = vsub.f32 %v378, %v2187
        %v2671 = vsub.f32 %v379, %v2336
        %v2672 = vsub.f32 %v380, %v2191
        %v2673 = vsub.f32 %v381, %v2193
        %v2674 = vsub.f32 %v382, %v2341
        %v2675 = vsub.f32 %v383, %v2197
        %v2676 = vsub.f32 %v384, %v2199
        %v2677 = vsub.f32 %v385, %v2346
        %v2678 = vsub.f32 %v386, %v2203
        %v2679 = vsub.f32 %v387, %v2205
        %v2680 = vsub.f32 %v388, %v2351
        %v2681 = vsub.f32 %v389, %v2209
        %v2682 = vsub.f32 %v390, %v2211
        %v2683 = vsub.f32 %v391, %v2356
        %v2684 = vsub.f32 %v392, %v2215
        %v2685 = vsub.f32 %v393, %v2217
        %v2686 = vsub.f32 %v394, %v2361
        %v2687 = vmul.f32 %v2639, %v2639
        %v2688 = vmul.f32 %v2640, %v2640
        %v2689 = vmul.f32 %v2641, %v2641
        %v2690 = vmul.f32 %v2642, %v2642
        %v2691 = vmul.f32 %v2643, %v2643
        %v2692 = vmul.f32 %v2644, %v2644
        %v2693 = vmul.f32 %v2645, %v2645
        %v2694 = vmul.f32 %v2646, %v2646
        %v2695 = vmul.f32 %v2647, %v2647
        %v2696 = vmul.f32 %v2648, %v2648
        %v2697 = vmul.f32 %v2649, %v2649
        %v2698 = vmul.f32 %v2650, %v2650
        %v2699 = vmul.f32 %v2651, %v2651
        %v2700 = vmul.f32 %v2652, %v2652
        %v2701 = vmul.f32 %v2653, %v2653
        %v2702 = vmul.f32 %v2654, %v2654
        %v2703 = vmul.f32 %v2655, %v2655
        %v2704 = vmul.f32 %v2656, %v2656
        %v2705 = vmul.f32 %v2657, %v2657
        %v2706 = vmul.f32 %v2658, %v2658
        %v2707 = vmul.f32 %v2659, %v2659
        %v2708 = vmul.f32 %v2660, %v2660
        %v2709 = vmul.f32 %v2661, %v2661
        %v2710 = vmul.f32 %v2662, %v2662
        %v2711 = vmul.f32 %v2663, %v2663
        %v2712 = vmul.f32 %v2664, %v2664
        %v2713 = vmul.f32 %v2665, %v2665
        %v2714 = vmul.f32 %v2666, %v2666
        %v2715 = vmul.f32 %v2667, %v2667
        %v2716 = vmul.f32 %v2668, %v2668
        %v2717 = vmul.f32 %v2669, %v2669
        %v2718 = vmul.f32 %v2670, %v2670
        %v2719 = vmul.f32 %v2671, %v2671
        %v2720 = vmul.f32 %v2672, %v2672
        %v2721 = vmul.f32 %v2673, %v2673
        %v2722 = vmul.f32 %v2674, %v2674
        %v2723 = vmul.f32 %v2675, %v2675
        %v2724 = vmul.f32 %v2676, %v2676
        %v2725 = vmul.f32 %v2677, %v2677
        %v2726 = vmul.f32 %v2678, %v2678
        %v2727 = vmul.f32 %v2679, %v2679
        %v2728 = vmul.f32 %v2680, %v2680
        %v2729 = vmul.f32 %v2681, %v2681
        %v2730 = vmul.f32 %v2682, %v2682
        %v2731 = vmul.f32 %v2683, %v2683
        %v2732 = vmul.f32 %v2684, %v2684
        %v2733 = vmul.f32 %v2685, %v2685
        %v2734 = vmul.f32 %v2686, %v2686
        %v2735 = vsel %vm2379, %v2687, 0.0
        %v2736 = vsel %vm2380, %v2688, 0.0
        %v2737 = vsel %vm2381, %v2689, 0.0
        %v2738 = vsel %vm2379, %v2690, 0.0
        %v2739 = vsel %vm2380, %v2691, 0.0
        %v2740 = vsel %vm2381, %v2692, 0.0
        %v2741 = vsel %vm2379, %v2693, 0.0
        %v2742 = vsel %vm2380, %v2694, 0.0
        %v2743 = vsel %vm2381, %v2695, 0.0
        %v2744 = vsel %vm2379, %v2696, 0.0
        %v2745 = vsel %vm2380, %v2697, 0.0
        %v2746 = vsel %vm2381, %v2698, 0.0
        %v2747 = vsel %vm2379, %v2699, 0.0
        %v2748 = vsel %vm2380, %v2700, 0.0
        %v2749 = vsel %vm2381, %v2701, 0.0
        %v2750 = vsel %vm2379, %v2702, 0.0
        %v2751 = vsel %vm2380, %v2703, 0.0
        %v2752 = vsel %vm2381, %v2704, 0.0
        %v2753 = vsel %vm2379, %v2705, 0.0
        %v2754 = vsel %vm2380, %v2706, 0.0
        %v2755 = vsel %vm2381, %v2707, 0.0
        %v2756 = vsel %vm2379, %v2708, 0.0
        %v2757 = vsel %vm2380, %v2709, 0.0
        %v2758 = vsel %vm2381, %v2710, 0.0
        %v2759 = vsel %vm2379, %v2711, 0.0
        %v2760 = vsel %vm2380, %v2712, 0.0
        %v2761 = vsel %vm2381, %v2713, 0.0
        %v2762 = vsel %vm2379, %v2714, 0.0
        %v2763 = vsel %vm2380, %v2715, 0.0
        %v2764 = vsel %vm2381, %v2716, 0.0
        %v2765 = vsel %vm2379, %v2717, 0.0
        %v2766 = vsel %vm2380, %v2718, 0.0
        %v2767 = vsel %vm2381, %v2719, 0.0
        %v2768 = vsel %vm2379, %v2720, 0.0
        %v2769 = vsel %vm2380, %v2721, 0.0
        %v2770 = vsel %vm2381, %v2722, 0.0
        %v2771 = vsel %vm2379, %v2723, 0.0
        %v2772 = vsel %vm2380, %v2724, 0.0
        %v2773 = vsel %vm2381, %v2725, 0.0
        %v2774 = vsel %vm2379, %v2726, 0.0
        %v2775 = vsel %vm2380, %v2727, 0.0
        %v2776 = vsel %vm2381, %v2728, 0.0
        %v2777 = vsel %vm2379, %v2729, 0.0
        %v2778 = vsel %vm2380, %v2730, 0.0
        %v2779 = vsel %vm2381, %v2731, 0.0
        %v2780 = vsel %vm2379, %v2732, 0.0
        %v2781 = vsel %vm2380, %v2733, 0.0
        %v2782 = vsel %vm2381, %v2734, 0.0
        %v2783 = vadd.f32 %v2735, %v2736
        %v2784 = vadd.f32 %v2783, %v2737
        %2785 = vadd.xlane.f32.xlu0 %v2784
        %v2786 = vpop.xlane.xlu0 %2785
        %v2787 = vadd.f32 %v2738, %v2739
        %v2788 = vadd.f32 %v2787, %v2740
        %2789 = vadd.xlane.f32.xlu0 %v2788
        %v2790 = vpop.xlane.xlu0 %2789
        %v2791 = vadd.f32 %v2741, %v2742
        %v2792 = vadd.f32 %v2791, %v2743
        %2793 = vadd.xlane.f32.xlu0 %v2792
        %v2794 = vpop.xlane.xlu0 %2793
        %v2795 = vadd.f32 %v2744, %v2745
        %v2796 = vadd.f32 %v2795, %v2746
        %2797 = vadd.xlane.f32.xlu0 %v2796
        %v2798 = vpop.xlane.xlu0 %2797
        %v2799 = vadd.f32 %v2747, %v2748
        %v2800 = vadd.f32 %v2799, %v2749
        %2801 = vadd.xlane.f32.xlu0 %v2800
        %v2802 = vpop.xlane.xlu0 %2801
        %v2803 = vadd.f32 %v2750, %v2751
        %v2804 = vadd.f32 %v2803, %v2752
        %2805 = vadd.xlane.f32.xlu0 %v2804
        %v2806 = vpop.xlane.xlu0 %2805
        %v2807 = vadd.f32 %v2753, %v2754
        %v2808 = vadd.f32 %v2807, %v2755
        %2809 = vadd.xlane.f32.xlu0 %v2808
        %v2810 = vpop.xlane.xlu0 %2809
        %v2811 = vadd.f32 %v2756, %v2757
        %v2812 = vadd.f32 %v2811, %v2758
        %2813 = vadd.xlane.f32.xlu0 %v2812
        %v2814 = vpop.xlane.xlu0 %2813
        %v2815 = vadd.f32 %v2759, %v2760
        %v2816 = vadd.f32 %v2815, %v2761
        %2817 = vadd.xlane.f32.xlu0 %v2816
        %v2818 = vpop.xlane.xlu0 %2817
        %v2819 = vadd.f32 %v2762, %v2763
        %v2820 = vadd.f32 %v2819, %v2764
        %2821 = vadd.xlane.f32.xlu0 %v2820
        %v2822 = vpop.xlane.xlu0 %2821
        %v2823 = vadd.f32 %v2765, %v2766
        %v2824 = vadd.f32 %v2823, %v2767
        %2825 = vadd.xlane.f32.xlu0 %v2824
        %v2826 = vpop.xlane.xlu0 %2825
        %v2827 = vadd.f32 %v2768, %v2769
        %v2828 = vadd.f32 %v2827, %v2770
        %2829 = vadd.xlane.f32.xlu0 %v2828
        %v2830 = vpop.xlane.xlu0 %2829
        %v2831 = vadd.f32 %v2771, %v2772
        %v2832 = vadd.f32 %v2831, %v2773
        %2833 = vadd.xlane.f32.xlu0 %v2832
        %v2834 = vpop.xlane.xlu0 %2833
        %v2835 = vadd.f32 %v2774, %v2775
        %v2836 = vadd.f32 %v2835, %v2776
        %2837 = vadd.xlane.f32.xlu0 %v2836
        %v2838 = vpop.xlane.xlu0 %2837
        %v2839 = vadd.f32 %v2777, %v2778
        %v2840 = vadd.f32 %v2839, %v2779
        %2841 = vadd.xlane.f32.xlu0 %v2840
        %v2842 = vpop.xlane.xlu0 %2841
        %v2843 = vadd.f32 %v2780, %v2781
        %v2844 = vadd.f32 %v2843, %v2782
        %2845 = vadd.xlane.f32.xlu0 %v2844
        %v2846 = vpop.xlane.xlu0 %2845
        %v2847 = vadd.f32 %v2786, %v2790
        %v2848 = vadd.f32 %v2847, %v2794
        %v2849 = vadd.f32 %v2848, %v2798
        %v2850 = vadd.f32 %v2849, %v2802
        %v2851 = vadd.f32 %v2850, %v2806
        %v2852 = vadd.f32 %v2851, %v2810
        %v2853 = vadd.f32 %v2852, %v2814
        %v2854 = vadd.f32 %v2853, %v2818
        %v2855 = vadd.f32 %v2854, %v2822
        %v2856 = vadd.f32 %v2855, %v2826
        %v2857 = vadd.f32 %v2856, %v2830
        %v2858 = vadd.f32 %v2857, %v2834
        %v2859 = vadd.f32 %v2858, %v2838
        %v2860 = vadd.f32 %v2859, %v2842
        %v2861 = vadd.f32 %v2860, %v2846
        %v2862 = vrot.slane %v2861, 4
        %v2863 = vadd.f32 %v2861, %v2862
        %v2864 = vrot.slane %v2863, 2
        %v2865 = vadd.f32 %v2863, %v2864
        %v2866 = vrot.slane %v2865, 1
        %v2867 = vadd.f32 %v2865, %v2866
        %vm2868 = vcmask 0
        %2869 = vst.msk [vmem:[%s343] sm:$0x1] %vm2868, %v2867
        %2870 = vst [vmem:[%s303] sm:$0xff] %v2125
        %2871 = vst [vmem:[%s303 + $0x8] sm:$0xff] %v2127
        %2872 = vst [vmem:[%s303 + $0x10] sm:$0xff] %v2286
        %2873 = vst [vmem:[%s303 + $0x18] sm:$0xff] %v2131
        %2874 = vst [vmem:[%s303 + $0x20] sm:$0xff] %v2133
        %2875 = vst [vmem:[%s303 + $0x28] sm:$0xff] %v2291
        %2876 = vst [vmem:[%s303 + $0x30] sm:$0xff] %v2137
        %2877 = vst [vmem:[%s303 + $0x38] sm:$0xff] %v2139
        %2878 = vst [vmem:[%s303 + $0x40] sm:$0xff] %v2296
        %2879 = vst [vmem:[%s303 + $0x48] sm:$0xff] %v2143
        %2880 = vst [vmem:[%s303 + $0x50] sm:$0xff] %v2145
        %2881 = vst [vmem:[%s303 + $0x58] sm:$0xff] %v2301
        %2882 = vst [vmem:[%s303 + $0x60] sm:$0xff] %v2149
        %2883 = vst [vmem:[%s303 + $0x68] sm:$0xff] %v2151
        %2884 = vst [vmem:[%s303 + $0x70] sm:$0xff] %v2306
        %2885 = vst [vmem:[%s303 + $0x78] sm:$0xff] %v2155
        %2886 = vst [vmem:[%s303 + $0x80] sm:$0xff] %v2157
        %2887 = vst [vmem:[%s303 + $0x88] sm:$0xff] %v2311
        %2888 = vst [vmem:[%s303 + $0x90] sm:$0xff] %v2161
        %2889 = vst [vmem:[%s303 + $0x98] sm:$0xff] %v2163
        %2890 = vst [vmem:[%s303 + $0xa0] sm:$0xff] %v2316
        %2891 = vst [vmem:[%s303 + $0xa8] sm:$0xff] %v2167
        %2892 = vst [vmem:[%s303 + $0xb0] sm:$0xff] %v2169
        %2893 = vst [vmem:[%s303 + $0xb8] sm:$0xff] %v2321
        %2894 = vst [vmem:[%s303 + $0xc0] sm:$0xff] %v2173
        %2895 = vst [vmem:[%s303 + $0xc8] sm:$0xff] %v2175
        %2896 = vst [vmem:[%s303 + $0xd0] sm:$0xff] %v2326
        %2897 = vst [vmem:[%s303 + $0xd8] sm:$0xff] %v2179
        %2898 = vst [vmem:[%s303 + $0xe0] sm:$0xff] %v2181
        %2899 = vst [vmem:[%s303 + $0xe8] sm:$0xff] %v2331
        %2900 = vst [vmem:[%s303 + $0xf0] sm:$0xff] %v2185
        %2901 = vst [vmem:[%s303 + $0xf8] sm:$0xff] %v2187
        %2902 = vst [vmem:[%s303 + $0x100] sm:$0xff] %v2336
        %2903 = vst [vmem:[%s303 + $0x108] sm:$0xff] %v2191
        %2904 = vst [vmem:[%s303 + $0x110] sm:$0xff] %v2193
        %2905 = vst [vmem:[%s303 + $0x118] sm:$0xff] %v2341
        %2906 = vst [vmem:[%s303 + $0x120] sm:$0xff] %v2197
        %2907 = vst [vmem:[%s303 + $0x128] sm:$0xff] %v2199
        %2908 = vst [vmem:[%s303 + $0x130] sm:$0xff] %v2346
        %2909 = vst [vmem:[%s303 + $0x138] sm:$0xff] %v2203
        %2910 = vst [vmem:[%s303 + $0x140] sm:$0xff] %v2205
        %2911 = vst [vmem:[%s303 + $0x148] sm:$0xff] %v2351
        %2912 = vst [vmem:[%s303 + $0x150] sm:$0xff] %v2209
        %2913 = vst [vmem:[%s303 + $0x158] sm:$0xff] %v2211
        %2914 = vst [vmem:[%s303 + $0x160] sm:$0xff] %v2356
        %2915 = vst [vmem:[%s303 + $0x168] sm:$0xff] %v2215
        %2916 = vst [vmem:[%s303 + $0x170] sm:$0xff] %v2217
        %2917 = vst [vmem:[%s303 + $0x178] sm:$0xff] %v2361
        %s2918 = sand.u32 %s137, 1
        %s2919 = scalar_lea.sflag [#allocation4], %s2918
        %s2920 = sand.u32 %s137, 1
        %s2921 = smul.addr %s2920, 384
        %s2922 = scalar_lea.vmem [#allocation5], %s2921
        %s2923 = smul.u32 %s28, 2
        %s2924 = sadd.s32 %s2923, %s29
        %p2925 = scmp.lt.s32.totalorder %s2924, 3
        %s2926 = scalar_select %p2925, %s2924, 3
        %s2927 = smul.addr %s2926, 32
        %s2928 = smul.addr %s2927, 8
        %s2929 = scalar_lea.vmem %s5, %s2928
        %s2930 = smul.u32 %s28, 2
        %s2931 = sadd.s32 %s2930, %s29
        %p2932 = scmp.lt.s32.totalorder %s2931, 3
        %s2933 = scalar_select %p2932, %s2931, 3
        %s2934 = scalar_lea.vmem %s6, %s2933
        // Predicated region
        $region41: #{quantize_ema_reset_forward.1} parent=35 // pred_check
          %p2935 = pneg %p147
        $region42: #{quantize_ema_reset_forward.1} parent=35 // pred_check_branch
          %2937 = sbr.rel (%p2935) target = $region44
        $region43: #{quantize_ema_reset_forward.1} parent=35 // pred_region
          %s2938 = smul.u32 3, %s29
          %s2939 = ssub.s32 5, %s2938
          %p2940 = scmp.lt.s32.totalorder %s2939, 3
          %s2941 = scalar_select %p2940, %s2939, 3
          %s2942 = smul.u32 2048, %s2941
          %s2944 = ssub.s32 6144, %s2942
          %2945 = vsyncadd %s2919, %s2944
          %p2946 = scmp.ne.s32.totalorder 0, %s2942
          %s2947 = smul.addr %s28, 80
          %s2948 = sadd.s32 %s2938, %s2947
          %s2949 = smul.addr %s2948, 128
          %s2950 = scalar_lea.hbm %s4, %s2949
          %s2951 = smul.u32 %s2941, 8
          %s2952 = smul.u32 %s2951, 16
          %s2953 = sshll.u32 %s2922, 4
          %s2954 = int_to_ptr.vmem [resolvable:$true] %s2953
          %s2955 = sshll.u32 %s2952, 4
          %2959 = dma.vmem_to_hbm [thread:$0]  (%p2946), %s2954, %s2955, %s2950, %s2919, 384, 640, %s2951
        $region44: #{quantize_ema_reset_forward.1} parent=35 // pred_fallthru
          _
        // Predicated region
        $region45: #{quantize_ema_reset_forward.1} parent=35 // pred_check
          %p2960 = pneg %p177
        $region46: #{quantize_ema_reset_forward.1} parent=35 // pred_check_branch
          %2962 = sbr.rel (%p2960) target = $region48
        $region47: #{quantize_ema_reset_forward.1} parent=35 // pred_region
          %s2963 = smul.u32 %s28, 2
          %s2964 = sadd.s32 %s2963, %s29
        $region48: #{quantize_ema_reset_forward.1} parent=35 // pred_fallthru
          _
        // Predicated region
        $region49: #{quantize_ema_reset_forward.1} parent=35 // pred_check
          %p2965 = pneg %p207
        $region50: #{quantize_ema_reset_forward.1} parent=35 // pred_check_branch
          %2967 = sbr.rel (%p2965) target = $region52
        $region51: #{quantize_ema_reset_forward.1} parent=35 // pred_region
          %s2968 = smul.u32 %s28, 2
          %s2969 = sadd.s32 %s2968, %s29
        $region52: #{quantize_ema_reset_forward.1} parent=35 // pred_fallthru
          _
      $region36: #{quantize_ema_reset_forward.1} parent=5 // pred_fallthru
        _
      %p2970 = scmp.le.s32.totalorder 2, %s19
      // Predicated region
      $region53: #{quantize_ema_reset_forward.1} parent=5 // pred_check
        %p2971 = pneg %p2970
      $region54: #{quantize_ema_reset_forward.1} parent=5 // pred_check_branch
        %2973 = sbr.rel (%p2971) target = $region56
      $region55: #{quantize_ema_reset_forward.1} parent=5 // pred_region
        %s2974 = ssub.s32 %s19, 2
        // Predicated region
        $region57: #{quantize_ema_reset_forward.1} parent=55 // pred_check
          %p2975 = pneg %p153
        $region58: #{quantize_ema_reset_forward.1} parent=55 // pred_check_branch
          %2977 = sbr.rel (%p2975) target = $region60
        $region59: #{quantize_ema_reset_forward.1} parent=55 // pred_region
          %s2978 = sand.u32 %s138, 1
          %s2979 = scalar_lea.sflag [#allocation4], %s2978
          %s2980 = sand.u32 %s138, 1
          %s2981 = smul.addr %s2980, 384
          %s2982 = scalar_lea.vmem [#allocation5], %s2981
          %2983 = dma.done %s2979, 6144
        $region60: #{quantize_ema_reset_forward.1} parent=55 // pred_fallthru
          _
        // Predicated region
        $region61: #{quantize_ema_reset_forward.1} parent=55 // pred_check
          %p2984 = pneg %p183
        $region62: #{quantize_ema_reset_forward.1} parent=55 // pred_check_branch
          %2986 = sbr.rel (%p2984) target = $region64
        $region63: #{quantize_ema_reset_forward.1} parent=55 // pred_region
          %s2987 = smul.u32 %s30, 2
          %s2988 = sadd.s32 %s2987, %s31
          %p2989 = scmp.lt.s32.totalorder %s2988, 3
          %s2990 = scalar_select %p2989, %s2988, 3
          %s2991 = smul.addr %s2990, 32
          %s2992 = smul.addr %s2991, 8
          %s2993 = scalar_lea.vmem %s5, %s2992
        $region64: #{quantize_ema_reset_forward.1} parent=55 // pred_fallthru
          _
        // Predicated region
        $region65: #{quantize_ema_reset_forward.1} parent=55 // pred_check
          %p2994 = pneg %p213
        $region66: #{quantize_ema_reset_forward.1} parent=55 // pred_check_branch
          %2996 = sbr.rel (%p2994) target = $region68
        $region67: #{quantize_ema_reset_forward.1} parent=55 // pred_region
          %s2997 = smul.u32 %s30, 2
          %s2998 = sadd.s32 %s2997, %s31
          %p2999 = scmp.lt.s32.totalorder %s2998, 3
          %s3000 = scalar_select %p2999, %s2998, 3
          %s3001 = scalar_lea.vmem %s6, %s3000
        $region68: #{quantize_ema_reset_forward.1} parent=55 // pred_fallthru
          _
      $region56: #{quantize_ema_reset_forward.1} parent=5 // pred_fallthru
        _
    $region6: #{quantize_ema_reset_forward.1} parent=1 // loop_footer
      %s23 = sadd.s32 1, %s19
    $region7: #{quantize_ema_reset_forward.1} parent=1 // loop_footer_branch
      %18 = sbr.rel target = $region3
    $region8: #{quantize_ema_reset_forward.1} parent=1 // loop_exit
      _
    %3002 = vsyncpa [#allocation3], 1
    %s3003 = scalar_lea.sflag [#allocation3], 1
    %3004 = vsyncpa %s3003, 1
    %3005 = vsyncpa [#allocation4], 1
    %s3006 = scalar_lea.sflag [#allocation4], 1
    %3007 = vsyncpa %s3006, 1

</llo_original>
